<compile_context>
chip_gen: v7x
topology: tpu7x:2x2x1
jax: 0.10.0
libtpu: 0.0.40
codegen_flags: <defaults>
</compile_context>

<pallas_src>
import functools
import math

import jax
import jax.numpy as jnp
from jax.experimental import pallas as pl
from jax.experimental.pallas import tpu as pltpu  # noqa: F401  (TPU backend import)

D_MODEL = 32
NUM_HEADS = 4
FF_RATIO = 4
NUM_BLOCKS = 2
LN_EPS = 1e-5


def _layernorm(x, g, b):
    mu = jnp.mean(x, axis=-1, keepdims=True)
    var = jnp.mean((x - mu) ** 2, axis=-1, keepdims=True)
    return (x - mu) * jax.lax.rsqrt(var + LN_EPS) * g + b


# ----------------------------------------------------------------------------
# Fused Pallas kernel: all transformer blocks + final LayerNorm, single launch.
# ----------------------------------------------------------------------------
def _fused_transformer_kernel(x_ref, wqkv_ref, wo_ref, w1_ref, w2_ref, vec_ref,
                              out_ref, *, batch, seq):
    N, D = x_ref.shape                       # N = batch * seq
    H = NUM_HEADS
    dh = D // H
    n_blocks = wqkv_ref.shape[0]
    d_ff = w1_ref.shape[-1]
    inv_sqrt_dh = 1.0 / math.sqrt(dh)

    x = x_ref[...].astype(jnp.float32)       # (N, D)

    # Per-head lane masks, built once (constant pattern; avoids per-head lane slicing).
    lane = jax.lax.broadcasted_iota(jnp.int32, (1, D), 1)
    head_masks = [((lane >= h * dh) & (lane < (h + 1) * dh)).astype(jnp.float32)
                  for h in range(H)]

    for blk in range(n_blocks):
        vec = vec_ref[blk]                   # (8, padw) -- one packed-params load
        ln1g = vec[0:1, :D]
        ln1b = vec[1:2, :D]
        bqkv = vec[2:3, :3 * D]
        bo = vec[3:4, :D]
        ln2g = vec[4:5, :D]
        ln2b = vec[5:6, :D]
        b1 = vec[6:7, :d_ff]
        b2 = vec[7:8, :D]

        # ---- Multi-head self-attention (pre-norm) ----
        h_ln = _layernorm(x, ln1g, ln1b)                              # (N, D)
        qkv = jnp.dot(h_ln, wqkv_ref[blk],
                      preferred_element_type=jnp.float32) + bqkv      # (N, 3D)
        q = qkv[:, 0:D].reshape(batch, seq, D)
        k = qkv[:, D:2 * D].reshape(batch, seq, D)
        v = qkv[:, 2 * D:3 * D].reshape(batch, seq, D)

        # Heads via lane masks: (q*m)@k^T contracts only that head's dims; p@(v*m)
        # writes only that head's output lanes, so the sum over heads is exactly the
        # concatenated multi-head context -> one full-width output projection.
        ctx = jnp.zeros((batch, seq, D), jnp.float32)
        for hh in range(H):
            m = head_masks[hh]                                        # (1, D)
            s = jnp.einsum('bqd,bkd->bqk', q * m, k,
                           preferred_element_type=jnp.float32) * inv_sqrt_dh
            s = s - jnp.max(s, axis=-1, keepdims=True)
            p = jnp.exp(s)
            p = p * pl.reciprocal(jnp.sum(p, axis=-1, keepdims=True), approx=True)
            ctx = ctx + jnp.einsum('bqk,bkd->bqd', p, v * m,
                                   preferred_element_type=jnp.float32)
        ctx = ctx.reshape(N, D)
        att = jnp.dot(ctx, wo_ref[blk], preferred_element_type=jnp.float32) + bo
        x = x + att                                                   # residual

        # ---- Feed-forward (pre-norm, ReLU) ----
        h_ln = _layernorm(x, ln2g, ln2b)
        hid = jnp.dot(h_ln, w1_ref[blk], preferred_element_type=jnp.float32) + b1
        hid = jnp.maximum(hid, 0.0)
        ff = jnp.dot(hid, w2_ref[blk], preferred_element_type=jnp.float32) + b2
        x = x + ff                                                    # residual

    # ---- Final LayerNorm ----
    vec_fin = vec_ref[n_blocks]
    g = vec_fin[0:1, :D]
    b = vec_fin[1:2, :D]
    out_ref[...] = _layernorm(x, g, b).astype(out_ref.dtype)


# ----------------------------------------------------------------------------
# Wrapper
# ----------------------------------------------------------------------------
def transformer_forward(x, packed_params):
    wqkv_all, wo_all, w1_all, w2_all, vec_all = packed_params
    B, T, D = x.shape
    x_flat = x.reshape(B * T, D)
    kernel = functools.partial(_fused_transformer_kernel, batch=B, seq=T)
    out_flat = pl.pallas_call(
        kernel,
        out_shape=jax.ShapeDtypeStruct((B * T, D), x.dtype),
    )(x_flat, wqkv_all, wo_all, w1_all, w2_all, vec_all)
    return out_flat.reshape(B, T, D)


# ----------------------------------------------------------------------------
# Deterministic parameter init (synthetic; mirrors module __init__ shapes)
# ----------------------------------------------------------------------------
def init_params(key, dim_model=D_MODEL, num_blocks=NUM_BLOCKS, ff_ratio=FF_RATIO):
    d_ff = dim_model * ff_ratio
    block_params = []
    for blk in range(num_blocks):
        k = jax.random.fold_in(key, blk)
        ks = jax.random.split(k, 10)
        s = 0.05
        ln1g = jnp.ones((1, dim_model), jnp.float32)
        ln1b = jnp.zeros((1, dim_model), jnp.float32)
        wq = s * jax.random.normal(ks[0], (dim_model, dim_model), jnp.float32)
        bq = s * jax.random.normal(ks[1], (1, dim_model), jnp.float32)
        wk = s * jax.random.normal(ks[2], (dim_model, dim_model), jnp.float32)
        bk = s * jax.random.normal(ks[3], (1, dim_model), jnp.float32)
        wv = s * jax.random.normal(ks[4], (dim_model, dim_model), jnp.float32)
        bv = s * jax.random.normal(ks[5], (1, dim_model), jnp.float32)
        wo = s * jax.random.normal(ks[6], (dim_model, dim_model), jnp.float32)
        bo = s * jax.random.normal(ks[7], (1, dim_model), jnp.float32)
        ln2g = jnp.ones((1, dim_model), jnp.float32)
        ln2b = jnp.zeros((1, dim_model), jnp.float32)
        w1 = s * jax.random.normal(ks[8], (dim_model, d_ff), jnp.float32)
        b1 = jnp.zeros((1, d_ff), jnp.float32)
        w2 = s * jax.random.normal(ks[9], (d_ff, dim_model), jnp.float32)
        b2 = jnp.zeros((1, dim_model), jnp.float32)
        block_params.append((ln1g, ln1b, wq, bq, wk, bk, wv, bv, wo, bo,
                             ln2g, ln2b, w1, b1, w2, b2))
    lng = jnp.ones((1, dim_model), jnp.float32)
    lnb = jnp.zeros((1, dim_model), jnp.float32)
    return block_params, lng, lnb


def pack_params(params):
    """Pack per-block params into a handful of arrays for the fused kernel."""
    block_params, lng, lnb = params
    D = lng.shape[-1]
    d_ff = block_params[0][12].shape[-1]
    padw = max(3 * D, d_ff, D)

    def pad_row(v):
        v = v.reshape(-1)
        return jnp.pad(v, (0, padw - v.shape[0]))

    wqkv_l, wo_l, w1_l, w2_l, vec_l = [], [], [], [], []
    for (ln1g, ln1b, wq, bq, wk, bk, wv, bv, wo, bo,
         ln2g, ln2b, w1, b1, w2, b2) in block_params:
        wqkv_l.append(jnp.concatenate([wq, wk, wv], axis=1))          # (D, 3D)
        wo_l.append(wo)
        w1_l.append(w1)
        w2_l.append(w2)
        bqkv = jnp.concatenate([bq.reshape(-1), bk.reshape(-1), bv.reshape(-1)])
        rows = [ln1g, ln1b, bqkv, bo, ln2g, ln2b, b1, b2]
        vec_l.append(jnp.stack([pad_row(r) for r in rows]))            # (8, padw)
    # final-LayerNorm slot (rows 0,1 = gamma, beta)
    fin_rows = [lng, lnb] + [jnp.zeros((padw,), jnp.float32)] * 6
    vec_l.append(jnp.stack([pad_row(r) for r in fin_rows]))

    return (jnp.stack(wqkv_l), jnp.stack(wo_l), jnp.stack(w1_l), jnp.stack(w2_l),
            jnp.stack(vec_l))


# ----------------------------------------------------------------------------
# Pure-JAX reference (for correctness check)
# ----------------------------------------------------------------------------
def reference_forward(x, params):
    block_params, lng, lnb = params
    hp = jax.lax.Precision.HIGHEST

    def ln(x, g, b):
        mu = x.mean(-1, keepdims=True)
        var = ((x - mu) ** 2).mean(-1, keepdims=True)
        return (x - mu) / jnp.sqrt(var + LN_EPS) * g + b

    B, T, D = x.shape
    H, dh = NUM_HEADS, D // NUM_HEADS
    for (ln1g, ln1b, wq, bq, wk, bk, wv, bv, wo, bo,
         ln2g, ln2b, w1, b1, w2, b2) in block_params:
        h = ln(x, ln1g, ln1b)
        q = (jnp.dot(h, wq, precision=hp) + bq).reshape(B, T, H, dh)
        k = (jnp.dot(h, wk, precision=hp) + bk).reshape(B, T, H, dh)
        v = (jnp.dot(h, wv, precision=hp) + bv).reshape(B, T, H, dh)
        s = jnp.einsum('bqhd,bkhd->bhqk', q, k, precision=hp) / math.sqrt(dh)
        p = jax.nn.softmax(s, axis=-1)
        ctx = jnp.einsum('bhqk,bkhd->bqhd', p, v, precision=hp).reshape(B, T, D)
        x = x + jnp.dot(ctx, wo, precision=hp) + bo
        h = ln(x, ln2g, ln2b)
        h = jnp.maximum(jnp.dot(h, w1, precision=hp) + b1, 0.0)
        x = x + jnp.dot(h, w2, precision=hp) + b2
    return ln(x, lng, lnb)


if __name__ == "__main__":
    key = jax.random.PRNGKey(0)
    k_x, k_p = jax.random.split(key)
    B, T = 2, 8
    x = jax.random.normal(k_x, (B, T, D_MODEL), jnp.float32)
    params = init_params(k_p)
    packed = pack_params(params)

    out = transformer_forward(x, packed)
    out = jax.block_until_ready(out)

    ref = reference_forward(x, params)
    assert out.shape == (B, T, D_MODEL)
    assert bool(jnp.all(jnp.isfinite(out)))
    err = float(jnp.max(jnp.abs(out - ref)))
    assert err < 1e-2, f"max abs err {err}"
    print("KERNEL_OK")
</pallas_src>

<mosaic_0001>
module attributes {stable_mosaic.version = 11 : i64} {
  func.func @_fused_transformer_kernel(%arg0: memref<16x32xf32, #tpu.memory_space<vmem>>, %arg1: memref<2x32x96xf32, #tpu.memory_space<vmem>>, %arg2: memref<2x32x32xf32, #tpu.memory_space<vmem>>, %arg3: memref<2x32x128xf32, #tpu.memory_space<vmem>>, %arg4: memref<2x128x32xf32, #tpu.memory_space<vmem>>, %arg5: memref<3x8x128xf32, #tpu.memory_space<vmem>>, %arg6: memref<16x32xf32, #tpu.memory_space<vmem>>) attributes {dimension_semantics = [], scalar_prefetch = 0 : i64, scratch_operands = 0 : i64, tpu.core_type = #tpu.core_type<tc>} {
    %c0 = arith.constant 0 : index
    %c0_0 = arith.constant 0 : index
    %0 = vector.load %arg0[%c0, %c0_0] : memref<16x32xf32, #tpu.memory_space<vmem>>, vector<16x32xf32>
    %1 = tpu.iota {dimensions = array<i32: 1>} : vector<1x32xi32>
    %c0_i32 = arith.constant 0 : i32
    %2 = vector.broadcast %c0_i32 : i32 to vector<1x32xi32>
    %3 = arith.cmpi sge, %1, %2 : vector<1x32xi32>
    %c8_i32 = arith.constant 8 : i32
    %4 = vector.broadcast %c8_i32 : i32 to vector<1x32xi32>
    %5 = arith.cmpi slt, %1, %4 : vector<1x32xi32>
    %6 = arith.andi %3, %5 : vector<1x32xi1>
    %7 = arith.extui %6 : vector<1x32xi1> to vector<1x32xi32>
    %8 = arith.sitofp %7 : vector<1x32xi32> to vector<1x32xf32>
    %c8_i32_1 = arith.constant 8 : i32
    %9 = vector.broadcast %c8_i32_1 : i32 to vector<1x32xi32>
    %10 = arith.cmpi sge, %1, %9 : vector<1x32xi32>
    %c16_i32 = arith.constant 16 : i32
    %11 = vector.broadcast %c16_i32 : i32 to vector<1x32xi32>
    %12 = arith.cmpi slt, %1, %11 : vector<1x32xi32>
    %13 = arith.andi %10, %12 : vector<1x32xi1>
    %14 = arith.extui %13 : vector<1x32xi1> to vector<1x32xi32>
    %15 = arith.sitofp %14 : vector<1x32xi32> to vector<1x32xf32>
    %c16_i32_2 = arith.constant 16 : i32
    %16 = vector.broadcast %c16_i32_2 : i32 to vector<1x32xi32>
    %17 = arith.cmpi sge, %1, %16 : vector<1x32xi32>
    %c24_i32 = arith.constant 24 : i32
    %18 = vector.broadcast %c24_i32 : i32 to vector<1x32xi32>
    %19 = arith.cmpi slt, %1, %18 : vector<1x32xi32>
    %20 = arith.andi %17, %19 : vector<1x32xi1>
    %21 = arith.extui %20 : vector<1x32xi1> to vector<1x32xi32>
    %22 = arith.sitofp %21 : vector<1x32xi32> to vector<1x32xf32>
    %c24_i32_3 = arith.constant 24 : i32
    %23 = vector.broadcast %c24_i32_3 : i32 to vector<1x32xi32>
    %24 = arith.cmpi sge, %1, %23 : vector<1x32xi32>
    %c32_i32 = arith.constant 32 : i32
    %25 = vector.broadcast %c32_i32 : i32 to vector<1x32xi32>
    %26 = arith.cmpi slt, %1, %25 : vector<1x32xi32>
    %27 = arith.andi %24, %26 : vector<1x32xi1>
    %28 = arith.extui %27 : vector<1x32xi1> to vector<1x32xi32>
    %29 = arith.sitofp %28 : vector<1x32xi32> to vector<1x32xf32>
    %c0_4 = arith.constant 0 : index
    %c0_5 = arith.constant 0 : index
    %c0_6 = arith.constant 0 : index
    %30 = vector.load %arg5[%c0_4, %c0_5, %c0_6] : memref<3x8x128xf32, #tpu.memory_space<vmem>>, vector<1x8x128xf32>
    %31 = vector.shape_cast %30 : vector<1x8x128xf32> to vector<8x128xf32>
    %32 = vector.extract_strided_slice %31 {offsets = [0, 0], sizes = [1, 32], strides = [1, 1]} : vector<8x128xf32> to vector<1x32xf32>
    %33 = vector.extract_strided_slice %31 {offsets = [1, 0], sizes = [1, 32], strides = [1, 1]} : vector<8x128xf32> to vector<1x32xf32>
    %34 = vector.extract_strided_slice %31 {offsets = [2, 0], sizes = [1, 96], strides = [1, 1]} : vector<8x128xf32> to vector<1x96xf32>
    %35 = vector.extract_strided_slice %31 {offsets = [3, 0], sizes = [1, 32], strides = [1, 1]} : vector<8x128xf32> to vector<1x32xf32>
    %36 = vector.extract_strided_slice %31 {offsets = [4, 0], sizes = [1, 32], strides = [1, 1]} : vector<8x128xf32> to vector<1x32xf32>
    %37 = vector.extract_strided_slice %31 {offsets = [5, 0], sizes = [1, 32], strides = [1, 1]} : vector<8x128xf32> to vector<1x32xf32>
    %38 = vector.extract_strided_slice %31 {offsets = [6, 0], sizes = [1, 128], strides = [1, 1]} : vector<8x128xf32> to vector<1x128xf32>
    %39 = vector.extract_strided_slice %31 {offsets = [7, 0], sizes = [1, 32], strides = [1, 1]} : vector<8x128xf32> to vector<1x32xf32>
    %cst = arith.constant dense<0.000000e+00> : vector<16xf32>
    %40 = vector.multi_reduction <add>, %0, %cst [1] : vector<16x32xf32> to vector<16xf32>
    %41 = vector.shape_cast %40 : vector<16xf32> to vector<16x1xf32>
    %cst_7 = arith.constant 3.200000e+01 : f32
    %42 = vector.broadcast %cst_7 : f32 to vector<16x1xf32>
    %43 = arith.divf %41, %42 : vector<16x1xf32>
    %44 = vector.broadcast %43 : vector<16x1xf32> to vector<16x32xf32>
    %45 = arith.subf %0, %44 : vector<16x32xf32>
    %46 = arith.mulf %45, %45 : vector<16x32xf32>
    %cst_8 = arith.constant dense<0.000000e+00> : vector<16xf32>
    %47 = vector.multi_reduction <add>, %46, %cst_8 [1] : vector<16x32xf32> to vector<16xf32>
    %48 = vector.shape_cast %47 : vector<16xf32> to vector<16x1xf32>
    %cst_9 = arith.constant 3.200000e+01 : f32
    %49 = vector.broadcast %cst_9 : f32 to vector<16x1xf32>
    %50 = arith.divf %48, %49 : vector<16x1xf32>
    %51 = vector.broadcast %43 : vector<16x1xf32> to vector<16x32xf32>
    %52 = arith.subf %0, %51 : vector<16x32xf32>
    %cst_10 = arith.constant 9.99999974E-6 : f32
    %53 = vector.broadcast %cst_10 : f32 to vector<16x1xf32>
    %54 = arith.addf %50, %53 : vector<16x1xf32>
    %55 = math.rsqrt %54 : vector<16x1xf32>
    %56 = vector.broadcast %55 : vector<16x1xf32> to vector<16x32xf32>
    %57 = arith.mulf %52, %56 : vector<16x32xf32>
    %58 = vector.broadcast %32 : vector<1x32xf32> to vector<16x32xf32>
    %59 = arith.mulf %57, %58 : vector<16x32xf32>
    %60 = vector.broadcast %33 : vector<1x32xf32> to vector<16x32xf32>
    %61 = arith.addf %59, %60 : vector<16x32xf32>
    %c0_11 = arith.constant 0 : index
    %c0_12 = arith.constant 0 : index
    %c0_13 = arith.constant 0 : index
    %62 = vector.load %arg1[%c0_11, %c0_12, %c0_13] : memref<2x32x96xf32, #tpu.memory_space<vmem>>, vector<1x32x96xf32>
    %63 = vector.shape_cast %62 : vector<1x32x96xf32> to vector<32x96xf32>
    %cst_14 = arith.constant dense<0.000000e+00> : vector<16x96xf32>
    %64 = tpu.matmul %61, %63, %cst_14 {dimension_numbers = #tpu.dot_dimension_numbers<[1], [0], [0], [1], [0, 0, 1, 1], [], []>} : vector<16x32xf32>, vector<32x96xf32>, vector<16x96xf32> -> vector<16x96xf32>
    %65 = vector.broadcast %34 : vector<1x96xf32> to vector<16x96xf32>
    %66 = arith.addf %64, %65 : vector<16x96xf32>
    %67 = vector.extract_strided_slice %66 {offsets = [0, 0], sizes = [16, 32], strides = [1, 1]} : vector<16x96xf32> to vector<16x32xf32>
    %68 = vector.shape_cast %67 : vector<16x32xf32> to vector<2x8x32xf32>
    %69 = vector.extract_strided_slice %66 {offsets = [0, 32], sizes = [16, 32], strides = [1, 1]} : vector<16x96xf32> to vector<16x32xf32>
    %70 = vector.shape_cast %69 : vector<16x32xf32> to vector<2x8x32xf32>
    %71 = vector.extract_strided_slice %66 {offsets = [0, 64], sizes = [16, 32], strides = [1, 1]} : vector<16x96xf32> to vector<16x32xf32>
    %72 = vector.shape_cast %71 : vector<16x32xf32> to vector<2x8x32xf32>
    %cst_15 = arith.constant 0.000000e+00 : f32
    %73 = vector.broadcast %cst_15 : f32 to vector<2x8x32xf32>
    %74 = vector.shape_cast %8 : vector<1x32xf32> to vector<1x1x32xf32>
    %75 = vector.broadcast %74 : vector<1x1x32xf32> to vector<2x8x32xf32>
    %76 = arith.mulf %68, %75 : vector<2x8x32xf32>
    "tpu.trace_start"() <{level = 10 : i32, message = "bqd,bkd->bqk"}> : () -> ()
    %cst_16 = arith.constant dense<0.000000e+00> : vector<2x8x8xf32>
    %77 = tpu.matmul %76, %70, %cst_16 {dimension_numbers = #tpu.dot_dimension_numbers<[2], [2], [1], [1], [0, 0, 0, 1, 1, 1], [0], [0]>} : vector<2x8x32xf32>, vector<2x8x32xf32>, vector<2x8x8xf32> -> vector<2x8x8xf32>
    "tpu.trace_stop"() : () -> ()
    %cst_17 = arith.constant 0.353553385 : f32
    %78 = vector.broadcast %cst_17 : f32 to vector<2x8x8xf32>
    %79 = arith.mulf %77, %78 : vector<2x8x8xf32>
    %cst_18 = arith.constant dense<0xFF800000> : vector<2x8xf32>
    %80 = vector.multi_reduction <maximumf>, %79, %cst_18 [2] : vector<2x8x8xf32> to vector<2x8xf32>
    %81 = vector.shape_cast %80 : vector<2x8xf32> to vector<2x8x1xf32>
    %82 = vector.broadcast %81 : vector<2x8x1xf32> to vector<2x8x8xf32>
    %83 = arith.subf %79, %82 : vector<2x8x8xf32>
    %84 = math.exp %83 : vector<2x8x8xf32>
    %cst_19 = arith.constant dense<0.000000e+00> : vector<2x8xf32>
    %85 = vector.multi_reduction <add>, %84, %cst_19 [2] : vector<2x8x8xf32> to vector<2x8xf32>
    %86 = vector.shape_cast %85 : vector<2x8xf32> to vector<2x8x1xf32>
    %87 = tpu.reciprocal %86 {approx = true} : vector<2x8x1xf32> -> vector<2x8x1xf32>
    %88 = vector.broadcast %87 : vector<2x8x1xf32> to vector<2x8x8xf32>
    %89 = arith.mulf %84, %88 : vector<2x8x8xf32>
    %90 = vector.shape_cast %8 : vector<1x32xf32> to vector<1x1x32xf32>
    %91 = vector.broadcast %90 : vector<1x1x32xf32> to vector<2x8x32xf32>
    %92 = arith.mulf %72, %91 : vector<2x8x32xf32>
    "tpu.trace_start"() <{level = 10 : i32, message = "bqk,bkd->bqd"}> : () -> ()
    %cst_20 = arith.constant dense<0.000000e+00> : vector<2x8x32xf32>
    %93 = tpu.matmul %89, %92, %cst_20 {dimension_numbers = #tpu.dot_dimension_numbers<[2], [1], [1], [2], [0, 0, 0, 1, 1, 2], [0], [0]>} : vector<2x8x8xf32>, vector<2x8x32xf32>, vector<2x8x32xf32> -> vector<2x8x32xf32>
    "tpu.trace_stop"() : () -> ()
    %94 = arith.addf %73, %93 : vector<2x8x32xf32>
    %95 = vector.shape_cast %15 : vector<1x32xf32> to vector<1x1x32xf32>
    %96 = vector.broadcast %95 : vector<1x1x32xf32> to vector<2x8x32xf32>
    %97 = arith.mulf %68, %96 : vector<2x8x32xf32>
    "tpu.trace_start"() <{level = 10 : i32, message = "bqd,bkd->bqk"}> : () -> ()
    %cst_21 = arith.constant dense<0.000000e+00> : vector<2x8x8xf32>
    %98 = tpu.matmul %97, %70, %cst_21 {dimension_numbers = #tpu.dot_dimension_numbers<[2], [2], [1], [1], [0, 0, 0, 1, 1, 1], [0], [0]>} : vector<2x8x32xf32>, vector<2x8x32xf32>, vector<2x8x8xf32> -> vector<2x8x8xf32>
    "tpu.trace_stop"() : () -> ()
    %cst_22 = arith.constant 0.353553385 : f32
    %99 = vector.broadcast %cst_22 : f32 to vector<2x8x8xf32>
    %100 = arith.mulf %98, %99 : vector<2x8x8xf32>
    %cst_23 = arith.constant dense<0xFF800000> : vector<2x8xf32>
    %101 = vector.multi_reduction <maximumf>, %100, %cst_23 [2] : vector<2x8x8xf32> to vector<2x8xf32>
    %102 = vector.shape_cast %101 : vector<2x8xf32> to vector<2x8x1xf32>
    %103 = vector.broadcast %102 : vector<2x8x1xf32> to vector<2x8x8xf32>
    %104 = arith.subf %100, %103 : vector<2x8x8xf32>
    %105 = math.exp %104 : vector<2x8x8xf32>
    %cst_24 = arith.constant dense<0.000000e+00> : vector<2x8xf32>
    %106 = vector.multi_reduction <add>, %105, %cst_24 [2] : vector<2x8x8xf32> to vector<2x8xf32>
    %107 = vector.shape_cast %106 : vector<2x8xf32> to vector<2x8x1xf32>
    %108 = tpu.reciprocal %107 {approx = true} : vector<2x8x1xf32> -> vector<2x8x1xf32>
    %109 = vector.broadcast %108 : vector<2x8x1xf32> to vector<2x8x8xf32>
    %110 = arith.mulf %105, %109 : vector<2x8x8xf32>
    %111 = vector.shape_cast %15 : vector<1x32xf32> to vector<1x1x32xf32>
    %112 = vector.broadcast %111 : vector<1x1x32xf32> to vector<2x8x32xf32>
    %113 = arith.mulf %72, %112 : vector<2x8x32xf32>
    "tpu.trace_start"() <{level = 10 : i32, message = "bqk,bkd->bqd"}> : () -> ()
    %cst_25 = arith.constant dense<0.000000e+00> : vector<2x8x32xf32>
    %114 = tpu.matmul %110, %113, %cst_25 {dimension_numbers = #tpu.dot_dimension_numbers<[2], [1], [1], [2], [0, 0, 0, 1, 1, 2], [0], [0]>} : vector<2x8x8xf32>, vector<2x8x32xf32>, vector<2x8x32xf32> -> vector<2x8x32xf32>
    "tpu.trace_stop"() : () -> ()
    %115 = arith.addf %94, %114 : vector<2x8x32xf32>
    %116 = vector.shape_cast %22 : vector<1x32xf32> to vector<1x1x32xf32>
    %117 = vector.broadcast %116 : vector<1x1x32xf32> to vector<2x8x32xf32>
    %118 = arith.mulf %68, %117 : vector<2x8x32xf32>
    "tpu.trace_start"() <{level = 10 : i32, message = "bqd,bkd->bqk"}> : () -> ()
    %cst_26 = arith.constant dense<0.000000e+00> : vector<2x8x8xf32>
    %119 = tpu.matmul %118, %70, %cst_26 {dimension_numbers = #tpu.dot_dimension_numbers<[2], [2], [1], [1], [0, 0, 0, 1, 1, 1], [0], [0]>} : vector<2x8x32xf32>, vector<2x8x32xf32>, vector<2x8x8xf32> -> vector<2x8x8xf32>
    "tpu.trace_stop"() : () -> ()
    %cst_27 = arith.constant 0.353553385 : f32
    %120 = vector.broadcast %cst_27 : f32 to vector<2x8x8xf32>
    %121 = arith.mulf %119, %120 : vector<2x8x8xf32>
    %cst_28 = arith.constant dense<0xFF800000> : vector<2x8xf32>
    %122 = vector.multi_reduction <maximumf>, %121, %cst_28 [2] : vector<2x8x8xf32> to vector<2x8xf32>
    %123 = vector.shape_cast %122 : vector<2x8xf32> to vector<2x8x1xf32>
    %124 = vector.broadcast %123 : vector<2x8x1xf32> to vector<2x8x8xf32>
    %125 = arith.subf %121, %124 : vector<2x8x8xf32>
    %126 = math.exp %125 : vector<2x8x8xf32>
    %cst_29 = arith.constant dense<0.000000e+00> : vector<2x8xf32>
    %127 = vector.multi_reduction <add>, %126, %cst_29 [2] : vector<2x8x8xf32> to vector<2x8xf32>
    %128 = vector.shape_cast %127 : vector<2x8xf32> to vector<2x8x1xf32>
    %129 = tpu.reciprocal %128 {approx = true} : vector<2x8x1xf32> -> vector<2x8x1xf32>
    %130 = vector.broadcast %129 : vector<2x8x1xf32> to vector<2x8x8xf32>
    %131 = arith.mulf %126, %130 : vector<2x8x8xf32>
    %132 = vector.shape_cast %22 : vector<1x32xf32> to vector<1x1x32xf32>
    %133 = vector.broadcast %132 : vector<1x1x32xf32> to vector<2x8x32xf32>
    %134 = arith.mulf %72, %133 : vector<2x8x32xf32>
    "tpu.trace_start"() <{level = 10 : i32, message = "bqk,bkd->bqd"}> : () -> ()
    %cst_30 = arith.constant dense<0.000000e+00> : vector<2x8x32xf32>
    %135 = tpu.matmul %131, %134, %cst_30 {dimension_numbers = #tpu.dot_dimension_numbers<[2], [1], [1], [2], [0, 0, 0, 1, 1, 2], [0], [0]>} : vector<2x8x8xf32>, vector<2x8x32xf32>, vector<2x8x32xf32> -> vector<2x8x32xf32>
    "tpu.trace_stop"() : () -> ()
    %136 = arith.addf %115, %135 : vector<2x8x32xf32>
    %137 = vector.shape_cast %29 : vector<1x32xf32> to vector<1x1x32xf32>
    %138 = vector.broadcast %137 : vector<1x1x32xf32> to vector<2x8x32xf32>
    %139 = arith.mulf %68, %138 : vector<2x8x32xf32>
    "tpu.trace_start"() <{level = 10 : i32, message = "bqd,bkd->bqk"}> : () -> ()
    %cst_31 = arith.constant dense<0.000000e+00> : vector<2x8x8xf32>
    %140 = tpu.matmul %139, %70, %cst_31 {dimension_numbers = #tpu.dot_dimension_numbers<[2], [2], [1], [1], [0, 0, 0, 1, 1, 1], [0], [0]>} : vector<2x8x32xf32>, vector<2x8x32xf32>, vector<2x8x8xf32> -> vector<2x8x8xf32>
    "tpu.trace_stop"() : () -> ()
    %cst_32 = arith.constant 0.353553385 : f32
    %141 = vector.broadcast %cst_32 : f32 to vector<2x8x8xf32>
    %142 = arith.mulf %140, %141 : vector<2x8x8xf32>
    %cst_33 = arith.constant dense<0xFF800000> : vector<2x8xf32>
    %143 = vector.multi_reduction <maximumf>, %142, %cst_33 [2] : vector<2x8x8xf32> to vector<2x8xf32>
    %144 = vector.shape_cast %143 : vector<2x8xf32> to vector<2x8x1xf32>
    %145 = vector.broadcast %144 : vector<2x8x1xf32> to vector<2x8x8xf32>
    %146 = arith.subf %142, %145 : vector<2x8x8xf32>
    %147 = math.exp %146 : vector<2x8x8xf32>
    %cst_34 = arith.constant dense<0.000000e+00> : vector<2x8xf32>
    %148 = vector.multi_reduction <add>, %147, %cst_34 [2] : vector<2x8x8xf32> to vector<2x8xf32>
    %149 = vector.shape_cast %148 : vector<2x8xf32> to vector<2x8x1xf32>
    %150 = tpu.reciprocal %149 {approx = true} : vector<2x8x1xf32> -> vector<2x8x1xf32>
    %151 = vector.broadcast %150 : vector<2x8x1xf32> to vector<2x8x8xf32>
    %152 = arith.mulf %147, %151 : vector<2x8x8xf32>
    %153 = vector.shape_cast %29 : vector<1x32xf32> to vector<1x1x32xf32>
    %154 = vector.broadcast %153 : vector<1x1x32xf32> to vector<2x8x32xf32>
    %155 = arith.mulf %72, %154 : vector<2x8x32xf32>
    "tpu.trace_start"() <{level = 10 : i32, message = "bqk,bkd->bqd"}> : () -> ()
    %cst_35 = arith.constant dense<0.000000e+00> : vector<2x8x32xf32>
    %156 = tpu.matmul %152, %155, %cst_35 {dimension_numbers = #tpu.dot_dimension_numbers<[2], [1], [1], [2], [0, 0, 0, 1, 1, 2], [0], [0]>} : vector<2x8x8xf32>, vector<2x8x32xf32>, vector<2x8x32xf32> -> vector<2x8x32xf32>
    "tpu.trace_stop"() : () -> ()
    %157 = arith.addf %136, %156 : vector<2x8x32xf32>
    %158 = vector.shape_cast %157 : vector<2x8x32xf32> to vector<16x32xf32>
    %c0_36 = arith.constant 0 : index
    %c0_37 = arith.constant 0 : index
    %c0_38 = arith.constant 0 : index
    %159 = vector.load %arg2[%c0_36, %c0_37, %c0_38] : memref<2x32x32xf32, #tpu.memory_space<vmem>>, vector<1x32x32xf32>
    %160 = vector.shape_cast %159 : vector<1x32x32xf32> to vector<32x32xf32>
    %cst_39 = arith.constant dense<0.000000e+00> : vector<16x32xf32>
    %161 = tpu.matmul %158, %160, %cst_39 {dimension_numbers = #tpu.dot_dimension_numbers<[1], [0], [0], [1], [0, 0, 1, 1], [], []>} : vector<16x32xf32>, vector<32x32xf32>, vector<16x32xf32> -> vector<16x32xf32>
    %162 = vector.broadcast %35 : vector<1x32xf32> to vector<16x32xf32>
    %163 = arith.addf %161, %162 : vector<16x32xf32>
    %164 = arith.addf %0, %163 : vector<16x32xf32>
    %cst_40 = arith.constant dense<0.000000e+00> : vector<16xf32>
    %165 = vector.multi_reduction <add>, %164, %cst_40 [1] : vector<16x32xf32> to vector<16xf32>
    %166 = vector.shape_cast %165 : vector<16xf32> to vector<16x1xf32>
    %cst_41 = arith.constant 3.200000e+01 : f32
    %167 = vector.broadcast %cst_41 : f32 to vector<16x1xf32>
    %168 = arith.divf %166, %167 : vector<16x1xf32>
    %169 = vector.broadcast %168 : vector<16x1xf32> to vector<16x32xf32>
    %170 = arith.subf %164, %169 : vector<16x32xf32>
    %171 = arith.mulf %170, %170 : vector<16x32xf32>
    %cst_42 = arith.constant dense<0.000000e+00> : vector<16xf32>
    %172 = vector.multi_reduction <add>, %171, %cst_42 [1] : vector<16x32xf32> to vector<16xf32>
    %173 = vector.shape_cast %172 : vector<16xf32> to vector<16x1xf32>
    %cst_43 = arith.constant 3.200000e+01 : f32
    %174 = vector.broadcast %cst_43 : f32 to vector<16x1xf32>
    %175 = arith.divf %173, %174 : vector<16x1xf32>
    %176 = vector.broadcast %168 : vector<16x1xf32> to vector<16x32xf32>
    %177 = arith.subf %164, %176 : vector<16x32xf32>
    %cst_44 = arith.constant 9.99999974E-6 : f32
    %178 = vector.broadcast %cst_44 : f32 to vector<16x1xf32>
    %179 = arith.addf %175, %178 : vector<16x1xf32>
    %180 = math.rsqrt %179 : vector<16x1xf32>
    %181 = vector.broadcast %180 : vector<16x1xf32> to vector<16x32xf32>
    %182 = arith.mulf %177, %181 : vector<16x32xf32>
    %183 = vector.broadcast %36 : vector<1x32xf32> to vector<16x32xf32>
    %184 = arith.mulf %182, %183 : vector<16x32xf32>
    %185 = vector.broadcast %37 : vector<1x32xf32> to vector<16x32xf32>
    %186 = arith.addf %184, %185 : vector<16x32xf32>
    %c0_45 = arith.constant 0 : index
    %c0_46 = arith.constant 0 : index
    %c0_47 = arith.constant 0 : index
    %187 = vector.load %arg3[%c0_45, %c0_46, %c0_47] : memref<2x32x128xf32, #tpu.memory_space<vmem>>, vector<1x32x128xf32>
    %188 = vector.shape_cast %187 : vector<1x32x128xf32> to vector<32x128xf32>
    %cst_48 = arith.constant dense<0.000000e+00> : vector<16x128xf32>
    %189 = tpu.matmul %186, %188, %cst_48 {dimension_numbers = #tpu.dot_dimension_numbers<[1], [0], [0], [1], [0, 0, 1, 1], [], []>} : vector<16x32xf32>, vector<32x128xf32>, vector<16x128xf32> -> vector<16x128xf32>
    %190 = vector.broadcast %38 : vector<1x128xf32> to vector<16x128xf32>
    %191 = arith.addf %189, %190 : vector<16x128xf32>
    %cst_49 = arith.constant 0.000000e+00 : f32
    %192 = vector.broadcast %cst_49 : f32 to vector<16x128xf32>
    %193 = arith.maximumf %191, %192 : vector<16x128xf32>
    %c0_50 = arith.constant 0 : index
    %c0_51 = arith.constant 0 : index
    %c0_52 = arith.constant 0 : index
    %194 = vector.load %arg4[%c0_50, %c0_51, %c0_52] : memref<2x128x32xf32, #tpu.memory_space<vmem>>, vector<1x128x32xf32>
    %195 = vector.shape_cast %194 : vector<1x128x32xf32> to vector<128x32xf32>
    %cst_53 = arith.constant dense<0.000000e+00> : vector<16x32xf32>
    %196 = tpu.matmul %193, %195, %cst_53 {dimension_numbers = #tpu.dot_dimension_numbers<[1], [0], [0], [1], [0, 0, 1, 1], [], []>} : vector<16x128xf32>, vector<128x32xf32>, vector<16x32xf32> -> vector<16x32xf32>
    %197 = vector.broadcast %39 : vector<1x32xf32> to vector<16x32xf32>
    %198 = arith.addf %196, %197 : vector<16x32xf32>
    %199 = arith.addf %164, %198 : vector<16x32xf32>
    %c1 = arith.constant 1 : index
    %c0_54 = arith.constant 0 : index
    %c0_55 = arith.constant 0 : index
    %200 = vector.load %arg5[%c1, %c0_54, %c0_55] : memref<3x8x128xf32, #tpu.memory_space<vmem>>, vector<1x8x128xf32>
    %201 = vector.shape_cast %200 : vector<1x8x128xf32> to vector<8x128xf32>
    %202 = vector.extract_strided_slice %201 {offsets = [0, 0], sizes = [1, 32], strides = [1, 1]} : vector<8x128xf32> to vector<1x32xf32>
    %203 = vector.extract_strided_slice %201 {offsets = [1, 0], sizes = [1, 32], strides = [1, 1]} : vector<8x128xf32> to vector<1x32xf32>
    %204 = vector.extract_strided_slice %201 {offsets = [2, 0], sizes = [1, 96], strides = [1, 1]} : vector<8x128xf32> to vector<1x96xf32>
    %205 = vector.extract_strided_slice %201 {offsets = [3, 0], sizes = [1, 32], strides = [1, 1]} : vector<8x128xf32> to vector<1x32xf32>
    %206 = vector.extract_strided_slice %201 {offsets = [4, 0], sizes = [1, 32], strides = [1, 1]} : vector<8x128xf32> to vector<1x32xf32>
    %207 = vector.extract_strided_slice %201 {offsets = [5, 0], sizes = [1, 32], strides = [1, 1]} : vector<8x128xf32> to vector<1x32xf32>
    %208 = vector.extract_strided_slice %201 {offsets = [6, 0], sizes = [1, 128], strides = [1, 1]} : vector<8x128xf32> to vector<1x128xf32>
    %209 = vector.extract_strided_slice %201 {offsets = [7, 0], sizes = [1, 32], strides = [1, 1]} : vector<8x128xf32> to vector<1x32xf32>
    %cst_56 = arith.constant dense<0.000000e+00> : vector<16xf32>
    %210 = vector.multi_reduction <add>, %199, %cst_56 [1] : vector<16x32xf32> to vector<16xf32>
    %211 = vector.shape_cast %210 : vector<16xf32> to vector<16x1xf32>
    %cst_57 = arith.constant 3.200000e+01 : f32
    %212 = vector.broadcast %cst_57 : f32 to vector<16x1xf32>
    %213 = arith.divf %211, %212 : vector<16x1xf32>
    %214 = vector.broadcast %213 : vector<16x1xf32> to vector<16x32xf32>
    %215 = arith.subf %199, %214 : vector<16x32xf32>
    %216 = arith.mulf %215, %215 : vector<16x32xf32>
    %cst_58 = arith.constant dense<0.000000e+00> : vector<16xf32>
    %217 = vector.multi_reduction <add>, %216, %cst_58 [1] : vector<16x32xf32> to vector<16xf32>
    %218 = vector.shape_cast %217 : vector<16xf32> to vector<16x1xf32>
    %cst_59 = arith.constant 3.200000e+01 : f32
    %219 = vector.broadcast %cst_59 : f32 to vector<16x1xf32>
    %220 = arith.divf %218, %219 : vector<16x1xf32>
    %221 = vector.broadcast %213 : vector<16x1xf32> to vector<16x32xf32>
    %222 = arith.subf %199, %221 : vector<16x32xf32>
    %cst_60 = arith.constant 9.99999974E-6 : f32
    %223 = vector.broadcast %cst_60 : f32 to vector<16x1xf32>
    %224 = arith.addf %220, %223 : vector<16x1xf32>
    %225 = math.rsqrt %224 : vector<16x1xf32>
    %226 = vector.broadcast %225 : vector<16x1xf32> to vector<16x32xf32>
    %227 = arith.mulf %222, %226 : vector<16x32xf32>
    %228 = vector.broadcast %202 : vector<1x32xf32> to vector<16x32xf32>
    %229 = arith.mulf %227, %228 : vector<16x32xf32>
    %230 = vector.broadcast %203 : vector<1x32xf32> to vector<16x32xf32>
    %231 = arith.addf %229, %230 : vector<16x32xf32>
    %c1_61 = arith.constant 1 : index
    %c0_62 = arith.constant 0 : index
    %c0_63 = arith.constant 0 : index
    %232 = vector.load %arg1[%c1_61, %c0_62, %c0_63] : memref<2x32x96xf32, #tpu.memory_space<vmem>>, vector<1x32x96xf32>
    %233 = vector.shape_cast %232 : vector<1x32x96xf32> to vector<32x96xf32>
    %cst_64 = arith.constant dense<0.000000e+00> : vector<16x96xf32>
    %234 = tpu.matmul %231, %233, %cst_64 {dimension_numbers = #tpu.dot_dimension_numbers<[1], [0], [0], [1], [0, 0, 1, 1], [], []>} : vector<16x32xf32>, vector<32x96xf32>, vector<16x96xf32> -> vector<16x96xf32>
    %235 = vector.broadcast %204 : vector<1x96xf32> to vector<16x96xf32>
    %236 = arith.addf %234, %235 : vector<16x96xf32>
    %237 = vector.extract_strided_slice %236 {offsets = [0, 0], sizes = [16, 32], strides = [1, 1]} : vector<16x96xf32> to vector<16x32xf32>
    %238 = vector.shape_cast %237 : vector<16x32xf32> to vector<2x8x32xf32>
    %239 = vector.extract_strided_slice %236 {offsets = [0, 32], sizes = [16, 32], strides = [1, 1]} : vector<16x96xf32> to vector<16x32xf32>
    %240 = vector.shape_cast %239 : vector<16x32xf32> to vector<2x8x32xf32>
    %241 = vector.extract_strided_slice %236 {offsets = [0, 64], sizes = [16, 32], strides = [1, 1]} : vector<16x96xf32> to vector<16x32xf32>
    %242 = vector.shape_cast %241 : vector<16x32xf32> to vector<2x8x32xf32>
    %cst_65 = arith.constant 0.000000e+00 : f32
    %243 = vector.broadcast %cst_65 : f32 to vector<2x8x32xf32>
    %244 = vector.shape_cast %8 : vector<1x32xf32> to vector<1x1x32xf32>
    %245 = vector.broadcast %244 : vector<1x1x32xf32> to vector<2x8x32xf32>
    %246 = arith.mulf %238, %245 : vector<2x8x32xf32>
    "tpu.trace_start"() <{level = 10 : i32, message = "bqd,bkd->bqk"}> : () -> ()
    %cst_66 = arith.constant dense<0.000000e+00> : vector<2x8x8xf32>
    %247 = tpu.matmul %246, %240, %cst_66 {dimension_numbers = #tpu.dot_dimension_numbers<[2], [2], [1], [1], [0, 0, 0, 1, 1, 1], [0], [0]>} : vector<2x8x32xf32>, vector<2x8x32xf32>, vector<2x8x8xf32> -> vector<2x8x8xf32>
    "tpu.trace_stop"() : () -> ()
    %cst_67 = arith.constant 0.353553385 : f32
    %248 = vector.broadcast %cst_67 : f32 to vector<2x8x8xf32>
    %249 = arith.mulf %247, %248 : vector<2x8x8xf32>
    %cst_68 = arith.constant dense<0xFF800000> : vector<2x8xf32>
    %250 = vector.multi_reduction <maximumf>, %249, %cst_68 [2] : vector<2x8x8xf32> to vector<2x8xf32>
    %251 = vector.shape_cast %250 : vector<2x8xf32> to vector<2x8x1xf32>
    %252 = vector.broadcast %251 : vector<2x8x1xf32> to vector<2x8x8xf32>
    %253 = arith.subf %249, %252 : vector<2x8x8xf32>
    %254 = math.exp %253 : vector<2x8x8xf32>
    %cst_69 = arith.constant dense<0.000000e+00> : vector<2x8xf32>
    %255 = vector.multi_reduction <add>, %254, %cst_69 [2] : vector<2x8x8xf32> to vector<2x8xf32>
    %256 = vector.shape_cast %255 : vector<2x8xf32> to vector<2x8x1xf32>
    %257 = tpu.reciprocal %256 {approx = true} : vector<2x8x1xf32> -> vector<2x8x1xf32>
    %258 = vector.broadcast %257 : vector<2x8x1xf32> to vector<2x8x8xf32>
    %259 = arith.mulf %254, %258 : vector<2x8x8xf32>
    %260 = vector.shape_cast %8 : vector<1x32xf32> to vector<1x1x32xf32>
    %261 = vector.broadcast %260 : vector<1x1x32xf32> to vector<2x8x32xf32>
    %262 = arith.mulf %242, %261 : vector<2x8x32xf32>
    "tpu.trace_start"() <{level = 10 : i32, message = "bqk,bkd->bqd"}> : () -> ()
    %cst_70 = arith.constant dense<0.000000e+00> : vector<2x8x32xf32>
    %263 = tpu.matmul %259, %262, %cst_70 {dimension_numbers = #tpu.dot_dimension_numbers<[2], [1], [1], [2], [0, 0, 0, 1, 1, 2], [0], [0]>} : vector<2x8x8xf32>, vector<2x8x32xf32>, vector<2x8x32xf32> -> vector<2x8x32xf32>
    "tpu.trace_stop"() : () -> ()
    %264 = arith.addf %243, %263 : vector<2x8x32xf32>
    %265 = vector.shape_cast %15 : vector<1x32xf32> to vector<1x1x32xf32>
    %266 = vector.broadcast %265 : vector<1x1x32xf32> to vector<2x8x32xf32>
    %267 = arith.mulf %238, %266 : vector<2x8x32xf32>
    "tpu.trace_start"() <{level = 10 : i32, message = "bqd,bkd->bqk"}> : () -> ()
    %cst_71 = arith.constant dense<0.000000e+00> : vector<2x8x8xf32>
    %268 = tpu.matmul %267, %240, %cst_71 {dimension_numbers = #tpu.dot_dimension_numbers<[2], [2], [1], [1], [0, 0, 0, 1, 1, 1], [0], [0]>} : vector<2x8x32xf32>, vector<2x8x32xf32>, vector<2x8x8xf32> -> vector<2x8x8xf32>
    "tpu.trace_stop"() : () -> ()
    %cst_72 = arith.constant 0.353553385 : f32
    %269 = vector.broadcast %cst_72 : f32 to vector<2x8x8xf32>
    %270 = arith.mulf %268, %269 : vector<2x8x8xf32>
    %cst_73 = arith.constant dense<0xFF800000> : vector<2x8xf32>
    %271 = vector.multi_reduction <maximumf>, %270, %cst_73 [2] : vector<2x8x8xf32> to vector<2x8xf32>
    %272 = vector.shape_cast %271 : vector<2x8xf32> to vector<2x8x1xf32>
    %273 = vector.broadcast %272 : vector<2x8x1xf32> to vector<2x8x8xf32>
    %274 = arith.subf %270, %273 : vector<2x8x8xf32>
    %275 = math.exp %274 : vector<2x8x8xf32>
    %cst_74 = arith.constant dense<0.000000e+00> : vector<2x8xf32>
    %276 = vector.multi_reduction <add>, %275, %cst_74 [2] : vector<2x8x8xf32> to vector<2x8xf32>
    %277 = vector.shape_cast %276 : vector<2x8xf32> to vector<2x8x1xf32>
    %278 = tpu.reciprocal %277 {approx = true} : vector<2x8x1xf32> -> vector<2x8x1xf32>
    %279 = vector.broadcast %278 : vector<2x8x1xf32> to vector<2x8x8xf32>
    %280 = arith.mulf %275, %279 : vector<2x8x8xf32>
    %281 = vector.shape_cast %15 : vector<1x32xf32> to vector<1x1x32xf32>
    %282 = vector.broadcast %281 : vector<1x1x32xf32> to vector<2x8x32xf32>
    %283 = arith.mulf %242, %282 : vector<2x8x32xf32>
    "tpu.trace_start"() <{level = 10 : i32, message = "bqk,bkd->bqd"}> : () -> ()
    %cst_75 = arith.constant dense<0.000000e+00> : vector<2x8x32xf32>
    %284 = tpu.matmul %280, %283, %cst_75 {dimension_numbers = #tpu.dot_dimension_numbers<[2], [1], [1], [2], [0, 0, 0, 1, 1, 2], [0], [0]>} : vector<2x8x8xf32>, vector<2x8x32xf32>, vector<2x8x32xf32> -> vector<2x8x32xf32>
    "tpu.trace_stop"() : () -> ()
    %285 = arith.addf %264, %284 : vector<2x8x32xf32>
    %286 = vector.shape_cast %22 : vector<1x32xf32> to vector<1x1x32xf32>
    %287 = vector.broadcast %286 : vector<1x1x32xf32> to vector<2x8x32xf32>
    %288 = arith.mulf %238, %287 : vector<2x8x32xf32>
    "tpu.trace_start"() <{level = 10 : i32, message = "bqd,bkd->bqk"}> : () -> ()
    %cst_76 = arith.constant dense<0.000000e+00> : vector<2x8x8xf32>
    %289 = tpu.matmul %288, %240, %cst_76 {dimension_numbers = #tpu.dot_dimension_numbers<[2], [2], [1], [1], [0, 0, 0, 1, 1, 1], [0], [0]>} : vector<2x8x32xf32>, vector<2x8x32xf32>, vector<2x8x8xf32> -> vector<2x8x8xf32>
    "tpu.trace_stop"() : () -> ()
    %cst_77 = arith.constant 0.353553385 : f32
    %290 = vector.broadcast %cst_77 : f32 to vector<2x8x8xf32>
    %291 = arith.mulf %289, %290 : vector<2x8x8xf32>
    %cst_78 = arith.constant dense<0xFF800000> : vector<2x8xf32>
    %292 = vector.multi_reduction <maximumf>, %291, %cst_78 [2] : vector<2x8x8xf32> to vector<2x8xf32>
    %293 = vector.shape_cast %292 : vector<2x8xf32> to vector<2x8x1xf32>
    %294 = vector.broadcast %293 : vector<2x8x1xf32> to vector<2x8x8xf32>
    %295 = arith.subf %291, %294 : vector<2x8x8xf32>
    %296 = math.exp %295 : vector<2x8x8xf32>
    %cst_79 = arith.constant dense<0.000000e+00> : vector<2x8xf32>
    %297 = vector.multi_reduction <add>, %296, %cst_79 [2] : vector<2x8x8xf32> to vector<2x8xf32>
    %298 = vector.shape_cast %297 : vector<2x8xf32> to vector<2x8x1xf32>
    %299 = tpu.reciprocal %298 {approx = true} : vector<2x8x1xf32> -> vector<2x8x1xf32>
    %300 = vector.broadcast %299 : vector<2x8x1xf32> to vector<2x8x8xf32>
    %301 = arith.mulf %296, %300 : vector<2x8x8xf32>
    %302 = vector.shape_cast %22 : vector<1x32xf32> to vector<1x1x32xf32>
    %303 = vector.broadcast %302 : vector<1x1x32xf32> to vector<2x8x32xf32>
    %304 = arith.mulf %242, %303 : vector<2x8x32xf32>
    "tpu.trace_start"() <{level = 10 : i32, message = "bqk,bkd->bqd"}> : () -> ()
    %cst_80 = arith.constant dense<0.000000e+00> : vector<2x8x32xf32>
    %305 = tpu.matmul %301, %304, %cst_80 {dimension_numbers = #tpu.dot_dimension_numbers<[2], [1], [1], [2], [0, 0, 0, 1, 1, 2], [0], [0]>} : vector<2x8x8xf32>, vector<2x8x32xf32>, vector<2x8x32xf32> -> vector<2x8x32xf32>
    "tpu.trace_stop"() : () -> ()
    %306 = arith.addf %285, %305 : vector<2x8x32xf32>
    %307 = vector.shape_cast %29 : vector<1x32xf32> to vector<1x1x32xf32>
    %308 = vector.broadcast %307 : vector<1x1x32xf32> to vector<2x8x32xf32>
    %309 = arith.mulf %238, %308 : vector<2x8x32xf32>
    "tpu.trace_start"() <{level = 10 : i32, message = "bqd,bkd->bqk"}> : () -> ()
    %cst_81 = arith.constant dense<0.000000e+00> : vector<2x8x8xf32>
    %310 = tpu.matmul %309, %240, %cst_81 {dimension_numbers = #tpu.dot_dimension_numbers<[2], [2], [1], [1], [0, 0, 0, 1, 1, 1], [0], [0]>} : vector<2x8x32xf32>, vector<2x8x32xf32>, vector<2x8x8xf32> -> vector<2x8x8xf32>
    "tpu.trace_stop"() : () -> ()
    %cst_82 = arith.constant 0.353553385 : f32
    %311 = vector.broadcast %cst_82 : f32 to vector<2x8x8xf32>
    %312 = arith.mulf %310, %311 : vector<2x8x8xf32>
    %cst_83 = arith.constant dense<0xFF800000> : vector<2x8xf32>
    %313 = vector.multi_reduction <maximumf>, %312, %cst_83 [2] : vector<2x8x8xf32> to vector<2x8xf32>
    %314 = vector.shape_cast %313 : vector<2x8xf32> to vector<2x8x1xf32>
    %315 = vector.broadcast %314 : vector<2x8x1xf32> to vector<2x8x8xf32>
    %316 = arith.subf %312, %315 : vector<2x8x8xf32>
    %317 = math.exp %316 : vector<2x8x8xf32>
    %cst_84 = arith.constant dense<0.000000e+00> : vector<2x8xf32>
    %318 = vector.multi_reduction <add>, %317, %cst_84 [2] : vector<2x8x8xf32> to vector<2x8xf32>
    %319 = vector.shape_cast %318 : vector<2x8xf32> to vector<2x8x1xf32>
    %320 = tpu.reciprocal %319 {approx = true} : vector<2x8x1xf32> -> vector<2x8x1xf32>
    %321 = vector.broadcast %320 : vector<2x8x1xf32> to vector<2x8x8xf32>
    %322 = arith.mulf %317, %321 : vector<2x8x8xf32>
    %323 = vector.shape_cast %29 : vector<1x32xf32> to vector<1x1x32xf32>
    %324 = vector.broadcast %323 : vector<1x1x32xf32> to vector<2x8x32xf32>
    %325 = arith.mulf %242, %324 : vector<2x8x32xf32>
    "tpu.trace_start"() <{level = 10 : i32, message = "bqk,bkd->bqd"}> : () -> ()
    %cst_85 = arith.constant dense<0.000000e+00> : vector<2x8x32xf32>
    %326 = tpu.matmul %322, %325, %cst_85 {dimension_numbers = #tpu.dot_dimension_numbers<[2], [1], [1], [2], [0, 0, 0, 1, 1, 2], [0], [0]>} : vector<2x8x8xf32>, vector<2x8x32xf32>, vector<2x8x32xf32> -> vector<2x8x32xf32>
    "tpu.trace_stop"() : () -> ()
    %327 = arith.addf %306, %326 : vector<2x8x32xf32>
    %328 = vector.shape_cast %327 : vector<2x8x32xf32> to vector<16x32xf32>
    %c1_86 = arith.constant 1 : index
    %c0_87 = arith.constant 0 : index
    %c0_88 = arith.constant 0 : index
    %329 = vector.load %arg2[%c1_86, %c0_87, %c0_88] : memref<2x32x32xf32, #tpu.memory_space<vmem>>, vector<1x32x32xf32>
    %330 = vector.shape_cast %329 : vector<1x32x32xf32> to vector<32x32xf32>
    %cst_89 = arith.constant dense<0.000000e+00> : vector<16x32xf32>
    %331 = tpu.matmul %328, %330, %cst_89 {dimension_numbers = #tpu.dot_dimension_numbers<[1], [0], [0], [1], [0, 0, 1, 1], [], []>} : vector<16x32xf32>, vector<32x32xf32>, vector<16x32xf32> -> vector<16x32xf32>
    %332 = vector.broadcast %205 : vector<1x32xf32> to vector<16x32xf32>
    %333 = arith.addf %331, %332 : vector<16x32xf32>
    %334 = arith.addf %199, %333 : vector<16x32xf32>
    %cst_90 = arith.constant dense<0.000000e+00> : vector<16xf32>
    %335 = vector.multi_reduction <add>, %334, %cst_90 [1] : vector<16x32xf32> to vector<16xf32>
    %336 = vector.shape_cast %335 : vector<16xf32> to vector<16x1xf32>
    %cst_91 = arith.constant 3.200000e+01 : f32
    %337 = vector.broadcast %cst_91 : f32 to vector<16x1xf32>
    %338 = arith.divf %336, %337 : vector<16x1xf32>
    %339 = vector.broadcast %338 : vector<16x1xf32> to vector<16x32xf32>
    %340 = arith.subf %334, %339 : vector<16x32xf32>
    %341 = arith.mulf %340, %340 : vector<16x32xf32>
    %cst_92 = arith.constant dense<0.000000e+00> : vector<16xf32>
    %342 = vector.multi_reduction <add>, %341, %cst_92 [1] : vector<16x32xf32> to vector<16xf32>
    %343 = vector.shape_cast %342 : vector<16xf32> to vector<16x1xf32>
    %cst_93 = arith.constant 3.200000e+01 : f32
    %344 = vector.broadcast %cst_93 : f32 to vector<16x1xf32>
    %345 = arith.divf %343, %344 : vector<16x1xf32>
    %346 = vector.broadcast %338 : vector<16x1xf32> to vector<16x32xf32>
    %347 = arith.subf %334, %346 : vector<16x32xf32>
    %cst_94 = arith.constant 9.99999974E-6 : f32
    %348 = vector.broadcast %cst_94 : f32 to vector<16x1xf32>
    %349 = arith.addf %345, %348 : vector<16x1xf32>
    %350 = math.rsqrt %349 : vector<16x1xf32>
    %351 = vector.broadcast %350 : vector<16x1xf32> to vector<16x32xf32>
    %352 = arith.mulf %347, %351 : vector<16x32xf32>
    %353 = vector.broadcast %206 : vector<1x32xf32> to vector<16x32xf32>
    %354 = arith.mulf %352, %353 : vector<16x32xf32>
    %355 = vector.broadcast %207 : vector<1x32xf32> to vector<16x32xf32>
    %356 = arith.addf %354, %355 : vector<16x32xf32>
    %c1_95 = arith.constant 1 : index
    %c0_96 = arith.constant 0 : index
    %c0_97 = arith.constant 0 : index
    %357 = vector.load %arg3[%c1_95, %c0_96, %c0_97] : memref<2x32x128xf32, #tpu.memory_space<vmem>>, vector<1x32x128xf32>
    %358 = vector.shape_cast %357 : vector<1x32x128xf32> to vector<32x128xf32>
    %cst_98 = arith.constant dense<0.000000e+00> : vector<16x128xf32>
    %359 = tpu.matmul %356, %358, %cst_98 {dimension_numbers = #tpu.dot_dimension_numbers<[1], [0], [0], [1], [0, 0, 1, 1], [], []>} : vector<16x32xf32>, vector<32x128xf32>, vector<16x128xf32> -> vector<16x128xf32>
    %360 = vector.broadcast %208 : vector<1x128xf32> to vector<16x128xf32>
    %361 = arith.addf %359, %360 : vector<16x128xf32>
    %cst_99 = arith.constant 0.000000e+00 : f32
    %362 = vector.broadcast %cst_99 : f32 to vector<16x128xf32>
    %363 = arith.maximumf %361, %362 : vector<16x128xf32>
    %c1_100 = arith.constant 1 : index
    %c0_101 = arith.constant 0 : index
    %c0_102 = arith.constant 0 : index
    %364 = vector.load %arg4[%c1_100, %c0_101, %c0_102] : memref<2x128x32xf32, #tpu.memory_space<vmem>>, vector<1x128x32xf32>
    %365 = vector.shape_cast %364 : vector<1x128x32xf32> to vector<128x32xf32>
    %cst_103 = arith.constant dense<0.000000e+00> : vector<16x32xf32>
    %366 = tpu.matmul %363, %365, %cst_103 {dimension_numbers = #tpu.dot_dimension_numbers<[1], [0], [0], [1], [0, 0, 1, 1], [], []>} : vector<16x128xf32>, vector<128x32xf32>, vector<16x32xf32> -> vector<16x32xf32>
    %367 = vector.broadcast %209 : vector<1x32xf32> to vector<16x32xf32>
    %368 = arith.addf %366, %367 : vector<16x32xf32>
    %369 = arith.addf %334, %368 : vector<16x32xf32>
    %c2 = arith.constant 2 : index
    %c0_104 = arith.constant 0 : index
    %c0_105 = arith.constant 0 : index
    %370 = vector.load %arg5[%c2, %c0_104, %c0_105] : memref<3x8x128xf32, #tpu.memory_space<vmem>>, vector<1x8x128xf32>
    %371 = vector.shape_cast %370 : vector<1x8x128xf32> to vector<8x128xf32>
    %372 = vector.extract_strided_slice %371 {offsets = [0, 0], sizes = [1, 32], strides = [1, 1]} : vector<8x128xf32> to vector<1x32xf32>
    %373 = vector.extract_strided_slice %371 {offsets = [1, 0], sizes = [1, 32], strides = [1, 1]} : vector<8x128xf32> to vector<1x32xf32>
    %cst_106 = arith.constant dense<0.000000e+00> : vector<16xf32>
    %374 = vector.multi_reduction <add>, %369, %cst_106 [1] : vector<16x32xf32> to vector<16xf32>
    %375 = vector.shape_cast %374 : vector<16xf32> to vector<16x1xf32>
    %cst_107 = arith.constant 3.200000e+01 : f32
    %376 = vector.broadcast %cst_107 : f32 to vector<16x1xf32>
    %377 = arith.divf %375, %376 : vector<16x1xf32>
    %378 = vector.broadcast %377 : vector<16x1xf32> to vector<16x32xf32>
    %379 = arith.subf %369, %378 : vector<16x32xf32>
    %380 = arith.mulf %379, %379 : vector<16x32xf32>
    %cst_108 = arith.constant dense<0.000000e+00> : vector<16xf32>
    %381 = vector.multi_reduction <add>, %380, %cst_108 [1] : vector<16x32xf32> to vector<16xf32>
    %382 = vector.shape_cast %381 : vector<16xf32> to vector<16x1xf32>
    %cst_109 = arith.constant 3.200000e+01 : f32
    %383 = vector.broadcast %cst_109 : f32 to vector<16x1xf32>
    %384 = arith.divf %382, %383 : vector<16x1xf32>
    %385 = vector.broadcast %377 : vector<16x1xf32> to vector<16x32xf32>
    %386 = arith.subf %369, %385 : vector<16x32xf32>
    %cst_110 = arith.constant 9.99999974E-6 : f32
    %387 = vector.broadcast %cst_110 : f32 to vector<16x1xf32>
    %388 = arith.addf %384, %387 : vector<16x1xf32>
    %389 = math.rsqrt %388 : vector<16x1xf32>
    %390 = vector.broadcast %389 : vector<16x1xf32> to vector<16x32xf32>
    %391 = arith.mulf %386, %390 : vector<16x32xf32>
    %392 = vector.broadcast %372 : vector<1x32xf32> to vector<16x32xf32>
    %393 = arith.mulf %391, %392 : vector<16x32xf32>
    %394 = vector.broadcast %373 : vector<1x32xf32> to vector<16x32xf32>
    %395 = arith.addf %393, %394 : vector<16x32xf32>
    %c0_111 = arith.constant 0 : index
    %c0_112 = arith.constant 0 : index
    %396 = vector.load %arg6[%c0_111, %c0_112] : memref<16x32xf32, #tpu.memory_space<vmem>>, vector<16x32xf32>
    tpu.vector_store %arg6[%c0_111, %c0_112], %395 {strides = array<i32>} : memref<16x32xf32, #tpu.memory_space<vmem>>, vector<16x32xf32>,
    return
  }
}

</mosaic_0001>

<llo_original>
// kernel: tpu_custom_call.1
$region0: #{tpu_custom_call.1}
  #allocation0 [shape = 'u32[]', space=smem, size = 0x4, offset = 0x4, fixed_abs, tag = 'smem constant byte address 0x4 - core index']
  #allocation1 [shape = 'u32[144,128]{1,0:T(1,128)}', space=vmem, size = 0x12000, scoped, tag = 'internal scratch']
  %s0 = inlined_call_operand.vmem [shape: f32[16,32], index: 0, kind: input, shape index: {}]
  %s1 = inlined_call_operand.vmem [shape: f32[2,32,96], index: 1, kind: input, shape index: {}]
  %s2 = inlined_call_operand.vmem [shape: f32[2,32,32], index: 2, kind: input, shape index: {}]
  %s3 = inlined_call_operand.vmem [shape: f32[2,32,128], index: 3, kind: input, shape index: {}]
  %s4 = inlined_call_operand.vmem [shape: f32[2,128,32], index: 4, kind: input, shape index: {}]
  %s5 = inlined_call_operand.vmem [shape: f32[3,8,128], index: 5, kind: input, shape index: {}]
  %s6 = inlined_call_operand.hbm [shape: f32[16,32], index: 6, kind: output, shape index: {}]
  %s7 = sld [smem:[#allocation0]]
  $region34: #{tpu_custom_call.1} parent=0
    _
  %s9 = ssub.s32 1, %s7
  %s10 = scalar_select 0, %s9, %s7
  $region1: #{tpu_custom_call.1} parent=0
    #allocation2 [shape = 'u8[8192]{0}', space=vmem, size = 0x2000, scoped, tag = 'output window, operand 0, single buffered']
    #allocation3 [shape = 's32[1]{0}', space=sflag, size = 0x4, scoped, tag = 'scoped memory for tpu_custom_call.1']
    %11 = vsyncpa [#allocation3], 0
    // Predicated region
    $region2: #{tpu_custom_call.1} parent=1 // pred_check
      _
    $region3: #{tpu_custom_call.1} parent=1 // pred_check_branch
      %13 = sbr.rel (0) target = $region5
    $region4: #{tpu_custom_call.1} parent=1 // pred_region
      _
    $region5: #{tpu_custom_call.1} parent=1 // pred_fallthru
      _
    // Predicated region
    $region6: #{tpu_custom_call.1} parent=1 // pred_check
      _
    $region7: #{tpu_custom_call.1} parent=1 // pred_check_branch
      %15 = sbr.rel (0) target = $region9
    $region8: #{tpu_custom_call.1} parent=1 // pred_region
      _
    $region9: #{tpu_custom_call.1} parent=1 // pred_fallthru
      _
    // Predicated region
    $region10: #{tpu_custom_call.1} parent=1 // pred_check
      _
    $region11: #{tpu_custom_call.1} parent=1 // pred_check_branch
      %17 = sbr.rel (0) target = $region13
    $region12: #{tpu_custom_call.1} parent=1 // pred_region
      _
    $region13: #{tpu_custom_call.1} parent=1 // pred_fallthru
      _
    // Predicated region
    $region14: #{tpu_custom_call.1} parent=1 // pred_check
      _
    $region15: #{tpu_custom_call.1} parent=1 // pred_check_branch
      %19 = sbr.rel (0) target = $region17
    $region16: #{tpu_custom_call.1} parent=1 // pred_region
      _
    $region17: #{tpu_custom_call.1} parent=1 // pred_fallthru
      _
    // Predicated region
    $region18: #{tpu_custom_call.1} parent=1 // pred_check
      _
    $region19: #{tpu_custom_call.1} parent=1 // pred_check_branch
      %21 = sbr.rel (0) target = $region21
    $region20: #{tpu_custom_call.1} parent=1 // pred_region
      _
    $region21: #{tpu_custom_call.1} parent=1 // pred_fallthru
      _
    // Predicated region
    $region22: #{tpu_custom_call.1} parent=1 // pred_check
      _
    $region23: #{tpu_custom_call.1} parent=1 // pred_check_branch
      %23 = sbr.rel (0) target = $region25
    $region24: #{tpu_custom_call.1} parent=1 // pred_region
      _
    $region25: #{tpu_custom_call.1} parent=1 // pred_fallthru
      _
    %v24 = vld [vmem:[%s0] sm:$0xff]
    %v25 = vld [vmem:[%s0 + $0x8] sm:$0xff]
    %v26 = vlaneseq
    %v27 = vand.u32 %v26, 127
    %vm28 = vcmp.ge.s32.totalorder %v27, 0
    %vm29 = vcmp.lt.s32.totalorder %v27, 8
    %vm30 = vmand %vm28, %vm29
    %v31 = vsel %vm30, 1, 0
    %v32 = vcvt.s32.f32 %v31
    %vm33 = vcmp.ge.s32.totalorder %v27, 8
    %vm34 = vcmp.lt.s32.totalorder %v27, 16
    %vm35 = vmand %vm33, %vm34
    %v36 = vsel %vm35, 1, 0
    %v37 = vcvt.s32.f32 %v36
    %vm38 = vcmp.ge.s32.totalorder %v27, 16
    %vm39 = vcmp.lt.s32.totalorder %v27, 24
    %vm40 = vmand %vm38, %vm39
    %v41 = vsel %vm40, 1, 0
    %v42 = vcvt.s32.f32 %v41
    %vm43 = vcmp.ge.s32.totalorder %v27, 24
    %vm44 = vcmp.lt.s32.totalorder %v27, 32
    %vm45 = vmand %vm43, %vm44
    %v46 = vsel %vm45, 1, 0
    %v47 = vcvt.s32.f32 %v46
    %v48 = vld [vmem:[%s5] sm:$0xff]
    %vm49 = vcmask 261120
    %v50 = vsel %vm49, %v24, 0.0
    %51 = vadd.xlane.f32.xlu0 %v50
    %v52 = vpop.xlane.xlu0 %51
    %v53 = vsel %vm49, %v25, 0.0
    %54 = vadd.xlane.f32.xlu0 %v53
    %v55 = vpop.xlane.xlu0 %54
    %v56 = vrcp.pop 32.0
    %v57 = vmul.f32 %v52, %v56
    %v58 = vmul.f32 %v55, %v56
    %v59 = vsub.f32 %v24, %v57
    %v60 = vsub.f32 %v25, %v58
    %v61 = vmul.f32 %v59, %v59
    %v62 = vmul.f32 %v60, %v60
    %v63 = vsel %vm49, %v61, 0.0
    %64 = vadd.xlane.f32.xlu0 %v63
    %v65 = vpop.xlane.xlu0 %64
    %v66 = vsel %vm49, %v62, 0.0
    %67 = vadd.xlane.f32.xlu0 %v66
    %v68 = vpop.xlane.xlu0 %67
    %v69 = vmul.f32 %v65, %v56
    %v70 = vmul.f32 %v68, %v56
    %v71 = vadd.f32 %v69, 1e-05
    %v72 = vadd.f32 %v70, 1e-05
    %v73 = vrsqrt.pop %v71
    %v74 = vrsqrt.pop %v72
    %v75 = vmul.f32 %v59, %v73
    %v76 = vmul.f32 %v60, %v74
    %v77 = vlaneseq
    %v78 = vshrl.u32 %v77, 7
    %v79 = vsub.s32 0, %v78
    %v80 = vrot.slane %v48, %v79
    %v81 = vmul.f32 %v75, %v80
    %v82 = vmul.f32 %v76, %v80
    %v83 = vlaneseq
    %v84 = vshrl.u32 %v83, 7
    %v85 = vsub.s32 1, %v84
    %v86 = vrot.slane %v48, %v85
    %v87 = vadd.f32 %v81, %v86
    %v88 = vadd.f32 %v82, %v86
    %v89 = vld [vmem:[%s1] sm:$0xff]
    %v90 = vld [vmem:[%s1 + $0x8] sm:$0xff]
    %v91 = vld [vmem:[%s1 + $0x10] sm:$0xff]
    %v92 = vld [vmem:[%s1 + $0x18] sm:$0xff]
    %v93 = vlaneseq
    %v94 = vshrl.u32 %v93, 7
    %v95 = vsub.s32 2, %v94
    %v96 = vrot.slane %v48, %v95
    %v98 = vsel %vm49, %v87, 0
    %v101 = vsel %vm49, %v88, 0
    %103 = vmatprep.subr.mxu0 0.0
    %104 = vmatpush1.msra.mxu0 %v89
    %105 = vmatprep.subr.mxu0 0.0
    %106 = vmatpush1.msra.mxu0 %v90
    %107 = vmatprep.subr.mxu0 0.0
    %108 = vmatpush1.msra.mxu0 %v91
    %109 = vmatprep.subr.mxu0 0.0
    %110 = vmatpush1.msra.mxu0 %v92
    %111 = vmatprep.subr.mxu0 0.0
    %112 = vmatpush1.msra.mxu0 0.0
    %113 = vmatprep.subr.mxu0 0.0
    %114 = vmatpush1.msra.mxu0 0.0
    %115 = vmatprep.subr.mxu0 0.0
    %116 = vmatpush1.msra.mxu0 0.0
    %117 = vmatprep.subr.mxu0 0.0
    %118 = vmatpush1.msra.mxu0 0.0
    %119 = vmatprep.subr.mxu0 0.0
    %120 = vmatpush1.msra.mxu0 0.0
    %121 = vmatprep.subr.mxu0 0.0
    %122 = vmatpush1.msra.mxu0 0.0
    %123 = vmatprep.subr.mxu0 0.0
    %124 = vmatpush1.msra.mxu0 0.0
    %125 = vmatprep.subr.mxu0 0.0
    %126 = vmatpush1.msra.mxu0 0.0
    %127 = vmatprep.subr.mxu0 0.0
    %128 = vmatpush1.msra.mxu0 0.0
    %129 = vmatprep.subr.mxu0 0.0
    %130 = vmatpush1.msra.mxu0 0.0
    %131 = vmatprep.subr.mxu0 0.0
    %132 = vmatpush1.msra.mxu0 0.0
    %133 = vmatprep.subr.mxu0 0.0
    %134 = vmatpush1.msra.mxu0 0.0
    %135 = vmatprep.subr.mxu0 0.0
    %136 = vmatpush1.msra.mxu0 0.0
    %137 = vmatprep.subr.mxu0 0.0
    %138 = vmatpush1.msra.mxu0 0.0
    %139 = vmatprep.subr.mxu0 0.0
    %140 = vmatpush1.msra.mxu0 0.0
    %141 = vmatprep.subr.mxu0 0.0
    %142 = vmatpush1.msra.mxu0 0.0
    %143 = vmatprep.subr.mxu0 0.0
    %144 = vmatpush1.msra.mxu0 0.0
    %145 = vmatprep.subr.mxu0 0.0
    %146 = vmatpush1.msra.mxu0 0.0
    %147 = vmatprep.subr.mxu0 0.0
    %148 = vmatpush1.msra.mxu0 0.0
    %149 = vmatprep.subr.mxu0 0.0
    %150 = vmatpush1.msra.mxu0 0.0
    %151 = vmatprep.subr.mxu0 0.0
    %152 = vmatpush1.msra.mxu0 0.0
    %153 = vmatprep.subr.mxu0 0.0
    %154 = vmatpush1.msra.mxu0 0.0
    %155 = vmatprep.subr.mxu0 0.0
    %156 = vmatpush1.msra.mxu0 0.0
    %157 = vmatprep.subr.mxu0 0.0
    %158 = vmatpush1.msra.mxu0 0.0
    %159 = vmatprep.subr.mxu0 0.0
    %160 = vmatpush1.msra.mxu0 0.0
    %161 = vmatprep.subr.mxu0 0.0
    %162 = vmatpush1.msra.mxu0 0.0
    %163 = vmatprep.subr.mxu0 0.0
    %164 = vmatpush1.msra.mxu0 0.0
    %165 = vmatprep.subr.mxu0 0.0
    %166 = vmatpush1.msra.mxu0 0.0
    %167 = vmatprep.mubr.f32.mxu0 0.0
    %168 = vmatmul.mubr.f32.gmra.mrb[0].mxu0 %v98
    %v169 = vpop.f32.mrb[0].mxu0
    %v170 = vadd.f32 %v96, %v169
    %v171 = vpop.f32.mrb[0].mxu0
    %172 = vmatprep.mubr.f32.mxu0 0.0
    %173 = vmatmul.mubr.f32.gmra.mrb[0].mxu0 %v101
    %v174 = vpop.f32.mrb[0].mxu0
    %v175 = vadd.f32 %v96, %v174
    %v176 = vpop.f32.mrb[0].mxu0
    %177 = vdwg.mxu0
    %v178 = vmul.f32 %v170, %v32
    %v179 = vmul.f32 %v175, %v32
    %181 = vrot.lane.b32.xlu0 %v170, 96
    %v182 = vpop.permute.xlu0 %181
    %v184 = vsel %vm49, %v178, 0
    %v186 = vsel %vm49, %v182, 0
    %188 = vmatprep.subr.mxu0 0.0
    %189 = vmatpush1.xpose.msra.mxu0 %v186
    %190 = vmatprep.subr.mxu0 0.0
    %191 = vmatpush1.xpose.msra.mxu0 0.0
    %192 = vmatprep.subr.mxu0 0.0
    %193 = vmatpush1.xpose.msra.mxu0 0.0
    %194 = vmatprep.subr.mxu0 0.0
    %195 = vmatpush1.xpose.msra.mxu0 0.0
    %196 = vmatprep.subr.mxu0 0.0
    %197 = vmatpush1.xpose.msra.mxu0 0.0
    %198 = vmatprep.subr.mxu0 0.0
    %199 = vmatpush1.xpose.msra.mxu0 0.0
    %200 = vmatprep.subr.mxu0 0.0
    %201 = vmatpush1.xpose.msra.mxu0 0.0
    %202 = vmatprep.subr.mxu0 0.0
    %203 = vmatpush1.xpose.msra.mxu0 0.0
    %204 = vmatprep.subr.mxu0 0.0
    %205 = vmatpush1.xpose.msra.mxu0 0.0
    %206 = vmatprep.subr.mxu0 0.0
    %207 = vmatpush1.xpose.msra.mxu0 0.0
    %208 = vmatprep.subr.mxu0 0.0
    %209 = vmatpush1.xpose.msra.mxu0 0.0
    %210 = vmatprep.subr.mxu0 0.0
    %211 = vmatpush1.xpose.msra.mxu0 0.0
    %212 = vmatprep.subr.mxu0 0.0
    %213 = vmatpush1.xpose.msra.mxu0 0.0
    %214 = vmatprep.subr.mxu0 0.0
    %215 = vmatpush1.xpose.msra.mxu0 0.0
    %216 = vmatprep.subr.mxu0 0.0
    %217 = vmatpush1.xpose.msra.mxu0 0.0
    %218 = vmatprep.subr.mxu0 0.0
    %219 = vmatpush1.xpose.msra.mxu0 0.0
    %220 = vmatprep.subr.mxu0 0.0
    %221 = vmatpush1.xpose.msra.mxu0 0.0
    %222 = vmatprep.subr.mxu0 0.0
    %223 = vmatpush1.xpose.msra.mxu0 0.0
    %224 = vmatprep.subr.mxu0 0.0
    %225 = vmatpush1.xpose.msra.mxu0 0.0
    %226 = vmatprep.subr.mxu0 0.0
    %227 = vmatpush1.xpose.msra.mxu0 0.0
    %228 = vmatprep.subr.mxu0 0.0
    %229 = vmatpush1.xpose.msra.mxu0 0.0
    %230 = vmatprep.subr.mxu0 0.0
    %231 = vmatpush1.xpose.msra.mxu0 0.0
    %232 = vmatprep.subr.mxu0 0.0
    %233 = vmatpush1.xpose.msra.mxu0 0.0
    %234 = vmatprep.subr.mxu0 0.0
    %235 = vmatpush1.xpose.msra.mxu0 0.0
    %236 = vmatprep.subr.mxu0 0.0
    %237 = vmatpush1.xpose.msra.mxu0 0.0
    %238 = vmatprep.subr.mxu0 0.0
    %239 = vmatpush1.xpose.msra.mxu0 0.0
    %240 = vmatprep.subr.mxu0 0.0
    %241 = vmatpush1.xpose.msra.mxu0 0.0
    %242 = vmatprep.subr.mxu0 0.0
    %243 = vmatpush1.xpose.msra.mxu0 0.0
    %244 = vmatprep.subr.mxu0 0.0
    %245 = vmatpush1.xpose.msra.mxu0 0.0
    %246 = vmatprep.subr.mxu0 0.0
    %247 = vmatpush1.xpose.msra.mxu0 0.0
    %248 = vmatprep.subr.mxu0 0.0
    %249 = vmatpush1.xpose.msra.mxu0 0.0
    %250 = vmatprep.subr.mxu0 0.0
    %251 = vmatpush1.xpose.msra.mxu0 0.0
    %252 = vmatprep.mubr.f32.mxu0 0.0
    %253 = vmatmul.mubr.f32.gmra.mrb[0].mxu0 %v184
    %v254 = vpop.f32.mrb[0].mxu0
    %v255 = vadd.f32 0.0, %v254
    %v256 = vpop.f32.mrb[0].mxu0
    %257 = vdwg.mxu0
    %259 = vrot.lane.b32.xlu0 %v175, 96
    %v260 = vpop.permute.xlu0 %259
    %v262 = vsel %vm49, %v179, 0
    %v264 = vsel %vm49, %v260, 0
    %266 = vmatprep.subr.mxu0 0.0
    %267 = vmatpush1.xpose.msra.mxu0 %v264
    %268 = vmatprep.subr.mxu0 0.0
    %269 = vmatpush1.xpose.msra.mxu0 0.0
    %270 = vmatprep.subr.mxu0 0.0
    %271 = vmatpush1.xpose.msra.mxu0 0.0
    %272 = vmatprep.subr.mxu0 0.0
    %273 = vmatpush1.xpose.msra.mxu0 0.0
    %274 = vmatprep.subr.mxu0 0.0
    %275 = vmatpush1.xpose.msra.mxu0 0.0
    %276 = vmatprep.subr.mxu0 0.0
    %277 = vmatpush1.xpose.msra.mxu0 0.0
    %278 = vmatprep.subr.mxu0 0.0
    %279 = vmatpush1.xpose.msra.mxu0 0.0
    %280 = vmatprep.subr.mxu0 0.0
    %281 = vmatpush1.xpose.msra.mxu0 0.0
    %282 = vmatprep.subr.mxu0 0.0
    %283 = vmatpush1.xpose.msra.mxu0 0.0
    %284 = vmatprep.subr.mxu0 0.0
    %285 = vmatpush1.xpose.msra.mxu0 0.0
    %286 = vmatprep.subr.mxu0 0.0
    %287 = vmatpush1.xpose.msra.mxu0 0.0
    %288 = vmatprep.subr.mxu0 0.0
    %289 = vmatpush1.xpose.msra.mxu0 0.0
    %290 = vmatprep.subr.mxu0 0.0
    %291 = vmatpush1.xpose.msra.mxu0 0.0
    %292 = vmatprep.subr.mxu0 0.0
    %293 = vmatpush1.xpose.msra.mxu0 0.0
    %294 = vmatprep.subr.mxu0 0.0
    %295 = vmatpush1.xpose.msra.mxu0 0.0
    %296 = vmatprep.subr.mxu0 0.0
    %297 = vmatpush1.xpose.msra.mxu0 0.0
    %298 = vmatprep.subr.mxu0 0.0
    %299 = vmatpush1.xpose.msra.mxu0 0.0
    %300 = vmatprep.subr.mxu0 0.0
    %301 = vmatpush1.xpose.msra.mxu0 0.0
    %302 = vmatprep.subr.mxu0 0.0
    %303 = vmatpush1.xpose.msra.mxu0 0.0
    %304 = vmatprep.subr.mxu0 0.0
    %305 = vmatpush1.xpose.msra.mxu0 0.0
    %306 = vmatprep.subr.mxu0 0.0
    %307 = vmatpush1.xpose.msra.mxu0 0.0
    %308 = vmatprep.subr.mxu0 0.0
    %309 = vmatpush1.xpose.msra.mxu0 0.0
    %310 = vmatprep.subr.mxu0 0.0
    %311 = vmatpush1.xpose.msra.mxu0 0.0
    %312 = vmatprep.subr.mxu0 0.0
    %313 = vmatpush1.xpose.msra.mxu0 0.0
    %314 = vmatprep.subr.mxu0 0.0
    %315 = vmatpush1.xpose.msra.mxu0 0.0
    %316 = vmatprep.subr.mxu0 0.0
    %317 = vmatpush1.xpose.msra.mxu0 0.0
    %318 = vmatprep.subr.mxu0 0.0
    %319 = vmatpush1.xpose.msra.mxu0 0.0
    %320 = vmatprep.subr.mxu0 0.0
    %321 = vmatpush1.xpose.msra.mxu0 0.0
    %322 = vmatprep.subr.mxu0 0.0
    %323 = vmatpush1.xpose.msra.mxu0 0.0
    %324 = vmatprep.subr.mxu0 0.0
    %325 = vmatpush1.xpose.msra.mxu0 0.0
    %326 = vmatprep.subr.mxu0 0.0
    %327 = vmatpush1.xpose.msra.mxu0 0.0
    %328 = vmatprep.subr.mxu0 0.0
    %329 = vmatpush1.xpose.msra.mxu0 0.0
    %330 = vmatprep.mubr.f32.mxu0 0.0
    %331 = vmatmul.mubr.f32.gmra.mrb[0].mxu0 %v262
    %v332 = vpop.f32.mrb[0].mxu0
    %v333 = vadd.f32 0.0, %v332
    %v334 = vpop.f32.mrb[0].mxu0
    %335 = vdwg.mxu0
    %v336 = vmul.f32 %v255, 0.35355338
    %v337 = vmul.f32 %v333, 0.35355338
    %vm338 = vcmask 64512
    %v339 = vsel %vm338, %v336, -inf
    %340 = vmax.xlane.f32.xlu0 %v339
    %v341 = vpop.xlane.xlu0 %340
    %v342 = vsel %vm338, %v337, -inf
    %343 = vmax.xlane.f32.xlu0 %v342
    %v344 = vpop.xlane.xlu0 %343
    %v345 = vsub.f32 %v336, %v341
    %v346 = vsub.f32 %v337, %v344
    %v347 = vmul.f32 %v345, 1.442695
    %v348 = vpow.pop %v347
    %v349 = vmul.f32 %v346, 1.442695
    %v350 = vpow.pop %v349
    %v351 = vsel %vm338, %v348, 0.0
    %352 = vadd.xlane.f32.xlu0 %v351
    %v353 = vpop.xlane.xlu0 %352
    %v354 = vsel %vm338, %v350, 0.0
    %355 = vadd.xlane.f32.xlu0 %v354
    %v356 = vpop.xlane.xlu0 %355
    %v357 = vrcp.pop %v353
    %v358 = vrcp.pop %v356
    %v359 = vmul.f32 %v348, %v357
    %v360 = vmul.f32 %v350, %v358
    %362 = vrot.lane.b32.xlu0 %v32, 64
    %v363 = vpop.permute.xlu0 %362
    %v365 = vmul.f32 %v170, %v363
    %v366 = vmul.f32 %v175, %v363
    %v367 = vmul.f32 %v170, %v37
    %v368 = vmul.f32 %v175, %v37
    %v370 = vsel %vm49, %v367, 0
    %372 = vmatprep.subr.mxu0 0.0
    %373 = vmatpush1.xpose.msra.mxu0 %v186
    %374 = vmatprep.subr.mxu0 0.0
    %375 = vmatpush1.xpose.msra.mxu0 0.0
    %376 = vmatprep.subr.mxu0 0.0
    %377 = vmatpush1.xpose.msra.mxu0 0.0
    %378 = vmatprep.subr.mxu0 0.0
    %379 = vmatpush1.xpose.msra.mxu0 0.0
    %380 = vmatprep.subr.mxu0 0.0
    %381 = vmatpush1.xpose.msra.mxu0 0.0
    %382 = vmatprep.subr.mxu0 0.0
    %383 = vmatpush1.xpose.msra.mxu0 0.0
    %384 = vmatprep.subr.mxu0 0.0
    %385 = vmatpush1.xpose.msra.mxu0 0.0
    %386 = vmatprep.subr.mxu0 0.0
    %387 = vmatpush1.xpose.msra.mxu0 0.0
    %388 = vmatprep.subr.mxu0 0.0
    %389 = vmatpush1.xpose.msra.mxu0 0.0
    %390 = vmatprep.subr.mxu0 0.0
    %391 = vmatpush1.xpose.msra.mxu0 0.0
    %392 = vmatprep.subr.mxu0 0.0
    %393 = vmatpush1.xpose.msra.mxu0 0.0
    %394 = vmatprep.subr.mxu0 0.0
    %395 = vmatpush1.xpose.msra.mxu0 0.0
    %396 = vmatprep.subr.mxu0 0.0
    %397 = vmatpush1.xpose.msra.mxu0 0.0
    %398 = vmatprep.subr.mxu0 0.0
    %399 = vmatpush1.xpose.msra.mxu0 0.0
    %400 = vmatprep.subr.mxu0 0.0
    %401 = vmatpush1.xpose.msra.mxu0 0.0
    %402 = vmatprep.subr.mxu0 0.0
    %403 = vmatpush1.xpose.msra.mxu0 0.0
    %404 = vmatprep.subr.mxu0 0.0
    %405 = vmatpush1.xpose.msra.mxu0 0.0
    %406 = vmatprep.subr.mxu0 0.0
    %407 = vmatpush1.xpose.msra.mxu0 0.0
    %408 = vmatprep.subr.mxu0 0.0
    %409 = vmatpush1.xpose.msra.mxu0 0.0
    %410 = vmatprep.subr.mxu0 0.0
    %411 = vmatpush1.xpose.msra.mxu0 0.0
    %412 = vmatprep.subr.mxu0 0.0
    %413 = vmatpush1.xpose.msra.mxu0 0.0
    %414 = vmatprep.subr.mxu0 0.0
    %415 = vmatpush1.xpose.msra.mxu0 0.0
    %416 = vmatprep.subr.mxu0 0.0
    %417 = vmatpush1.xpose.msra.mxu0 0.0
    %418 = vmatprep.subr.mxu0 0.0
    %419 = vmatpush1.xpose.msra.mxu0 0.0
    %420 = vmatprep.subr.mxu0 0.0
    %421 = vmatpush1.xpose.msra.mxu0 0.0
    %422 = vmatprep.subr.mxu0 0.0
    %423 = vmatpush1.xpose.msra.mxu0 0.0
    %424 = vmatprep.subr.mxu0 0.0
    %425 = vmatpush1.xpose.msra.mxu0 0.0
    %426 = vmatprep.subr.mxu0 0.0
    %427 = vmatpush1.xpose.msra.mxu0 0.0
    %428 = vmatprep.subr.mxu0 0.0
    %429 = vmatpush1.xpose.msra.mxu0 0.0
    %430 = vmatprep.subr.mxu0 0.0
    %431 = vmatpush1.xpose.msra.mxu0 0.0
    %432 = vmatprep.subr.mxu0 0.0
    %433 = vmatpush1.xpose.msra.mxu0 0.0
    %434 = vmatprep.subr.mxu0 0.0
    %435 = vmatpush1.xpose.msra.mxu0 0.0
    %436 = vmatprep.mubr.f32.mxu0 0.0
    %437 = vmatmul.mubr.f32.gmra.mrb[0].mxu0 %v370
    %v438 = vpop.f32.mrb[0].mxu0
    %v439 = vadd.f32 0.0, %v438
    %v440 = vpop.f32.mrb[0].mxu0
    %441 = vdwg.mxu0
    %v443 = vsel %vm49, %v368, 0
    %445 = vmatprep.subr.mxu0 0.0
    %446 = vmatpush1.xpose.msra.mxu0 %v264
    %447 = vmatprep.subr.mxu0 0.0
    %448 = vmatpush1.xpose.msra.mxu0 0.0
    %449 = vmatprep.subr.mxu0 0.0
    %450 = vmatpush1.xpose.msra.mxu0 0.0
    %451 = vmatprep.subr.mxu0 0.0
    %452 = vmatpush1.xpose.msra.mxu0 0.0
    %453 = vmatprep.subr.mxu0 0.0
    %454 = vmatpush1.xpose.msra.mxu0 0.0
    %455 = vmatprep.subr.mxu0 0.0
    %456 = vmatpush1.xpose.msra.mxu0 0.0
    %457 = vmatprep.subr.mxu0 0.0
    %458 = vmatpush1.xpose.msra.mxu0 0.0
    %459 = vmatprep.subr.mxu0 0.0
    %460 = vmatpush1.xpose.msra.mxu0 0.0
    %461 = vmatprep.subr.mxu0 0.0
    %462 = vmatpush1.xpose.msra.mxu0 0.0
    %463 = vmatprep.subr.mxu0 0.0
    %464 = vmatpush1.xpose.msra.mxu0 0.0
    %465 = vmatprep.subr.mxu0 0.0
    %466 = vmatpush1.xpose.msra.mxu0 0.0
    %467 = vmatprep.subr.mxu0 0.0
    %468 = vmatpush1.xpose.msra.mxu0 0.0
    %469 = vmatprep.subr.mxu0 0.0
    %470 = vmatpush1.xpose.msra.mxu0 0.0
    %471 = vmatprep.subr.mxu0 0.0
    %472 = vmatpush1.xpose.msra.mxu0 0.0
    %473 = vmatprep.subr.mxu0 0.0
    %474 = vmatpush1.xpose.msra.mxu0 0.0
    %475 = vmatprep.subr.mxu0 0.0
    %476 = vmatpush1.xpose.msra.mxu0 0.0
    %477 = vmatprep.subr.mxu0 0.0
    %478 = vmatpush1.xpose.msra.mxu0 0.0
    %479 = vmatprep.subr.mxu0 0.0
    %480 = vmatpush1.xpose.msra.mxu0 0.0
    %481 = vmatprep.subr.mxu0 0.0
    %482 = vmatpush1.xpose.msra.mxu0 0.0
    %483 = vmatprep.subr.mxu0 0.0
    %484 = vmatpush1.xpose.msra.mxu0 0.0
    %485 = vmatprep.subr.mxu0 0.0
    %486 = vmatpush1.xpose.msra.mxu0 0.0
    %487 = vmatprep.subr.mxu0 0.0
    %488 = vmatpush1.xpose.msra.mxu0 0.0
    %489 = vmatprep.subr.mxu0 0.0
    %490 = vmatpush1.xpose.msra.mxu0 0.0
    %491 = vmatprep.subr.mxu0 0.0
    %492 = vmatpush1.xpose.msra.mxu0 0.0
    %493 = vmatprep.subr.mxu0 0.0
    %494 = vmatpush1.xpose.msra.mxu0 0.0
    %495 = vmatprep.subr.mxu0 0.0
    %496 = vmatpush1.xpose.msra.mxu0 0.0
    %497 = vmatprep.subr.mxu0 0.0
    %498 = vmatpush1.xpose.msra.mxu0 0.0
    %499 = vmatprep.subr.mxu0 0.0
    %500 = vmatpush1.xpose.msra.mxu0 0.0
    %501 = vmatprep.subr.mxu0 0.0
    %502 = vmatpush1.xpose.msra.mxu0 0.0
    %503 = vmatprep.subr.mxu0 0.0
    %504 = vmatpush1.xpose.msra.mxu0 0.0
    %505 = vmatprep.subr.mxu0 0.0
    %506 = vmatpush1.xpose.msra.mxu0 0.0
    %507 = vmatprep.subr.mxu0 0.0
    %508 = vmatpush1.xpose.msra.mxu0 0.0
    %509 = vmatprep.mubr.f32.mxu0 0.0
    %510 = vmatmul.mubr.f32.gmra.mrb[0].mxu0 %v443
    %v511 = vpop.f32.mrb[0].mxu0
    %v512 = vadd.f32 0.0, %v511
    %v513 = vpop.f32.mrb[0].mxu0
    %514 = vdwg.mxu0
    %v515 = vmul.f32 %v439, 0.35355338
    %v516 = vmul.f32 %v512, 0.35355338
    %v517 = vsel %vm338, %v515, -inf
    %518 = vmax.xlane.f32.xlu0 %v517
    %v519 = vpop.xlane.xlu0 %518
    %v520 = vsel %vm338, %v516, -inf
    %521 = vmax.xlane.f32.xlu0 %v520
    %v522 = vpop.xlane.xlu0 %521
    %v523 = vsub.f32 %v515, %v519
    %v524 = vsub.f32 %v516, %v522
    %v525 = vmul.f32 %v523, 1.442695
    %v526 = vpow.pop %v525
    %v527 = vmul.f32 %v524, 1.442695
    %v528 = vpow.pop %v527
    %v529 = vsel %vm338, %v526, 0.0
    %530 = vadd.xlane.f32.xlu0 %v529
    %v531 = vpop.xlane.xlu0 %530
    %v532 = vsel %vm338, %v528, 0.0
    %533 = vadd.xlane.f32.xlu0 %v532
    %v534 = vpop.xlane.xlu0 %533
    %v535 = vrcp.pop %v531
    %v536 = vrcp.pop %v534
    %v537 = vmul.f32 %v526, %v535
    %v538 = vmul.f32 %v528, %v536
    %540 = vrot.lane.b32.xlu0 %v37, 64
    %v541 = vpop.permute.xlu0 %540
    %v543 = vmul.f32 %v170, %v541
    %v544 = vmul.f32 %v175, %v541
    %546 = vrot.lane.b32.xlu0 %v543, 64
    %v547 = vpop.permute.xlu0 %546
    %v550 = vsel %vm338, %v537, 0
    %552 = vmatprep.subr.mxu0 0.0
    %553 = vmatpush1.msra.mxu0 %v547
    %554 = vmatprep.subr.mxu0 0.0
    %555 = vmatpush1.msra.mxu0 0.0
    %556 = vmatprep.subr.mxu0 0.0
    %557 = vmatpush1.msra.mxu0 0.0
    %558 = vmatprep.subr.mxu0 0.0
    %559 = vmatpush1.msra.mxu0 0.0
    %560 = vmatprep.subr.mxu0 0.0
    %561 = vmatpush1.msra.mxu0 0.0
    %562 = vmatprep.subr.mxu0 0.0
    %563 = vmatpush1.msra.mxu0 0.0
    %564 = vmatprep.subr.mxu0 0.0
    %565 = vmatpush1.msra.mxu0 0.0
    %566 = vmatprep.subr.mxu0 0.0
    %567 = vmatpush1.msra.mxu0 0.0
    %568 = vmatprep.subr.mxu0 0.0
    %569 = vmatpush1.msra.mxu0 0.0
    %570 = vmatprep.subr.mxu0 0.0
    %571 = vmatpush1.msra.mxu0 0.0
    %572 = vmatprep.subr.mxu0 0.0
    %573 = vmatpush1.msra.mxu0 0.0
    %574 = vmatprep.subr.mxu0 0.0
    %575 = vmatpush1.msra.mxu0 0.0
    %576 = vmatprep.subr.mxu0 0.0
    %577 = vmatpush1.msra.mxu0 0.0
    %578 = vmatprep.subr.mxu0 0.0
    %579 = vmatpush1.msra.mxu0 0.0
    %580 = vmatprep.subr.mxu0 0.0
    %581 = vmatpush1.msra.mxu0 0.0
    %582 = vmatprep.subr.mxu0 0.0
    %583 = vmatpush1.msra.mxu0 0.0
    %584 = vmatprep.subr.mxu0 0.0
    %585 = vmatpush1.msra.mxu0 0.0
    %586 = vmatprep.subr.mxu0 0.0
    %587 = vmatpush1.msra.mxu0 0.0
    %588 = vmatprep.subr.mxu0 0.0
    %589 = vmatpush1.msra.mxu0 0.0
    %590 = vmatprep.subr.mxu0 0.0
    %591 = vmatpush1.msra.mxu0 0.0
    %592 = vmatprep.subr.mxu0 0.0
    %593 = vmatpush1.msra.mxu0 0.0
    %594 = vmatprep.subr.mxu0 0.0
    %595 = vmatpush1.msra.mxu0 0.0
    %596 = vmatprep.subr.mxu0 0.0
    %597 = vmatpush1.msra.mxu0 0.0
    %598 = vmatprep.subr.mxu0 0.0
    %599 = vmatpush1.msra.mxu0 0.0
    %600 = vmatprep.subr.mxu0 0.0
    %601 = vmatpush1.msra.mxu0 0.0
    %602 = vmatprep.subr.mxu0 0.0
    %603 = vmatpush1.msra.mxu0 0.0
    %604 = vmatprep.subr.mxu0 0.0
    %605 = vmatpush1.msra.mxu0 0.0
    %606 = vmatprep.subr.mxu0 0.0
    %607 = vmatpush1.msra.mxu0 0.0
    %608 = vmatprep.subr.mxu0 0.0
    %609 = vmatpush1.msra.mxu0 0.0
    %610 = vmatprep.subr.mxu0 0.0
    %611 = vmatpush1.msra.mxu0 0.0
    %612 = vmatprep.subr.mxu0 0.0
    %613 = vmatpush1.msra.mxu0 0.0
    %614 = vmatprep.subr.mxu0 0.0
    %615 = vmatpush1.msra.mxu0 0.0
    %616 = vmatprep.mubr.f32.mxu0 0.0
    %617 = vmatmul.mubr.f32.gmra.mrb[0].mxu0 %v550
    %v618 = vpop.f32.mrb[0].mxu0
    %v619 = vadd.f32 0.0, %v618
    %v620 = vpop.f32.mrb[0].mxu0
    %621 = vdwg.mxu0
    %623 = vrot.lane.b32.xlu0 %v544, 64
    %v624 = vpop.permute.xlu0 %623
    %v627 = vsel %vm338, %v538, 0
    %629 = vmatprep.subr.mxu0 0.0
    %630 = vmatpush1.msra.mxu0 %v624
    %631 = vmatprep.subr.mxu0 0.0
    %632 = vmatpush1.msra.mxu0 0.0
    %633 = vmatprep.subr.mxu0 0.0
    %634 = vmatpush1.msra.mxu0 0.0
    %635 = vmatprep.subr.mxu0 0.0
    %636 = vmatpush1.msra.mxu0 0.0
    %637 = vmatprep.subr.mxu0 0.0
    %638 = vmatpush1.msra.mxu0 0.0
    %639 = vmatprep.subr.mxu0 0.0
    %640 = vmatpush1.msra.mxu0 0.0
    %641 = vmatprep.subr.mxu0 0.0
    %642 = vmatpush1.msra.mxu0 0.0
    %643 = vmatprep.subr.mxu0 0.0
    %644 = vmatpush1.msra.mxu0 0.0
    %645 = vmatprep.subr.mxu0 0.0
    %646 = vmatpush1.msra.mxu0 0.0
    %647 = vmatprep.subr.mxu0 0.0
    %648 = vmatpush1.msra.mxu0 0.0
    %649 = vmatprep.subr.mxu0 0.0
    %650 = vmatpush1.msra.mxu0 0.0
    %651 = vmatprep.subr.mxu0 0.0
    %652 = vmatpush1.msra.mxu0 0.0
    %653 = vmatprep.subr.mxu0 0.0
    %654 = vmatpush1.msra.mxu0 0.0
    %655 = vmatprep.subr.mxu0 0.0
    %656 = vmatpush1.msra.mxu0 0.0
    %657 = vmatprep.subr.mxu0 0.0
    %658 = vmatpush1.msra.mxu0 0.0
    %659 = vmatprep.subr.mxu0 0.0
    %660 = vmatpush1.msra.mxu0 0.0
    %661 = vmatprep.subr.mxu0 0.0
    %662 = vmatpush1.msra.mxu0 0.0
    %663 = vmatprep.subr.mxu0 0.0
    %664 = vmatpush1.msra.mxu0 0.0
    %665 = vmatprep.subr.mxu0 0.0
    %666 = vmatpush1.msra.mxu0 0.0
    %667 = vmatprep.subr.mxu0 0.0
    %668 = vmatpush1.msra.mxu0 0.0
    %669 = vmatprep.subr.mxu0 0.0
    %670 = vmatpush1.msra.mxu0 0.0
    %671 = vmatprep.subr.mxu0 0.0
    %672 = vmatpush1.msra.mxu0 0.0
    %673 = vmatprep.subr.mxu0 0.0
    %674 = vmatpush1.msra.mxu0 0.0
    %675 = vmatprep.subr.mxu0 0.0
    %676 = vmatpush1.msra.mxu0 0.0
    %677 = vmatprep.subr.mxu0 0.0
    %678 = vmatpush1.msra.mxu0 0.0
    %679 = vmatprep.subr.mxu0 0.0
    %680 = vmatpush1.msra.mxu0 0.0
    %681 = vmatprep.subr.mxu0 0.0
    %682 = vmatpush1.msra.mxu0 0.0
    %683 = vmatprep.subr.mxu0 0.0
    %684 = vmatpush1.msra.mxu0 0.0
    %685 = vmatprep.subr.mxu0 0.0
    %686 = vmatpush1.msra.mxu0 0.0
    %687 = vmatprep.subr.mxu0 0.0
    %688 = vmatpush1.msra.mxu0 0.0
    %689 = vmatprep.subr.mxu0 0.0
    %690 = vmatpush1.msra.mxu0 0.0
    %691 = vmatprep.subr.mxu0 0.0
    %692 = vmatpush1.msra.mxu0 0.0
    %693 = vmatprep.mubr.f32.mxu0 0.0
    %694 = vmatmul.mubr.f32.gmra.mrb[0].mxu0 %v627
    %v695 = vpop.f32.mrb[0].mxu0
    %v696 = vadd.f32 0.0, %v695
    %v697 = vpop.f32.mrb[0].mxu0
    %698 = vdwg.mxu0
    %700 = vrot.lane.b32.xlu0 %v365, 64
    %v701 = vpop.permute.xlu0 %700
    %v704 = vsel %vm338, %v359, 0
    %706 = vmatprep.subr.mxu0 0.0
    %707 = vmatpush1.msra.mxu0 %v701
    %708 = vmatprep.subr.mxu0 0.0
    %709 = vmatpush1.msra.mxu0 0.0
    %710 = vmatprep.subr.mxu0 0.0
    %711 = vmatpush1.msra.mxu0 0.0
    %712 = vmatprep.subr.mxu0 0.0
    %713 = vmatpush1.msra.mxu0 0.0
    %714 = vmatprep.subr.mxu0 0.0
    %715 = vmatpush1.msra.mxu0 0.0
    %716 = vmatprep.subr.mxu0 0.0
    %717 = vmatpush1.msra.mxu0 0.0
    %718 = vmatprep.subr.mxu0 0.0
    %719 = vmatpush1.msra.mxu0 0.0
    %720 = vmatprep.subr.mxu0 0.0
    %721 = vmatpush1.msra.mxu0 0.0
    %722 = vmatprep.subr.mxu0 0.0
    %723 = vmatpush1.msra.mxu0 0.0
    %724 = vmatprep.subr.mxu0 0.0
    %725 = vmatpush1.msra.mxu0 0.0
    %726 = vmatprep.subr.mxu0 0.0
    %727 = vmatpush1.msra.mxu0 0.0
    %728 = vmatprep.subr.mxu0 0.0
    %729 = vmatpush1.msra.mxu0 0.0
    %730 = vmatprep.subr.mxu0 0.0
    %731 = vmatpush1.msra.mxu0 0.0
    %732 = vmatprep.subr.mxu0 0.0
    %733 = vmatpush1.msra.mxu0 0.0
    %734 = vmatprep.subr.mxu0 0.0
    %735 = vmatpush1.msra.mxu0 0.0
    %736 = vmatprep.subr.mxu0 0.0
    %737 = vmatpush1.msra.mxu0 0.0
    %738 = vmatprep.subr.mxu0 0.0
    %739 = vmatpush1.msra.mxu0 0.0
    %740 = vmatprep.subr.mxu0 0.0
    %741 = vmatpush1.msra.mxu0 0.0
    %742 = vmatprep.subr.mxu0 0.0
    %743 = vmatpush1.msra.mxu0 0.0
    %744 = vmatprep.subr.mxu0 0.0
    %745 = vmatpush1.msra.mxu0 0.0
    %746 = vmatprep.subr.mxu0 0.0
    %747 = vmatpush1.msra.mxu0 0.0
    %748 = vmatprep.subr.mxu0 0.0
    %749 = vmatpush1.msra.mxu0 0.0
    %750 = vmatprep.subr.mxu0 0.0
    %751 = vmatpush1.msra.mxu0 0.0
    %752 = vmatprep.subr.mxu0 0.0
    %753 = vmatpush1.msra.mxu0 0.0
    %754 = vmatprep.subr.mxu0 0.0
    %755 = vmatpush1.msra.mxu0 0.0
    %756 = vmatprep.subr.mxu0 0.0
    %757 = vmatpush1.msra.mxu0 0.0
    %758 = vmatprep.subr.mxu0 0.0
    %759 = vmatpush1.msra.mxu0 0.0
    %760 = vmatprep.subr.mxu0 0.0
    %761 = vmatpush1.msra.mxu0 0.0
    %762 = vmatprep.subr.mxu0 0.0
    %763 = vmatpush1.msra.mxu0 0.0
    %764 = vmatprep.subr.mxu0 0.0
    %765 = vmatpush1.msra.mxu0 0.0
    %766 = vmatprep.subr.mxu0 0.0
    %767 = vmatpush1.msra.mxu0 0.0
    %768 = vmatprep.subr.mxu0 0.0
    %769 = vmatpush1.msra.mxu0 0.0
    %770 = vmatprep.mubr.f32.mxu0 0.0
    %771 = vmatmul.mubr.f32.gmra.mrb[0].mxu0 %v704
    %v772 = vpop.f32.mrb[0].mxu0
    %v773 = vadd.f32 %v619, %v772
    %v774 = vpop.f32.mrb[0].mxu0
    %775 = vdwg.mxu0
    %777 = vrot.lane.b32.xlu0 %v366, 64
    %v778 = vpop.permute.xlu0 %777
    %v781 = vsel %vm338, %v360, 0
    %783 = vmatprep.subr.mxu0 0.0
    %784 = vmatpush1.msra.mxu0 %v778
    %785 = vmatprep.subr.mxu0 0.0
    %786 = vmatpush1.msra.mxu0 0.0
    %787 = vmatprep.subr.mxu0 0.0
    %788 = vmatpush1.msra.mxu0 0.0
    %789 = vmatprep.subr.mxu0 0.0
    %790 = vmatpush1.msra.mxu0 0.0
    %791 = vmatprep.subr.mxu0 0.0
    %792 = vmatpush1.msra.mxu0 0.0
    %793 = vmatprep.subr.mxu0 0.0
    %794 = vmatpush1.msra.mxu0 0.0
    %795 = vmatprep.subr.mxu0 0.0
    %796 = vmatpush1.msra.mxu0 0.0
    %797 = vmatprep.subr.mxu0 0.0
    %798 = vmatpush1.msra.mxu0 0.0
    %799 = vmatprep.subr.mxu0 0.0
    %800 = vmatpush1.msra.mxu0 0.0
    %801 = vmatprep.subr.mxu0 0.0
    %802 = vmatpush1.msra.mxu0 0.0
    %803 = vmatprep.subr.mxu0 0.0
    %804 = vmatpush1.msra.mxu0 0.0
    %805 = vmatprep.subr.mxu0 0.0
    %806 = vmatpush1.msra.mxu0 0.0
    %807 = vmatprep.subr.mxu0 0.0
    %808 = vmatpush1.msra.mxu0 0.0
    %809 = vmatprep.subr.mxu0 0.0
    %810 = vmatpush1.msra.mxu0 0.0
    %811 = vmatprep.subr.mxu0 0.0
    %812 = vmatpush1.msra.mxu0 0.0
    %813 = vmatprep.subr.mxu0 0.0
    %814 = vmatpush1.msra.mxu0 0.0
    %815 = vmatprep.subr.mxu0 0.0
    %816 = vmatpush1.msra.mxu0 0.0
    %817 = vmatprep.subr.mxu0 0.0
    %818 = vmatpush1.msra.mxu0 0.0
    %819 = vmatprep.subr.mxu0 0.0
    %820 = vmatpush1.msra.mxu0 0.0
    %821 = vmatprep.subr.mxu0 0.0
    %822 = vmatpush1.msra.mxu0 0.0
    %823 = vmatprep.subr.mxu0 0.0
    %824 = vmatpush1.msra.mxu0 0.0
    %825 = vmatprep.subr.mxu0 0.0
    %826 = vmatpush1.msra.mxu0 0.0
    %827 = vmatprep.subr.mxu0 0.0
    %828 = vmatpush1.msra.mxu0 0.0
    %829 = vmatprep.subr.mxu0 0.0
    %830 = vmatpush1.msra.mxu0 0.0
    %831 = vmatprep.subr.mxu0 0.0
    %832 = vmatpush1.msra.mxu0 0.0
    %833 = vmatprep.subr.mxu0 0.0
    %834 = vmatpush1.msra.mxu0 0.0
    %835 = vmatprep.subr.mxu0 0.0
    %836 = vmatpush1.msra.mxu0 0.0
    %837 = vmatprep.subr.mxu0 0.0
    %838 = vmatpush1.msra.mxu0 0.0
    %839 = vmatprep.subr.mxu0 0.0
    %840 = vmatpush1.msra.mxu0 0.0
    %841 = vmatprep.subr.mxu0 0.0
    %842 = vmatpush1.msra.mxu0 0.0
    %843 = vmatprep.subr.mxu0 0.0
    %844 = vmatpush1.msra.mxu0 0.0
    %845 = vmatprep.subr.mxu0 0.0
    %846 = vmatpush1.msra.mxu0 0.0
    %847 = vmatprep.mubr.f32.mxu0 0.0
    %848 = vmatmul.mubr.f32.gmra.mrb[0].mxu0 %v781
    %v849 = vpop.f32.mrb[0].mxu0
    %v850 = vadd.f32 %v696, %v849
    %v851 = vpop.f32.mrb[0].mxu0
    %852 = vdwg.mxu0
    %v853 = vmul.f32 %v170, %v42
    %v854 = vmul.f32 %v175, %v42
    %v856 = vsel %vm49, %v853, 0
    %858 = vmatprep.subr.mxu0 0.0
    %859 = vmatpush1.xpose.msra.mxu0 %v186
    %860 = vmatprep.subr.mxu0 0.0
    %861 = vmatpush1.xpose.msra.mxu0 0.0
    %862 = vmatprep.subr.mxu0 0.0
    %863 = vmatpush1.xpose.msra.mxu0 0.0
    %864 = vmatprep.subr.mxu0 0.0
    %865 = vmatpush1.xpose.msra.mxu0 0.0
    %866 = vmatprep.subr.mxu0 0.0
    %867 = vmatpush1.xpose.msra.mxu0 0.0
    %868 = vmatprep.subr.mxu0 0.0
    %869 = vmatpush1.xpose.msra.mxu0 0.0
    %870 = vmatprep.subr.mxu0 0.0
    %871 = vmatpush1.xpose.msra.mxu0 0.0
    %872 = vmatprep.subr.mxu0 0.0
    %873 = vmatpush1.xpose.msra.mxu0 0.0
    %874 = vmatprep.subr.mxu0 0.0
    %875 = vmatpush1.xpose.msra.mxu0 0.0
    %876 = vmatprep.subr.mxu0 0.0
    %877 = vmatpush1.xpose.msra.mxu0 0.0
    %878 = vmatprep.subr.mxu0 0.0
    %879 = vmatpush1.xpose.msra.mxu0 0.0
    %880 = vmatprep.subr.mxu0 0.0
    %881 = vmatpush1.xpose.msra.mxu0 0.0
    %882 = vmatprep.subr.mxu0 0.0
    %883 = vmatpush1.xpose.msra.mxu0 0.0
    %884 = vmatprep.subr.mxu0 0.0
    %885 = vmatpush1.xpose.msra.mxu0 0.0
    %886 = vmatprep.subr.mxu0 0.0
    %887 = vmatpush1.xpose.msra.mxu0 0.0
    %888 = vmatprep.subr.mxu0 0.0
    %889 = vmatpush1.xpose.msra.mxu0 0.0
    %890 = vmatprep.subr.mxu0 0.0
    %891 = vmatpush1.xpose.msra.mxu0 0.0
    %892 = vmatprep.subr.mxu0 0.0
    %893 = vmatpush1.xpose.msra.mxu0 0.0
    %894 = vmatprep.subr.mxu0 0.0
    %895 = vmatpush1.xpose.msra.mxu0 0.0
    %896 = vmatprep.subr.mxu0 0.0
    %897 = vmatpush1.xpose.msra.mxu0 0.0
    %898 = vmatprep.subr.mxu0 0.0
    %899 = vmatpush1.xpose.msra.mxu0 0.0
    %900 = vmatprep.subr.mxu0 0.0
    %901 = vmatpush1.xpose.msra.mxu0 0.0
    %902 = vmatprep.subr.mxu0 0.0
    %903 = vmatpush1.xpose.msra.mxu0 0.0
    %904 = vmatprep.subr.mxu0 0.0
    %905 = vmatpush1.xpose.msra.mxu0 0.0
    %906 = vmatprep.subr.mxu0 0.0
    %907 = vmatpush1.xpose.msra.mxu0 0.0
    %908 = vmatprep.subr.mxu0 0.0
    %909 = vmatpush1.xpose.msra.mxu0 0.0
    %910 = vmatprep.subr.mxu0 0.0
    %911 = vmatpush1.xpose.msra.mxu0 0.0
    %912 = vmatprep.subr.mxu0 0.0
    %913 = vmatpush1.xpose.msra.mxu0 0.0
    %914 = vmatprep.subr.mxu0 0.0
    %915 = vmatpush1.xpose.msra.mxu0 0.0
    %916 = vmatprep.subr.mxu0 0.0
    %917 = vmatpush1.xpose.msra.mxu0 0.0
    %918 = vmatprep.subr.mxu0 0.0
    %919 = vmatpush1.xpose.msra.mxu0 0.0
    %920 = vmatprep.subr.mxu0 0.0
    %921 = vmatpush1.xpose.msra.mxu0 0.0
    %922 = vmatprep.mubr.f32.mxu0 0.0
    %923 = vmatmul.mubr.f32.gmra.mrb[0].mxu0 %v856
    %v924 = vpop.f32.mrb[0].mxu0
    %v925 = vadd.f32 0.0, %v924
    %v926 = vpop.f32.mrb[0].mxu0
    %927 = vdwg.mxu0
    %v929 = vsel %vm49, %v854, 0
    %931 = vmatprep.subr.mxu0 0.0
    %932 = vmatpush1.xpose.msra.mxu0 %v264
    %933 = vmatprep.subr.mxu0 0.0
    %934 = vmatpush1.xpose.msra.mxu0 0.0
    %935 = vmatprep.subr.mxu0 0.0
    %936 = vmatpush1.xpose.msra.mxu0 0.0
    %937 = vmatprep.subr.mxu0 0.0
    %938 = vmatpush1.xpose.msra.mxu0 0.0
    %939 = vmatprep.subr.mxu0 0.0
    %940 = vmatpush1.xpose.msra.mxu0 0.0
    %941 = vmatprep.subr.mxu0 0.0
    %942 = vmatpush1.xpose.msra.mxu0 0.0
    %943 = vmatprep.subr.mxu0 0.0
    %944 = vmatpush1.xpose.msra.mxu0 0.0
    %945 = vmatprep.subr.mxu0 0.0
    %946 = vmatpush1.xpose.msra.mxu0 0.0
    %947 = vmatprep.subr.mxu0 0.0
    %948 = vmatpush1.xpose.msra.mxu0 0.0
    %949 = vmatprep.subr.mxu0 0.0
    %950 = vmatpush1.xpose.msra.mxu0 0.0
    %951 = vmatprep.subr.mxu0 0.0
    %952 = vmatpush1.xpose.msra.mxu0 0.0
    %953 = vmatprep.subr.mxu0 0.0
    %954 = vmatpush1.xpose.msra.mxu0 0.0
    %955 = vmatprep.subr.mxu0 0.0
    %956 = vmatpush1.xpose.msra.mxu0 0.0
    %957 = vmatprep.subr.mxu0 0.0
    %958 = vmatpush1.xpose.msra.mxu0 0.0
    %959 = vmatprep.subr.mxu0 0.0
    %960 = vmatpush1.xpose.msra.mxu0 0.0
    %961 = vmatprep.subr.mxu0 0.0
    %962 = vmatpush1.xpose.msra.mxu0 0.0
    %963 = vmatprep.subr.mxu0 0.0
    %964 = vmatpush1.xpose.msra.mxu0 0.0
    %965 = vmatprep.subr.mxu0 0.0
    %966 = vmatpush1.xpose.msra.mxu0 0.0
    %967 = vmatprep.subr.mxu0 0.0
    %968 = vmatpush1.xpose.msra.mxu0 0.0
    %969 = vmatprep.subr.mxu0 0.0
    %970 = vmatpush1.xpose.msra.mxu0 0.0
    %971 = vmatprep.subr.mxu0 0.0
    %972 = vmatpush1.xpose.msra.mxu0 0.0
    %973 = vmatprep.subr.mxu0 0.0
    %974 = vmatpush1.xpose.msra.mxu0 0.0
    %975 = vmatprep.subr.mxu0 0.0
    %976 = vmatpush1.xpose.msra.mxu0 0.0
    %977 = vmatprep.subr.mxu0 0.0
    %978 = vmatpush1.xpose.msra.mxu0 0.0
    %979 = vmatprep.subr.mxu0 0.0
    %980 = vmatpush1.xpose.msra.mxu0 0.0
    %981 = vmatprep.subr.mxu0 0.0
    %982 = vmatpush1.xpose.msra.mxu0 0.0
    %983 = vmatprep.subr.mxu0 0.0
    %984 = vmatpush1.xpose.msra.mxu0 0.0
    %985 = vmatprep.subr.mxu0 0.0
    %986 = vmatpush1.xpose.msra.mxu0 0.0
    %987 = vmatprep.subr.mxu0 0.0
    %988 = vmatpush1.xpose.msra.mxu0 0.0
    %989 = vmatprep.subr.mxu0 0.0
    %990 = vmatpush1.xpose.msra.mxu0 0.0
    %991 = vmatprep.subr.mxu0 0.0
    %992 = vmatpush1.xpose.msra.mxu0 0.0
    %993 = vmatprep.subr.mxu0 0.0
    %994 = vmatpush1.xpose.msra.mxu0 0.0
    %995 = vmatprep.mubr.f32.mxu0 0.0
    %996 = vmatmul.mubr.f32.gmra.mrb[0].mxu0 %v929
    %v997 = vpop.f32.mrb[0].mxu0
    %v998 = vadd.f32 0.0, %v997
    %v999 = vpop.f32.mrb[0].mxu0
    %1000 = vdwg.mxu0
    %v1001 = vmul.f32 %v925, 0.35355338
    %v1002 = vmul.f32 %v998, 0.35355338
    %v1003 = vsel %vm338, %v1001, -inf
    %1004 = vmax.xlane.f32.xlu0 %v1003
    %v1005 = vpop.xlane.xlu0 %1004
    %v1006 = vsel %vm338, %v1002, -inf
    %1007 = vmax.xlane.f32.xlu0 %v1006
    %v1008 = vpop.xlane.xlu0 %1007
    %v1009 = vsub.f32 %v1001, %v1005
    %v1010 = vsub.f32 %v1002, %v1008
    %v1011 = vmul.f32 %v1009, 1.442695
    %v1012 = vpow.pop %v1011
    %v1013 = vmul.f32 %v1010, 1.442695
    %v1014 = vpow.pop %v1013
    %v1015 = vsel %vm338, %v1012, 0.0
    %1016 = vadd.xlane.f32.xlu0 %v1015
    %v1017 = vpop.xlane.xlu0 %1016
    %v1018 = vsel %vm338, %v1014, 0.0
    %1019 = vadd.xlane.f32.xlu0 %v1018
    %v1020 = vpop.xlane.xlu0 %1019
    %v1021 = vrcp.pop %v1017
    %v1022 = vrcp.pop %v1020
    %v1023 = vmul.f32 %v1012, %v1021
    %v1024 = vmul.f32 %v1014, %v1022
    %1026 = vrot.lane.b32.xlu0 %v42, 64
    %v1027 = vpop.permute.xlu0 %1026
    %v1029 = vmul.f32 %v170, %v1027
    %v1030 = vmul.f32 %v175, %v1027
    %1032 = vrot.lane.b32.xlu0 %v1029, 64
    %v1033 = vpop.permute.xlu0 %1032
    %v1036 = vsel %vm338, %v1023, 0
    %1038 = vmatprep.subr.mxu0 0.0
    %1039 = vmatpush1.msra.mxu0 %v1033
    %1040 = vmatprep.subr.mxu0 0.0
    %1041 = vmatpush1.msra.mxu0 0.0
    %1042 = vmatprep.subr.mxu0 0.0
    %1043 = vmatpush1.msra.mxu0 0.0
    %1044 = vmatprep.subr.mxu0 0.0
    %1045 = vmatpush1.msra.mxu0 0.0
    %1046 = vmatprep.subr.mxu0 0.0
    %1047 = vmatpush1.msra.mxu0 0.0
    %1048 = vmatprep.subr.mxu0 0.0
    %1049 = vmatpush1.msra.mxu0 0.0
    %1050 = vmatprep.subr.mxu0 0.0
    %1051 = vmatpush1.msra.mxu0 0.0
    %1052 = vmatprep.subr.mxu0 0.0
    %1053 = vmatpush1.msra.mxu0 0.0
    %1054 = vmatprep.subr.mxu0 0.0
    %1055 = vmatpush1.msra.mxu0 0.0
    %1056 = vmatprep.subr.mxu0 0.0
    %1057 = vmatpush1.msra.mxu0 0.0
    %1058 = vmatprep.subr.mxu0 0.0
    %1059 = vmatpush1.msra.mxu0 0.0
    %1060 = vmatprep.subr.mxu0 0.0
    %1061 = vmatpush1.msra.mxu0 0.0
    %1062 = vmatprep.subr.mxu0 0.0
    %1063 = vmatpush1.msra.mxu0 0.0
    %1064 = vmatprep.subr.mxu0 0.0
    %1065 = vmatpush1.msra.mxu0 0.0
    %1066 = vmatprep.subr.mxu0 0.0
    %1067 = vmatpush1.msra.mxu0 0.0
    %1068 = vmatprep.subr.mxu0 0.0
    %1069 = vmatpush1.msra.mxu0 0.0
    %1070 = vmatprep.subr.mxu0 0.0
    %1071 = vmatpush1.msra.mxu0 0.0
    %1072 = vmatprep.subr.mxu0 0.0
    %1073 = vmatpush1.msra.mxu0 0.0
    %1074 = vmatprep.subr.mxu0 0.0
    %1075 = vmatpush1.msra.mxu0 0.0
    %1076 = vmatprep.subr.mxu0 0.0
    %1077 = vmatpush1.msra.mxu0 0.0
    %1078 = vmatprep.subr.mxu0 0.0
    %1079 = vmatpush1.msra.mxu0 0.0
    %1080 = vmatprep.subr.mxu0 0.0
    %1081 = vmatpush1.msra.mxu0 0.0
    %1082 = vmatprep.subr.mxu0 0.0
    %1083 = vmatpush1.msra.mxu0 0.0
    %1084 = vmatprep.subr.mxu0 0.0
    %1085 = vmatpush1.msra.mxu0 0.0
    %1086 = vmatprep.subr.mxu0 0.0
    %1087 = vmatpush1.msra.mxu0 0.0
    %1088 = vmatprep.subr.mxu0 0.0
    %1089 = vmatpush1.msra.mxu0 0.0
    %1090 = vmatprep.subr.mxu0 0.0
    %1091 = vmatpush1.msra.mxu0 0.0
    %1092 = vmatprep.subr.mxu0 0.0
    %1093 = vmatpush1.msra.mxu0 0.0
    %1094 = vmatprep.subr.mxu0 0.0
    %1095 = vmatpush1.msra.mxu0 0.0
    %1096 = vmatprep.subr.mxu0 0.0
    %1097 = vmatpush1.msra.mxu0 0.0
    %1098 = vmatprep.subr.mxu0 0.0
    %1099 = vmatpush1.msra.mxu0 0.0
    %1100 = vmatprep.subr.mxu0 0.0
    %1101 = vmatpush1.msra.mxu0 0.0
    %1102 = vmatprep.mubr.f32.mxu0 0.0
    %1103 = vmatmul.mubr.f32.gmra.mrb[0].mxu0 %v1036
    %v1104 = vpop.f32.mrb[0].mxu0
    %v1105 = vadd.f32 0.0, %v1104
    %v1106 = vpop.f32.mrb[0].mxu0
    %1107 = vdwg.mxu0
    %1109 = vrot.lane.b32.xlu0 %v1030, 64
    %v1110 = vpop.permute.xlu0 %1109
    %v1113 = vsel %vm338, %v1024, 0
    %1115 = vmatprep.subr.mxu0 0.0
    %1116 = vmatpush1.msra.mxu0 %v1110
    %1117 = vmatprep.subr.mxu0 0.0
    %1118 = vmatpush1.msra.mxu0 0.0
    %1119 = vmatprep.subr.mxu0 0.0
    %1120 = vmatpush1.msra.mxu0 0.0
    %1121 = vmatprep.subr.mxu0 0.0
    %1122 = vmatpush1.msra.mxu0 0.0
    %1123 = vmatprep.subr.mxu0 0.0
    %1124 = vmatpush1.msra.mxu0 0.0
    %1125 = vmatprep.subr.mxu0 0.0
    %1126 = vmatpush1.msra.mxu0 0.0
    %1127 = vmatprep.subr.mxu0 0.0
    %1128 = vmatpush1.msra.mxu0 0.0
    %1129 = vmatprep.subr.mxu0 0.0
    %1130 = vmatpush1.msra.mxu0 0.0
    %1131 = vmatprep.subr.mxu0 0.0
    %1132 = vmatpush1.msra.mxu0 0.0
    %1133 = vmatprep.subr.mxu0 0.0
    %1134 = vmatpush1.msra.mxu0 0.0
    %1135 = vmatprep.subr.mxu0 0.0
    %1136 = vmatpush1.msra.mxu0 0.0
    %1137 = vmatprep.subr.mxu0 0.0
    %1138 = vmatpush1.msra.mxu0 0.0
    %1139 = vmatprep.subr.mxu0 0.0
    %1140 = vmatpush1.msra.mxu0 0.0
    %1141 = vmatprep.subr.mxu0 0.0
    %1142 = vmatpush1.msra.mxu0 0.0
    %1143 = vmatprep.subr.mxu0 0.0
    %1144 = vmatpush1.msra.mxu0 0.0
    %1145 = vmatprep.subr.mxu0 0.0
    %1146 = vmatpush1.msra.mxu0 0.0
    %1147 = vmatprep.subr.mxu0 0.0
    %1148 = vmatpush1.msra.mxu0 0.0
    %1149 = vmatprep.subr.mxu0 0.0
    %1150 = vmatpush1.msra.mxu0 0.0
    %1151 = vmatprep.subr.mxu0 0.0
    %1152 = vmatpush1.msra.mxu0 0.0
    %1153 = vmatprep.subr.mxu0 0.0
    %1154 = vmatpush1.msra.mxu0 0.0
    %1155 = vmatprep.subr.mxu0 0.0
    %1156 = vmatpush1.msra.mxu0 0.0
    %1157 = vmatprep.subr.mxu0 0.0
    %1158 = vmatpush1.msra.mxu0 0.0
    %1159 = vmatprep.subr.mxu0 0.0
    %1160 = vmatpush1.msra.mxu0 0.0
    %1161 = vmatprep.subr.mxu0 0.0
    %1162 = vmatpush1.msra.mxu0 0.0
    %1163 = vmatprep.subr.mxu0 0.0
    %1164 = vmatpush1.msra.mxu0 0.0
    %1165 = vmatprep.subr.mxu0 0.0
    %1166 = vmatpush1.msra.mxu0 0.0
    %1167 = vmatprep.subr.mxu0 0.0
    %1168 = vmatpush1.msra.mxu0 0.0
    %1169 = vmatprep.subr.mxu0 0.0
    %1170 = vmatpush1.msra.mxu0 0.0
    %1171 = vmatprep.subr.mxu0 0.0
    %1172 = vmatpush1.msra.mxu0 0.0
    %1173 = vmatprep.subr.mxu0 0.0
    %1174 = vmatpush1.msra.mxu0 0.0
    %1175 = vmatprep.subr.mxu0 0.0
    %1176 = vmatpush1.msra.mxu0 0.0
    %1177 = vmatprep.subr.mxu0 0.0
    %1178 = vmatpush1.msra.mxu0 0.0
    %1179 = vmatprep.mubr.f32.mxu0 0.0
    %1180 = vmatmul.mubr.f32.gmra.mrb[0].mxu0 %v1113
    %v1181 = vpop.f32.mrb[0].mxu0
    %v1182 = vadd.f32 0.0, %v1181
    %v1183 = vpop.f32.mrb[0].mxu0
    %1184 = vdwg.mxu0
    %v1185 = vadd.f32 %v773, %v1105
    %v1186 = vadd.f32 %v850, %v1182
    %v1187 = vmul.f32 %v170, %v47
    %v1188 = vmul.f32 %v175, %v47
    %v1190 = vsel %vm49, %v1187, 0
    %1192 = vmatprep.subr.mxu0 0.0
    %1193 = vmatpush1.xpose.msra.mxu0 %v186
    %1194 = vmatprep.subr.mxu0 0.0
    %1195 = vmatpush1.xpose.msra.mxu0 0.0
    %1196 = vmatprep.subr.mxu0 0.0
    %1197 = vmatpush1.xpose.msra.mxu0 0.0
    %1198 = vmatprep.subr.mxu0 0.0
    %1199 = vmatpush1.xpose.msra.mxu0 0.0
    %1200 = vmatprep.subr.mxu0 0.0
    %1201 = vmatpush1.xpose.msra.mxu0 0.0
    %1202 = vmatprep.subr.mxu0 0.0
    %1203 = vmatpush1.xpose.msra.mxu0 0.0
    %1204 = vmatprep.subr.mxu0 0.0
    %1205 = vmatpush1.xpose.msra.mxu0 0.0
    %1206 = vmatprep.subr.mxu0 0.0
    %1207 = vmatpush1.xpose.msra.mxu0 0.0
    %1208 = vmatprep.subr.mxu0 0.0
    %1209 = vmatpush1.xpose.msra.mxu0 0.0
    %1210 = vmatprep.subr.mxu0 0.0
    %1211 = vmatpush1.xpose.msra.mxu0 0.0
    %1212 = vmatprep.subr.mxu0 0.0
    %1213 = vmatpush1.xpose.msra.mxu0 0.0
    %1214 = vmatprep.subr.mxu0 0.0
    %1215 = vmatpush1.xpose.msra.mxu0 0.0
    %1216 = vmatprep.subr.mxu0 0.0
    %1217 = vmatpush1.xpose.msra.mxu0 0.0
    %1218 = vmatprep.subr.mxu0 0.0
    %1219 = vmatpush1.xpose.msra.mxu0 0.0
    %1220 = vmatprep.subr.mxu0 0.0
    %1221 = vmatpush1.xpose.msra.mxu0 0.0
    %1222 = vmatprep.subr.mxu0 0.0
    %1223 = vmatpush1.xpose.msra.mxu0 0.0
    %1224 = vmatprep.subr.mxu0 0.0
    %1225 = vmatpush1.xpose.msra.mxu0 0.0
    %1226 = vmatprep.subr.mxu0 0.0
    %1227 = vmatpush1.xpose.msra.mxu0 0.0
    %1228 = vmatprep.subr.mxu0 0.0
    %1229 = vmatpush1.xpose.msra.mxu0 0.0
    %1230 = vmatprep.subr.mxu0 0.0
    %1231 = vmatpush1.xpose.msra.mxu0 0.0
    %1232 = vmatprep.subr.mxu0 0.0
    %1233 = vmatpush1.xpose.msra.mxu0 0.0
    %1234 = vmatprep.subr.mxu0 0.0
    %1235 = vmatpush1.xpose.msra.mxu0 0.0
    %1236 = vmatprep.subr.mxu0 0.0
    %1237 = vmatpush1.xpose.msra.mxu0 0.0
    %1238 = vmatprep.subr.mxu0 0.0
    %1239 = vmatpush1.xpose.msra.mxu0 0.0
    %1240 = vmatprep.subr.mxu0 0.0
    %1241 = vmatpush1.xpose.msra.mxu0 0.0
    %1242 = vmatprep.subr.mxu0 0.0
    %1243 = vmatpush1.xpose.msra.mxu0 0.0
    %1244 = vmatprep.subr.mxu0 0.0
    %1245 = vmatpush1.xpose.msra.mxu0 0.0
    %1246 = vmatprep.subr.mxu0 0.0
    %1247 = vmatpush1.xpose.msra.mxu0 0.0
    %1248 = vmatprep.subr.mxu0 0.0
    %1249 = vmatpush1.xpose.msra.mxu0 0.0
    %1250 = vmatprep.subr.mxu0 0.0
    %1251 = vmatpush1.xpose.msra.mxu0 0.0
    %1252 = vmatprep.subr.mxu0 0.0
    %1253 = vmatpush1.xpose.msra.mxu0 0.0
    %1254 = vmatprep.subr.mxu0 0.0
    %1255 = vmatpush1.xpose.msra.mxu0 0.0
    %1256 = vmatprep.mubr.f32.mxu0 0.0
    %1257 = vmatmul.mubr.f32.gmra.mrb[0].mxu0 %v1190
    %v1258 = vpop.f32.mrb[0].mxu0
    %v1259 = vadd.f32 0.0, %v1258
    %v1260 = vpop.f32.mrb[0].mxu0
    %1261 = vdwg.mxu0
    %v1263 = vsel %vm49, %v1188, 0
    %1265 = vmatprep.subr.mxu0 0.0
    %1266 = vmatpush1.xpose.msra.mxu0 %v264
    %1267 = vmatprep.subr.mxu0 0.0
    %1268 = vmatpush1.xpose.msra.mxu0 0.0
    %1269 = vmatprep.subr.mxu0 0.0
    %1270 = vmatpush1.xpose.msra.mxu0 0.0
    %1271 = vmatprep.subr.mxu0 0.0
    %1272 = vmatpush1.xpose.msra.mxu0 0.0
    %1273 = vmatprep.subr.mxu0 0.0
    %1274 = vmatpush1.xpose.msra.mxu0 0.0
    %1275 = vmatprep.subr.mxu0 0.0
    %1276 = vmatpush1.xpose.msra.mxu0 0.0
    %1277 = vmatprep.subr.mxu0 0.0
    %1278 = vmatpush1.xpose.msra.mxu0 0.0
    %1279 = vmatprep.subr.mxu0 0.0
    %1280 = vmatpush1.xpose.msra.mxu0 0.0
    %1281 = vmatprep.subr.mxu0 0.0
    %1282 = vmatpush1.xpose.msra.mxu0 0.0
    %1283 = vmatprep.subr.mxu0 0.0
    %1284 = vmatpush1.xpose.msra.mxu0 0.0
    %1285 = vmatprep.subr.mxu0 0.0
    %1286 = vmatpush1.xpose.msra.mxu0 0.0
    %1287 = vmatprep.subr.mxu0 0.0
    %1288 = vmatpush1.xpose.msra.mxu0 0.0
    %1289 = vmatprep.subr.mxu0 0.0
    %1290 = vmatpush1.xpose.msra.mxu0 0.0
    %1291 = vmatprep.subr.mxu0 0.0
    %1292 = vmatpush1.xpose.msra.mxu0 0.0
    %1293 = vmatprep.subr.mxu0 0.0
    %1294 = vmatpush1.xpose.msra.mxu0 0.0
    %1295 = vmatprep.subr.mxu0 0.0
    %1296 = vmatpush1.xpose.msra.mxu0 0.0
    %1297 = vmatprep.subr.mxu0 0.0
    %1298 = vmatpush1.xpose.msra.mxu0 0.0
    %1299 = vmatprep.subr.mxu0 0.0
    %1300 = vmatpush1.xpose.msra.mxu0 0.0
    %1301 = vmatprep.subr.mxu0 0.0
    %1302 = vmatpush1.xpose.msra.mxu0 0.0
    %1303 = vmatprep.subr.mxu0 0.0
    %1304 = vmatpush1.xpose.msra.mxu0 0.0
    %1305 = vmatprep.subr.mxu0 0.0
    %1306 = vmatpush1.xpose.msra.mxu0 0.0
    %1307 = vmatprep.subr.mxu0 0.0
    %1308 = vmatpush1.xpose.msra.mxu0 0.0
    %1309 = vmatprep.subr.mxu0 0.0
    %1310 = vmatpush1.xpose.msra.mxu0 0.0
    %1311 = vmatprep.subr.mxu0 0.0
    %1312 = vmatpush1.xpose.msra.mxu0 0.0
    %1313 = vmatprep.subr.mxu0 0.0
    %1314 = vmatpush1.xpose.msra.mxu0 0.0
    %1315 = vmatprep.subr.mxu0 0.0
    %1316 = vmatpush1.xpose.msra.mxu0 0.0
    %1317 = vmatprep.subr.mxu0 0.0
    %1318 = vmatpush1.xpose.msra.mxu0 0.0
    %1319 = vmatprep.subr.mxu0 0.0
    %1320 = vmatpush1.xpose.msra.mxu0 0.0
    %1321 = vmatprep.subr.mxu0 0.0
    %1322 = vmatpush1.xpose.msra.mxu0 0.0
    %1323 = vmatprep.subr.mxu0 0.0
    %1324 = vmatpush1.xpose.msra.mxu0 0.0
    %1325 = vmatprep.subr.mxu0 0.0
    %1326 = vmatpush1.xpose.msra.mxu0 0.0
    %1327 = vmatprep.subr.mxu0 0.0
    %1328 = vmatpush1.xpose.msra.mxu0 0.0
    %1329 = vmatprep.mubr.f32.mxu0 0.0
    %1330 = vmatmul.mubr.f32.gmra.mrb[0].mxu0 %v1263
    %v1331 = vpop.f32.mrb[0].mxu0
    %v1332 = vadd.f32 0.0, %v1331
    %v1333 = vpop.f32.mrb[0].mxu0
    %1334 = vdwg.mxu0
    %v1335 = vmul.f32 %v1259, 0.35355338
    %v1336 = vmul.f32 %v1332, 0.35355338
    %v1337 = vsel %vm338, %v1335, -inf
    %1338 = vmax.xlane.f32.xlu0 %v1337
    %v1339 = vpop.xlane.xlu0 %1338
    %v1340 = vsel %vm338, %v1336, -inf
    %1341 = vmax.xlane.f32.xlu0 %v1340
    %v1342 = vpop.xlane.xlu0 %1341
    %v1343 = vsub.f32 %v1335, %v1339
    %v1344 = vsub.f32 %v1336, %v1342
    %v1345 = vmul.f32 %v1343, 1.442695
    %v1346 = vpow.pop %v1345
    %v1347 = vmul.f32 %v1344, 1.442695
    %v1348 = vpow.pop %v1347
    %v1349 = vsel %vm338, %v1346, 0.0
    %1350 = vadd.xlane.f32.xlu0 %v1349
    %v1351 = vpop.xlane.xlu0 %1350
    %v1352 = vsel %vm338, %v1348, 0.0
    %1353 = vadd.xlane.f32.xlu0 %v1352
    %v1354 = vpop.xlane.xlu0 %1353
    %v1355 = vrcp.pop %v1351
    %v1356 = vrcp.pop %v1354
    %v1357 = vmul.f32 %v1346, %v1355
    %v1358 = vmul.f32 %v1348, %v1356
    %1360 = vrot.lane.b32.xlu0 %v47, 64
    %v1361 = vpop.permute.xlu0 %1360
    %v1363 = vmul.f32 %v170, %v1361
    %v1364 = vmul.f32 %v175, %v1361
    %1366 = vrot.lane.b32.xlu0 %v1363, 64
    %v1367 = vpop.permute.xlu0 %1366
    %v1370 = vsel %vm338, %v1357, 0
    %1372 = vmatprep.subr.mxu0 0.0
    %1373 = vmatpush1.msra.mxu0 %v1367
    %1374 = vmatprep.subr.mxu0 0.0
    %1375 = vmatpush1.msra.mxu0 0.0
    %1376 = vmatprep.subr.mxu0 0.0
    %1377 = vmatpush1.msra.mxu0 0.0
    %1378 = vmatprep.subr.mxu0 0.0
    %1379 = vmatpush1.msra.mxu0 0.0
    %1380 = vmatprep.subr.mxu0 0.0
    %1381 = vmatpush1.msra.mxu0 0.0
    %1382 = vmatprep.subr.mxu0 0.0
    %1383 = vmatpush1.msra.mxu0 0.0
    %1384 = vmatprep.subr.mxu0 0.0
    %1385 = vmatpush1.msra.mxu0 0.0
    %1386 = vmatprep.subr.mxu0 0.0
    %1387 = vmatpush1.msra.mxu0 0.0
    %1388 = vmatprep.subr.mxu0 0.0
    %1389 = vmatpush1.msra.mxu0 0.0
    %1390 = vmatprep.subr.mxu0 0.0
    %1391 = vmatpush1.msra.mxu0 0.0
    %1392 = vmatprep.subr.mxu0 0.0
    %1393 = vmatpush1.msra.mxu0 0.0
    %1394 = vmatprep.subr.mxu0 0.0
    %1395 = vmatpush1.msra.mxu0 0.0
    %1396 = vmatprep.subr.mxu0 0.0
    %1397 = vmatpush1.msra.mxu0 0.0
    %1398 = vmatprep.subr.mxu0 0.0
    %1399 = vmatpush1.msra.mxu0 0.0
    %1400 = vmatprep.subr.mxu0 0.0
    %1401 = vmatpush1.msra.mxu0 0.0
    %1402 = vmatprep.subr.mxu0 0.0
    %1403 = vmatpush1.msra.mxu0 0.0
    %1404 = vmatprep.subr.mxu0 0.0
    %1405 = vmatpush1.msra.mxu0 0.0
    %1406 = vmatprep.subr.mxu0 0.0
    %1407 = vmatpush1.msra.mxu0 0.0
    %1408 = vmatprep.subr.mxu0 0.0
    %1409 = vmatpush1.msra.mxu0 0.0
    %1410 = vmatprep.subr.mxu0 0.0
    %1411 = vmatpush1.msra.mxu0 0.0
    %1412 = vmatprep.subr.mxu0 0.0
    %1413 = vmatpush1.msra.mxu0 0.0
    %1414 = vmatprep.subr.mxu0 0.0
    %1415 = vmatpush1.msra.mxu0 0.0
    %1416 = vmatprep.subr.mxu0 0.0
    %1417 = vmatpush1.msra.mxu0 0.0
    %1418 = vmatprep.subr.mxu0 0.0
    %1419 = vmatpush1.msra.mxu0 0.0
    %1420 = vmatprep.subr.mxu0 0.0
    %1421 = vmatpush1.msra.mxu0 0.0
    %1422 = vmatprep.subr.mxu0 0.0
    %1423 = vmatpush1.msra.mxu0 0.0
    %1424 = vmatprep.subr.mxu0 0.0
    %1425 = vmatpush1.msra.mxu0 0.0
    %1426 = vmatprep.subr.mxu0 0.0
    %1427 = vmatpush1.msra.mxu0 0.0
    %1428 = vmatprep.subr.mxu0 0.0
    %1429 = vmatpush1.msra.mxu0 0.0
    %1430 = vmatprep.subr.mxu0 0.0
    %1431 = vmatpush1.msra.mxu0 0.0
    %1432 = vmatprep.subr.mxu0 0.0
    %1433 = vmatpush1.msra.mxu0 0.0
    %1434 = vmatprep.subr.mxu0 0.0
    %1435 = vmatpush1.msra.mxu0 0.0
    %1436 = vmatprep.mubr.f32.mxu0 0.0
    %1437 = vmatmul.mubr.f32.gmra.mrb[0].mxu0 %v1370
    %v1438 = vpop.f32.mrb[0].mxu0
    %v1439 = vadd.f32 0.0, %v1438
    %v1440 = vpop.f32.mrb[0].mxu0
    %1441 = vdwg.mxu0
    %1443 = vrot.lane.b32.xlu0 %v1364, 64
    %v1444 = vpop.permute.xlu0 %1443
    %v1447 = vsel %vm338, %v1358, 0
    %1449 = vmatprep.subr.mxu0 0.0
    %1450 = vmatpush1.msra.mxu0 %v1444
    %1451 = vmatprep.subr.mxu0 0.0
    %1452 = vmatpush1.msra.mxu0 0.0
    %1453 = vmatprep.subr.mxu0 0.0
    %1454 = vmatpush1.msra.mxu0 0.0
    %1455 = vmatprep.subr.mxu0 0.0
    %1456 = vmatpush1.msra.mxu0 0.0
    %1457 = vmatprep.subr.mxu0 0.0
    %1458 = vmatpush1.msra.mxu0 0.0
    %1459 = vmatprep.subr.mxu0 0.0
    %1460 = vmatpush1.msra.mxu0 0.0
    %1461 = vmatprep.subr.mxu0 0.0
    %1462 = vmatpush1.msra.mxu0 0.0
    %1463 = vmatprep.subr.mxu0 0.0
    %1464 = vmatpush1.msra.mxu0 0.0
    %1465 = vmatprep.subr.mxu0 0.0
    %1466 = vmatpush1.msra.mxu0 0.0
    %1467 = vmatprep.subr.mxu0 0.0
    %1468 = vmatpush1.msra.mxu0 0.0
    %1469 = vmatprep.subr.mxu0 0.0
    %1470 = vmatpush1.msra.mxu0 0.0
    %1471 = vmatprep.subr.mxu0 0.0
    %1472 = vmatpush1.msra.mxu0 0.0
    %1473 = vmatprep.subr.mxu0 0.0
    %1474 = vmatpush1.msra.mxu0 0.0
    %1475 = vmatprep.subr.mxu0 0.0
    %1476 = vmatpush1.msra.mxu0 0.0
    %1477 = vmatprep.subr.mxu0 0.0
    %1478 = vmatpush1.msra.mxu0 0.0
    %1479 = vmatprep.subr.mxu0 0.0
    %1480 = vmatpush1.msra.mxu0 0.0
    %1481 = vmatprep.subr.mxu0 0.0
    %1482 = vmatpush1.msra.mxu0 0.0
    %1483 = vmatprep.subr.mxu0 0.0
    %1484 = vmatpush1.msra.mxu0 0.0
    %1485 = vmatprep.subr.mxu0 0.0
    %1486 = vmatpush1.msra.mxu0 0.0
    %1487 = vmatprep.subr.mxu0 0.0
    %1488 = vmatpush1.msra.mxu0 0.0
    %1489 = vmatprep.subr.mxu0 0.0
    %1490 = vmatpush1.msra.mxu0 0.0
    %1491 = vmatprep.subr.mxu0 0.0
    %1492 = vmatpush1.msra.mxu0 0.0
    %1493 = vmatprep.subr.mxu0 0.0
    %1494 = vmatpush1.msra.mxu0 0.0
    %1495 = vmatprep.subr.mxu0 0.0
    %1496 = vmatpush1.msra.mxu0 0.0
    %1497 = vmatprep.subr.mxu0 0.0
    %1498 = vmatpush1.msra.mxu0 0.0
    %1499 = vmatprep.subr.mxu0 0.0
    %1500 = vmatpush1.msra.mxu0 0.0
    %1501 = vmatprep.subr.mxu0 0.0
    %1502 = vmatpush1.msra.mxu0 0.0
    %1503 = vmatprep.subr.mxu0 0.0
    %1504 = vmatpush1.msra.mxu0 0.0
    %1505 = vmatprep.subr.mxu0 0.0
    %1506 = vmatpush1.msra.mxu0 0.0
    %1507 = vmatprep.subr.mxu0 0.0
    %1508 = vmatpush1.msra.mxu0 0.0
    %1509 = vmatprep.subr.mxu0 0.0
    %1510 = vmatpush1.msra.mxu0 0.0
    %1511 = vmatprep.subr.mxu0 0.0
    %1512 = vmatpush1.msra.mxu0 0.0
    %1513 = vmatprep.mubr.f32.mxu0 0.0
    %1514 = vmatmul.mubr.f32.gmra.mrb[0].mxu0 %v1447
    %v1515 = vpop.f32.mrb[0].mxu0
    %v1516 = vadd.f32 0.0, %v1515
    %v1517 = vpop.f32.mrb[0].mxu0
    %1518 = vdwg.mxu0
    %v1519 = vadd.f32 %v1185, %v1439
    %v1520 = vadd.f32 %v1186, %v1516
    %v1521 = vld [vmem:[%s2] sm:$0xff]
    %v1522 = vld [vmem:[%s2 + $0x8] sm:$0xff]
    %v1523 = vld [vmem:[%s2 + $0x10] sm:$0xff]
    %v1524 = vld [vmem:[%s2 + $0x18] sm:$0xff]
    %v1525 = vlaneseq
    %v1526 = vshrl.u32 %v1525, 7
    %v1527 = vsub.s32 3, %v1526
    %v1528 = vrot.slane %v48, %v1527
    %v1530 = vsel %vm49, %v1519, 0
    %v1533 = vsel %vm49, %v1520, 0
    %1535 = vmatprep.subr.mxu0 0.0
    %1536 = vmatpush1.msra.mxu0 %v1521
    %1537 = vmatprep.subr.mxu0 0.0
    %1538 = vmatpush1.msra.mxu0 %v1522
    %1539 = vmatprep.subr.mxu0 0.0
    %1540 = vmatpush1.msra.mxu0 %v1523
    %1541 = vmatprep.subr.mxu0 0.0
    %1542 = vmatpush1.msra.mxu0 %v1524
    %1543 = vmatprep.subr.mxu0 0.0
    %1544 = vmatpush1.msra.mxu0 0.0
    %1545 = vmatprep.subr.mxu0 0.0
    %1546 = vmatpush1.msra.mxu0 0.0
    %1547 = vmatprep.subr.mxu0 0.0
    %1548 = vmatpush1.msra.mxu0 0.0
    %1549 = vmatprep.subr.mxu0 0.0
    %1550 = vmatpush1.msra.mxu0 0.0
    %1551 = vmatprep.subr.mxu0 0.0
    %1552 = vmatpush1.msra.mxu0 0.0
    %1553 = vmatprep.subr.mxu0 0.0
    %1554 = vmatpush1.msra.mxu0 0.0
    %1555 = vmatprep.subr.mxu0 0.0
    %1556 = vmatpush1.msra.mxu0 0.0
    %1557 = vmatprep.subr.mxu0 0.0
    %1558 = vmatpush1.msra.mxu0 0.0
    %1559 = vmatprep.subr.mxu0 0.0
    %1560 = vmatpush1.msra.mxu0 0.0
    %1561 = vmatprep.subr.mxu0 0.0
    %1562 = vmatpush1.msra.mxu0 0.0
    %1563 = vmatprep.subr.mxu0 0.0
    %1564 = vmatpush1.msra.mxu0 0.0
    %1565 = vmatprep.subr.mxu0 0.0
    %1566 = vmatpush1.msra.mxu0 0.0
    %1567 = vmatprep.subr.mxu0 0.0
    %1568 = vmatpush1.msra.mxu0 0.0
    %1569 = vmatprep.subr.mxu0 0.0
    %1570 = vmatpush1.msra.mxu0 0.0
    %1571 = vmatprep.subr.mxu0 0.0
    %1572 = vmatpush1.msra.mxu0 0.0
    %1573 = vmatprep.subr.mxu0 0.0
    %1574 = vmatpush1.msra.mxu0 0.0
    %1575 = vmatprep.subr.mxu0 0.0
    %1576 = vmatpush1.msra.mxu0 0.0
    %1577 = vmatprep.subr.mxu0 0.0
    %1578 = vmatpush1.msra.mxu0 0.0
    %1579 = vmatprep.subr.mxu0 0.0
    %1580 = vmatpush1.msra.mxu0 0.0
    %1581 = vmatprep.subr.mxu0 0.0
    %1582 = vmatpush1.msra.mxu0 0.0
    %1583 = vmatprep.subr.mxu0 0.0
    %1584 = vmatpush1.msra.mxu0 0.0
    %1585 = vmatprep.subr.mxu0 0.0
    %1586 = vmatpush1.msra.mxu0 0.0
    %1587 = vmatprep.subr.mxu0 0.0
    %1588 = vmatpush1.msra.mxu0 0.0
    %1589 = vmatprep.subr.mxu0 0.0
    %1590 = vmatpush1.msra.mxu0 0.0
    %1591 = vmatprep.subr.mxu0 0.0
    %1592 = vmatpush1.msra.mxu0 0.0
    %1593 = vmatprep.subr.mxu0 0.0
    %1594 = vmatpush1.msra.mxu0 0.0
    %1595 = vmatprep.subr.mxu0 0.0
    %1596 = vmatpush1.msra.mxu0 0.0
    %1597 = vmatprep.subr.mxu0 0.0
    %1598 = vmatpush1.msra.mxu0 0.0
    %1599 = vmatprep.mubr.f32.mxu0 0.0
    %1600 = vmatmul.mubr.f32.gmra.mrb[0].mxu0 %v1530
    %v1601 = vpop.f32.mrb[0].mxu0
    %v1602 = vadd.f32 %v1528, %v1601
    %v1603 = vpop.f32.mrb[0].mxu0
    %1604 = vmatprep.mubr.f32.mxu0 0.0
    %1605 = vmatmul.mubr.f32.gmra.mrb[0].mxu0 %v1533
    %v1606 = vpop.f32.mrb[0].mxu0
    %v1607 = vadd.f32 %v1528, %v1606
    %v1608 = vpop.f32.mrb[0].mxu0
    %1609 = vdwg.mxu0
    %v1610 = vadd.f32 %v24, %v1602
    %v1611 = vadd.f32 %v25, %v1607
    %v1612 = vsel %vm49, %v1610, 0.0
    %1613 = vadd.xlane.f32.xlu0 %v1612
    %v1614 = vpop.xlane.xlu0 %1613
    %v1615 = vsel %vm49, %v1611, 0.0
    %1616 = vadd.xlane.f32.xlu0 %v1615
    %v1617 = vpop.xlane.xlu0 %1616
    %v1618 = vmul.f32 %v1614, %v56
    %v1619 = vmul.f32 %v1617, %v56
    %v1620 = vsub.f32 %v1610, %v1618
    %v1621 = vsub.f32 %v1611, %v1619
    %v1622 = vmul.f32 %v1620, %v1620
    %v1623 = vmul.f32 %v1621, %v1621
    %v1624 = vsel %vm49, %v1622, 0.0
    %1625 = vadd.xlane.f32.xlu0 %v1624
    %v1626 = vpop.xlane.xlu0 %1625
    %v1627 = vsel %vm49, %v1623, 0.0
    %1628 = vadd.xlane.f32.xlu0 %v1627
    %v1629 = vpop.xlane.xlu0 %1628
    %v1630 = vmul.f32 %v1626, %v56
    %v1631 = vmul.f32 %v1629, %v56
    %v1632 = vadd.f32 %v1630, 1e-05
    %v1633 = vadd.f32 %v1631, 1e-05
    %v1634 = vrsqrt.pop %v1632
    %v1635 = vrsqrt.pop %v1633
    %v1636 = vmul.f32 %v1620, %v1634
    %v1637 = vmul.f32 %v1621, %v1635
    %v1638 = vlaneseq
    %v1639 = vshrl.u32 %v1638, 7
    %v1640 = vsub.s32 4, %v1639
    %v1641 = vrot.slane %v48, %v1640
    %v1642 = vmul.f32 %v1636, %v1641
    %v1643 = vmul.f32 %v1637, %v1641
    %v1644 = vlaneseq
    %v1645 = vshrl.u32 %v1644, 7
    %v1646 = vsub.s32 5, %v1645
    %v1647 = vrot.slane %v48, %v1646
    %v1648 = vadd.f32 %v1642, %v1647
    %v1649 = vadd.f32 %v1643, %v1647
    %v1650 = vld [vmem:[%s3] sm:$0xff]
    %v1651 = vld [vmem:[%s3 + $0x8] sm:$0xff]
    %v1652 = vld [vmem:[%s3 + $0x10] sm:$0xff]
    %v1653 = vld [vmem:[%s3 + $0x18] sm:$0xff]
    %v1654 = vlaneseq
    %v1655 = vshrl.u32 %v1654, 7
    %v1656 = vsub.s32 6, %v1655
    %v1657 = vrot.slane %v48, %v1656
    %v1659 = vsel %vm49, %v1648, 0
    %v1662 = vsel %vm49, %v1649, 0
    %1664 = vmatprep.subr.mxu0 0.0
    %1665 = vmatpush1.msra.mxu0 %v1650
    %1666 = vmatprep.subr.mxu0 0.0
    %1667 = vmatpush1.msra.mxu0 %v1651
    %1668 = vmatprep.subr.mxu0 0.0
    %1669 = vmatpush1.msra.mxu0 %v1652
    %1670 = vmatprep.subr.mxu0 0.0
    %1671 = vmatpush1.msra.mxu0 %v1653
    %1672 = vmatprep.subr.mxu0 0.0
    %1673 = vmatpush1.msra.mxu0 0.0
    %1674 = vmatprep.subr.mxu0 0.0
    %1675 = vmatpush1.msra.mxu0 0.0
    %1676 = vmatprep.subr.mxu0 0.0
    %1677 = vmatpush1.msra.mxu0 0.0
    %1678 = vmatprep.subr.mxu0 0.0
    %1679 = vmatpush1.msra.mxu0 0.0
    %1680 = vmatprep.subr.mxu0 0.0
    %1681 = vmatpush1.msra.mxu0 0.0
    %1682 = vmatprep.subr.mxu0 0.0
    %1683 = vmatpush1.msra.mxu0 0.0
    %1684 = vmatprep.subr.mxu0 0.0
    %1685 = vmatpush1.msra.mxu0 0.0
    %1686 = vmatprep.subr.mxu0 0.0
    %1687 = vmatpush1.msra.mxu0 0.0
    %1688 = vmatprep.subr.mxu0 0.0
    %1689 = vmatpush1.msra.mxu0 0.0
    %1690 = vmatprep.subr.mxu0 0.0
    %1691 = vmatpush1.msra.mxu0 0.0
    %1692 = vmatprep.subr.mxu0 0.0
    %1693 = vmatpush1.msra.mxu0 0.0
    %1694 = vmatprep.subr.mxu0 0.0
    %1695 = vmatpush1.msra.mxu0 0.0
    %1696 = vmatprep.subr.mxu0 0.0
    %1697 = vmatpush1.msra.mxu0 0.0
    %1698 = vmatprep.subr.mxu0 0.0
    %1699 = vmatpush1.msra.mxu0 0.0
    %1700 = vmatprep.subr.mxu0 0.0
    %1701 = vmatpush1.msra.mxu0 0.0
    %1702 = vmatprep.subr.mxu0 0.0
    %1703 = vmatpush1.msra.mxu0 0.0
    %1704 = vmatprep.subr.mxu0 0.0
    %1705 = vmatpush1.msra.mxu0 0.0
    %1706 = vmatprep.subr.mxu0 0.0
    %1707 = vmatpush1.msra.mxu0 0.0
    %1708 = vmatprep.subr.mxu0 0.0
    %1709 = vmatpush1.msra.mxu0 0.0
    %1710 = vmatprep.subr.mxu0 0.0
    %1711 = vmatpush1.msra.mxu0 0.0
    %1712 = vmatprep.subr.mxu0 0.0
    %1713 = vmatpush1.msra.mxu0 0.0
    %1714 = vmatprep.subr.mxu0 0.0
    %1715 = vmatpush1.msra.mxu0 0.0
    %1716 = vmatprep.subr.mxu0 0.0
    %1717 = vmatpush1.msra.mxu0 0.0
    %1718 = vmatprep.subr.mxu0 0.0
    %1719 = vmatpush1.msra.mxu0 0.0
    %1720 = vmatprep.subr.mxu0 0.0
    %1721 = vmatpush1.msra.mxu0 0.0
    %1722 = vmatprep.subr.mxu0 0.0
    %1723 = vmatpush1.msra.mxu0 0.0
    %1724 = vmatprep.subr.mxu0 0.0
    %1725 = vmatpush1.msra.mxu0 0.0
    %1726 = vmatprep.subr.mxu0 0.0
    %1727 = vmatpush1.msra.mxu0 0.0
    %1728 = vmatprep.mubr.f32.mxu0 0.0
    %1729 = vmatmul.mubr.f32.gmra.mrb[0].mxu0 %v1659
    %v1730 = vpop.f32.mrb[0].mxu0
    %v1731 = vadd.f32 %v1657, %v1730
    %v1732 = vpop.f32.mrb[0].mxu0
    %1733 = vmatprep.mubr.f32.mxu0 0.0
    %1734 = vmatmul.mubr.f32.gmra.mrb[0].mxu0 %v1662
    %v1735 = vpop.f32.mrb[0].mxu0
    %v1736 = vadd.f32 %v1657, %v1735
    %v1737 = vpop.f32.mrb[0].mxu0
    %1738 = vdwg.mxu0
    %v1739 = vmax.f32 %v1731, 0.0
    %v1740 = vmax.f32 %v1736, 0.0
    %v1741 = vld [vmem:[%s4] sm:$0xff]
    %v1742 = vld [vmem:[%s4 + $0x8] sm:$0xff]
    %v1743 = vld [vmem:[%s4 + $0x10] sm:$0xff]
    %v1744 = vld [vmem:[%s4 + $0x18] sm:$0xff]
    %v1745 = vld [vmem:[%s4 + $0x20] sm:$0xff]
    %v1746 = vld [vmem:[%s4 + $0x28] sm:$0xff]
    %v1747 = vld [vmem:[%s4 + $0x30] sm:$0xff]
    %v1748 = vld [vmem:[%s4 + $0x38] sm:$0xff]
    %v1749 = vld [vmem:[%s4 + $0x40] sm:$0xff]
    %v1750 = vld [vmem:[%s4 + $0x48] sm:$0xff]
    %v1751 = vld [vmem:[%s4 + $0x50] sm:$0xff]
    %v1752 = vld [vmem:[%s4 + $0x58] sm:$0xff]
    %v1753 = vld [vmem:[%s4 + $0x60] sm:$0xff]
    %v1754 = vld [vmem:[%s4 + $0x68] sm:$0xff]
    %v1755 = vld [vmem:[%s4 + $0x70] sm:$0xff]
    %v1756 = vld [vmem:[%s4 + $0x78] sm:$0xff]
    %v1757 = vlaneseq
    %v1758 = vshrl.u32 %v1757, 7
    %v1759 = vsub.s32 7, %v1758
    %v1760 = vrot.slane %v48, %v1759
    %1761 = vmatprep.subr.mxu0 0.0
    %1762 = vmatpush1.msra.mxu0 %v1741
    %1763 = vmatprep.subr.mxu0 0.0
    %1764 = vmatpush1.msra.mxu0 %v1742
    %1765 = vmatprep.subr.mxu0 0.0
    %1766 = vmatpush1.msra.mxu0 %v1743
    %1767 = vmatprep.subr.mxu0 0.0
    %1768 = vmatpush1.msra.mxu0 %v1744
    %1769 = vmatprep.subr.mxu0 0.0
    %1770 = vmatpush1.msra.mxu0 %v1745
    %1771 = vmatprep.subr.mxu0 0.0
    %1772 = vmatpush1.msra.mxu0 %v1746
    %1773 = vmatprep.subr.mxu0 0.0
    %1774 = vmatpush1.msra.mxu0 %v1747
    %1775 = vmatprep.subr.mxu0 0.0
    %1776 = vmatpush1.msra.mxu0 %v1748
    %1777 = vmatprep.subr.mxu0 0.0
    %1778 = vmatpush1.msra.mxu0 %v1749
    %1779 = vmatprep.subr.mxu0 0.0
    %1780 = vmatpush1.msra.mxu0 %v1750
    %1781 = vmatprep.subr.mxu0 0.0
    %1782 = vmatpush1.msra.mxu0 %v1751
    %1783 = vmatprep.subr.mxu0 0.0
    %1784 = vmatpush1.msra.mxu0 %v1752
    %1785 = vmatprep.subr.mxu0 0.0
    %1786 = vmatpush1.msra.mxu0 %v1753
    %1787 = vmatprep.subr.mxu0 0.0
    %1788 = vmatpush1.msra.mxu0 %v1754
    %1789 = vmatprep.subr.mxu0 0.0
    %1790 = vmatpush1.msra.mxu0 %v1755
    %1791 = vmatprep.subr.mxu0 0.0
    %1792 = vmatpush1.msra.mxu0 %v1756
    %1793 = vmatprep.subr.mxu0 0.0
    %1794 = vmatpush1.msra.mxu0 0.0
    %1795 = vmatprep.subr.mxu0 0.0
    %1796 = vmatpush1.msra.mxu0 0.0
    %1797 = vmatprep.subr.mxu0 0.0
    %1798 = vmatpush1.msra.mxu0 0.0
    %1799 = vmatprep.subr.mxu0 0.0
    %1800 = vmatpush1.msra.mxu0 0.0
    %1801 = vmatprep.subr.mxu0 0.0
    %1802 = vmatpush1.msra.mxu0 0.0
    %1803 = vmatprep.subr.mxu0 0.0
    %1804 = vmatpush1.msra.mxu0 0.0
    %1805 = vmatprep.subr.mxu0 0.0
    %1806 = vmatpush1.msra.mxu0 0.0
    %1807 = vmatprep.subr.mxu0 0.0
    %1808 = vmatpush1.msra.mxu0 0.0
    %1809 = vmatprep.subr.mxu0 0.0
    %1810 = vmatpush1.msra.mxu0 0.0
    %1811 = vmatprep.subr.mxu0 0.0
    %1812 = vmatpush1.msra.mxu0 0.0
    %1813 = vmatprep.subr.mxu0 0.0
    %1814 = vmatpush1.msra.mxu0 0.0
    %1815 = vmatprep.subr.mxu0 0.0
    %1816 = vmatpush1.msra.mxu0 0.0
    %1817 = vmatprep.subr.mxu0 0.0
    %1818 = vmatpush1.msra.mxu0 0.0
    %1819 = vmatprep.subr.mxu0 0.0
    %1820 = vmatpush1.msra.mxu0 0.0
    %1821 = vmatprep.subr.mxu0 0.0
    %1822 = vmatpush1.msra.mxu0 0.0
    %1823 = vmatprep.subr.mxu0 0.0
    %1824 = vmatpush1.msra.mxu0 0.0
    %1825 = vmatprep.mubr.f32.mxu0 0.0
    %1826 = vmatmul.mubr.f32.gmra.mrb[0].mxu0 %v1739
    %v1827 = vpop.f32.mrb[0].mxu0
    %v1828 = vadd.f32 %v1760, %v1827
    %v1829 = vpop.f32.mrb[0].mxu0
    %1830 = vmatprep.mubr.f32.mxu0 0.0
    %1831 = vmatmul.mubr.f32.gmra.mrb[0].mxu0 %v1740
    %v1832 = vpop.f32.mrb[0].mxu0
    %v1833 = vadd.f32 %v1760, %v1832
    %v1834 = vpop.f32.mrb[0].mxu0
    %1835 = vdwg.mxu0
    %v1836 = vadd.f32 %v1610, %v1828
    %v1837 = vadd.f32 %v1611, %v1833
    %s1838 = scalar_lea.vmem %s5, 8
    %v1839 = vld [vmem:[%s1838] sm:$0xff]
    %v1840 = vsel %vm49, %v1836, 0.0
    %1841 = vadd.xlane.f32.xlu0 %v1840
    %v1842 = vpop.xlane.xlu0 %1841
    %v1843 = vsel %vm49, %v1837, 0.0
    %1844 = vadd.xlane.f32.xlu0 %v1843
    %v1845 = vpop.xlane.xlu0 %1844
    %v1846 = vmul.f32 %v1842, %v56
    %v1847 = vmul.f32 %v1845, %v56
    %v1848 = vsub.f32 %v1836, %v1846
    %v1849 = vsub.f32 %v1837, %v1847
    %v1850 = vmul.f32 %v1848, %v1848
    %v1851 = vmul.f32 %v1849, %v1849
    %v1852 = vsel %vm49, %v1850, 0.0
    %1853 = vadd.xlane.f32.xlu0 %v1852
    %v1854 = vpop.xlane.xlu0 %1853
    %v1855 = vsel %vm49, %v1851, 0.0
    %1856 = vadd.xlane.f32.xlu0 %v1855
    %v1857 = vpop.xlane.xlu0 %1856
    %v1858 = vmul.f32 %v1854, %v56
    %v1859 = vmul.f32 %v1857, %v56
    %v1860 = vadd.f32 %v1858, 1e-05
    %v1861 = vadd.f32 %v1859, 1e-05
    %v1862 = vrsqrt.pop %v1860
    %v1863 = vrsqrt.pop %v1861
    %v1864 = vmul.f32 %v1848, %v1862
    %v1865 = vmul.f32 %v1849, %v1863
    %v1866 = vlaneseq
    %v1867 = vshrl.u32 %v1866, 7
    %v1868 = vsub.s32 0, %v1867
    %v1869 = vrot.slane %v1839, %v1868
    %v1870 = vmul.f32 %v1864, %v1869
    %v1871 = vmul.f32 %v1865, %v1869
    %v1872 = vlaneseq
    %v1873 = vshrl.u32 %v1872, 7
    %v1874 = vsub.s32 1, %v1873
    %v1875 = vrot.slane %v1839, %v1874
    %v1876 = vadd.f32 %v1870, %v1875
    %v1877 = vadd.f32 %v1871, %v1875
    %s1878 = scalar_lea.vmem %s1, 32
    %v1879 = vld [vmem:[%s1878] sm:$0xff]
    %v1880 = vld [vmem:[%s1878 + $0x8] sm:$0xff]
    %v1881 = vld [vmem:[%s1878 + $0x10] sm:$0xff]
    %v1882 = vld [vmem:[%s1878 + $0x18] sm:$0xff]
    %v1883 = vlaneseq
    %v1884 = vshrl.u32 %v1883, 7
    %v1885 = vsub.s32 2, %v1884
    %v1886 = vrot.slane %v1839, %v1885
    %v1888 = vsel %vm49, %v1876, 0
    %v1891 = vsel %vm49, %v1877, 0
    %1893 = vmatprep.subr.mxu0 0.0
    %1894 = vmatpush1.msra.mxu0 %v1879
    %1895 = vmatprep.subr.mxu0 0.0
    %1896 = vmatpush1.msra.mxu0 %v1880
    %1897 = vmatprep.subr.mxu0 0.0
    %1898 = vmatpush1.msra.mxu0 %v1881
    %1899 = vmatprep.subr.mxu0 0.0
    %1900 = vmatpush1.msra.mxu0 %v1882
    %1901 = vmatprep.subr.mxu0 0.0
    %1902 = vmatpush1.msra.mxu0 0.0
    %1903 = vmatprep.subr.mxu0 0.0
    %1904 = vmatpush1.msra.mxu0 0.0
    %1905 = vmatprep.subr.mxu0 0.0
    %1906 = vmatpush1.msra.mxu0 0.0
    %1907 = vmatprep.subr.mxu0 0.0
    %1908 = vmatpush1.msra.mxu0 0.0
    %1909 = vmatprep.subr.mxu0 0.0
    %1910 = vmatpush1.msra.mxu0 0.0
    %1911 = vmatprep.subr.mxu0 0.0
    %1912 = vmatpush1.msra.mxu0 0.0
    %1913 = vmatprep.subr.mxu0 0.0
    %1914 = vmatpush1.msra.mxu0 0.0
    %1915 = vmatprep.subr.mxu0 0.0
    %1916 = vmatpush1.msra.mxu0 0.0
    %1917 = vmatprep.subr.mxu0 0.0
    %1918 = vmatpush1.msra.mxu0 0.0
    %1919 = vmatprep.subr.mxu0 0.0
    %1920 = vmatpush1.msra.mxu0 0.0
    %1921 = vmatprep.subr.mxu0 0.0
    %1922 = vmatpush1.msra.mxu0 0.0
    %1923 = vmatprep.subr.mxu0 0.0
    %1924 = vmatpush1.msra.mxu0 0.0
    %1925 = vmatprep.subr.mxu0 0.0
    %1926 = vmatpush1.msra.mxu0 0.0
    %1927 = vmatprep.subr.mxu0 0.0
    %1928 = vmatpush1.msra.mxu0 0.0
    %1929 = vmatprep.subr.mxu0 0.0
    %1930 = vmatpush1.msra.mxu0 0.0
    %1931 = vmatprep.subr.mxu0 0.0
    %1932 = vmatpush1.msra.mxu0 0.0
    %1933 = vmatprep.subr.mxu0 0.0
    %1934 = vmatpush1.msra.mxu0 0.0
    %1935 = vmatprep.subr.mxu0 0.0
    %1936 = vmatpush1.msra.mxu0 0.0
    %1937 = vmatprep.subr.mxu0 0.0
    %1938 = vmatpush1.msra.mxu0 0.0
    %1939 = vmatprep.subr.mxu0 0.0
    %1940 = vmatpush1.msra.mxu0 0.0
    %1941 = vmatprep.subr.mxu0 0.0
    %1942 = vmatpush1.msra.mxu0 0.0
    %1943 = vmatprep.subr.mxu0 0.0
    %1944 = vmatpush1.msra.mxu0 0.0
    %1945 = vmatprep.subr.mxu0 0.0
    %1946 = vmatpush1.msra.mxu0 0.0
    %1947 = vmatprep.subr.mxu0 0.0
    %1948 = vmatpush1.msra.mxu0 0.0
    %1949 = vmatprep.subr.mxu0 0.0
    %1950 = vmatpush1.msra.mxu0 0.0
    %1951 = vmatprep.subr.mxu0 0.0
    %1952 = vmatpush1.msra.mxu0 0.0
    %1953 = vmatprep.subr.mxu0 0.0
    %1954 = vmatpush1.msra.mxu0 0.0
    %1955 = vmatprep.subr.mxu0 0.0
    %1956 = vmatpush1.msra.mxu0 0.0
    %1957 = vmatprep.mubr.f32.mxu0 0.0
    %1958 = vmatmul.mubr.f32.gmra.mrb[0].mxu0 %v1888
    %v1959 = vpop.f32.mrb[0].mxu0
    %v1960 = vadd.f32 %v1886, %v1959
    %v1961 = vpop.f32.mrb[0].mxu0
    %1962 = vmatprep.mubr.f32.mxu0 0.0
    %1963 = vmatmul.mubr.f32.gmra.mrb[0].mxu0 %v1891
    %v1964 = vpop.f32.mrb[0].mxu0
    %v1965 = vadd.f32 %v1886, %v1964
    %v1966 = vpop.f32.mrb[0].mxu0
    %1967 = vdwg.mxu0
    %v1968 = vmul.f32 %v1960, %v32
    %v1969 = vmul.f32 %v1965, %v32
    %1971 = vrot.lane.b32.xlu0 %v1960, 96
    %v1972 = vpop.permute.xlu0 %1971
    %v1974 = vsel %vm49, %v1968, 0
    %v1976 = vsel %vm49, %v1972, 0
    %1978 = vmatprep.subr.mxu0 0.0
    %1979 = vmatpush1.xpose.msra.mxu0 %v1976
    %1980 = vmatprep.subr.mxu0 0.0
    %1981 = vmatpush1.xpose.msra.mxu0 0.0
    %1982 = vmatprep.subr.mxu0 0.0
    %1983 = vmatpush1.xpose.msra.mxu0 0.0
    %1984 = vmatprep.subr.mxu0 0.0
    %1985 = vmatpush1.xpose.msra.mxu0 0.0
    %1986 = vmatprep.subr.mxu0 0.0
    %1987 = vmatpush1.xpose.msra.mxu0 0.0
    %1988 = vmatprep.subr.mxu0 0.0
    %1989 = vmatpush1.xpose.msra.mxu0 0.0
    %1990 = vmatprep.subr.mxu0 0.0
    %1991 = vmatpush1.xpose.msra.mxu0 0.0
    %1992 = vmatprep.subr.mxu0 0.0
    %1993 = vmatpush1.xpose.msra.mxu0 0.0
    %1994 = vmatprep.subr.mxu0 0.0
    %1995 = vmatpush1.xpose.msra.mxu0 0.0
    %1996 = vmatprep.subr.mxu0 0.0
    %1997 = vmatpush1.xpose.msra.mxu0 0.0
    %1998 = vmatprep.subr.mxu0 0.0
    %1999 = vmatpush1.xpose.msra.mxu0 0.0
    %2000 = vmatprep.subr.mxu0 0.0
    %2001 = vmatpush1.xpose.msra.mxu0 0.0
    %2002 = vmatprep.subr.mxu0 0.0
    %2003 = vmatpush1.xpose.msra.mxu0 0.0
    %2004 = vmatprep.subr.mxu0 0.0
    %2005 = vmatpush1.xpose.msra.mxu0 0.0
    %2006 = vmatprep.subr.mxu0 0.0
    %2007 = vmatpush1.xpose.msra.mxu0 0.0
    %2008 = vmatprep.subr.mxu0 0.0
    %2009 = vmatpush1.xpose.msra.mxu0 0.0
    %2010 = vmatprep.subr.mxu0 0.0
    %2011 = vmatpush1.xpose.msra.mxu0 0.0
    %2012 = vmatprep.subr.mxu0 0.0
    %2013 = vmatpush1.xpose.msra.mxu0 0.0
    %2014 = vmatprep.subr.mxu0 0.0
    %2015 = vmatpush1.xpose.msra.mxu0 0.0
    %2016 = vmatprep.subr.mxu0 0.0
    %2017 = vmatpush1.xpose.msra.mxu0 0.0
    %2018 = vmatprep.subr.mxu0 0.0
    %2019 = vmatpush1.xpose.msra.mxu0 0.0
    %2020 = vmatprep.subr.mxu0 0.0
    %2021 = vmatpush1.xpose.msra.mxu0 0.0
    %2022 = vmatprep.subr.mxu0 0.0
    %2023 = vmatpush1.xpose.msra.mxu0 0.0
    %2024 = vmatprep.subr.mxu0 0.0
    %2025 = vmatpush1.xpose.msra.mxu0 0.0
    %2026 = vmatprep.subr.mxu0 0.0
    %2027 = vmatpush1.xpose.msra.mxu0 0.0
    %2028 = vmatprep.subr.mxu0 0.0
    %2029 = vmatpush1.xpose.msra.mxu0 0.0
    %2030 = vmatprep.subr.mxu0 0.0
    %2031 = vmatpush1.xpose.msra.mxu0 0.0
    %2032 = vmatprep.subr.mxu0 0.0
    %2033 = vmatpush1.xpose.msra.mxu0 0.0
    %2034 = vmatprep.subr.mxu0 0.0
    %2035 = vmatpush1.xpose.msra.mxu0 0.0
    %2036 = vmatprep.subr.mxu0 0.0
    %2037 = vmatpush1.xpose.msra.mxu0 0.0
    %2038 = vmatprep.subr.mxu0 0.0
    %2039 = vmatpush1.xpose.msra.mxu0 0.0
    %2040 = vmatprep.subr.mxu0 0.0
    %2041 = vmatpush1.xpose.msra.mxu0 0.0
    %2042 = vmatprep.mubr.f32.mxu0 0.0
    %2043 = vmatmul.mubr.f32.gmra.mrb[0].mxu0 %v1974
    %v2044 = vpop.f32.mrb[0].mxu0
    %v2045 = vadd.f32 0.0, %v2044
    %v2046 = vpop.f32.mrb[0].mxu0
    %2047 = vdwg.mxu0
    %2049 = vrot.lane.b32.xlu0 %v1965, 96
    %v2050 = vpop.permute.xlu0 %2049
    %v2052 = vsel %vm49, %v1969, 0
    %v2054 = vsel %vm49, %v2050, 0
    %2056 = vmatprep.subr.mxu0 0.0
    %2057 = vmatpush1.xpose.msra.mxu0 %v2054
    %2058 = vmatprep.subr.mxu0 0.0
    %2059 = vmatpush1.xpose.msra.mxu0 0.0
    %2060 = vmatprep.subr.mxu0 0.0
    %2061 = vmatpush1.xpose.msra.mxu0 0.0
    %2062 = vmatprep.subr.mxu0 0.0
    %2063 = vmatpush1.xpose.msra.mxu0 0.0
    %2064 = vmatprep.subr.mxu0 0.0
    %2065 = vmatpush1.xpose.msra.mxu0 0.0
    %2066 = vmatprep.subr.mxu0 0.0
    %2067 = vmatpush1.xpose.msra.mxu0 0.0
    %2068 = vmatprep.subr.mxu0 0.0
    %2069 = vmatpush1.xpose.msra.mxu0 0.0
    %2070 = vmatprep.subr.mxu0 0.0
    %2071 = vmatpush1.xpose.msra.mxu0 0.0
    %2072 = vmatprep.subr.mxu0 0.0
    %2073 = vmatpush1.xpose.msra.mxu0 0.0
    %2074 = vmatprep.subr.mxu0 0.0
    %2075 = vmatpush1.xpose.msra.mxu0 0.0
    %2076 = vmatprep.subr.mxu0 0.0
    %2077 = vmatpush1.xpose.msra.mxu0 0.0
    %2078 = vmatprep.subr.mxu0 0.0
    %2079 = vmatpush1.xpose.msra.mxu0 0.0
    %2080 = vmatprep.subr.mxu0 0.0
    %2081 = vmatpush1.xpose.msra.mxu0 0.0
    %2082 = vmatprep.subr.mxu0 0.0
    %2083 = vmatpush1.xpose.msra.mxu0 0.0
    %2084 = vmatprep.subr.mxu0 0.0
    %2085 = vmatpush1.xpose.msra.mxu0 0.0
    %2086 = vmatprep.subr.mxu0 0.0
    %2087 = vmatpush1.xpose.msra.mxu0 0.0
    %2088 = vmatprep.subr.mxu0 0.0
    %2089 = vmatpush1.xpose.msra.mxu0 0.0
    %2090 = vmatprep.subr.mxu0 0.0
    %2091 = vmatpush1.xpose.msra.mxu0 0.0
    %2092 = vmatprep.subr.mxu0 0.0
    %2093 = vmatpush1.xpose.msra.mxu0 0.0
    %2094 = vmatprep.subr.mxu0 0.0
    %2095 = vmatpush1.xpose.msra.mxu0 0.0
    %2096 = vmatprep.subr.mxu0 0.0
    %2097 = vmatpush1.xpose.msra.mxu0 0.0
    %2098 = vmatprep.subr.mxu0 0.0
    %2099 = vmatpush1.xpose.msra.mxu0 0.0
    %2100 = vmatprep.subr.mxu0 0.0
    %2101 = vmatpush1.xpose.msra.mxu0 0.0
    %2102 = vmatprep.subr.mxu0 0.0
    %2103 = vmatpush1.xpose.msra.mxu0 0.0
    %2104 = vmatprep.subr.mxu0 0.0
    %2105 = vmatpush1.xpose.msra.mxu0 0.0
    %2106 = vmatprep.subr.mxu0 0.0
    %2107 = vmatpush1.xpose.msra.mxu0 0.0
    %2108 = vmatprep.subr.mxu0 0.0
    %2109 = vmatpush1.xpose.msra.mxu0 0.0
    %2110 = vmatprep.subr.mxu0 0.0
    %2111 = vmatpush1.xpose.msra.mxu0 0.0
    %2112 = vmatprep.subr.mxu0 0.0
    %2113 = vmatpush1.xpose.msra.mxu0 0.0
    %2114 = vmatprep.subr.mxu0 0.0
    %2115 = vmatpush1.xpose.msra.mxu0 0.0
    %2116 = vmatprep.subr.mxu0 0.0
    %2117 = vmatpush1.xpose.msra.mxu0 0.0
    %2118 = vmatprep.subr.mxu0 0.0
    %2119 = vmatpush1.xpose.msra.mxu0 0.0
    %2120 = vmatprep.mubr.f32.mxu0 0.0
    %2121 = vmatmul.mubr.f32.gmra.mrb[0].mxu0 %v2052
    %v2122 = vpop.f32.mrb[0].mxu0
    %v2123 = vadd.f32 0.0, %v2122
    %v2124 = vpop.f32.mrb[0].mxu0
    %2125 = vdwg.mxu0
    %v2126 = vmul.f32 %v2045, 0.35355338
    %v2127 = vmul.f32 %v2123, 0.35355338
    %v2128 = vsel %vm338, %v2126, -inf
    %2129 = vmax.xlane.f32.xlu0 %v2128
    %v2130 = vpop.xlane.xlu0 %2129
    %v2131 = vsel %vm338, %v2127, -inf
    %2132 = vmax.xlane.f32.xlu0 %v2131
    %v2133 = vpop.xlane.xlu0 %2132
    %v2134 = vsub.f32 %v2126, %v2130
    %v2135 = vsub.f32 %v2127, %v2133
    %v2136 = vmul.f32 %v2134, 1.442695
    %v2137 = vpow.pop %v2136
    %v2138 = vmul.f32 %v2135, 1.442695
    %v2139 = vpow.pop %v2138
    %v2140 = vsel %vm338, %v2137, 0.0
    %2141 = vadd.xlane.f32.xlu0 %v2140
    %v2142 = vpop.xlane.xlu0 %2141
    %v2143 = vsel %vm338, %v2139, 0.0
    %2144 = vadd.xlane.f32.xlu0 %v2143
    %v2145 = vpop.xlane.xlu0 %2144
    %v2146 = vrcp.pop %v2142
    %v2147 = vrcp.pop %v2145
    %v2148 = vmul.f32 %v2137, %v2146
    %v2149 = vmul.f32 %v2139, %v2147
    %v2150 = vmul.f32 %v1960, %v363
    %v2151 = vmul.f32 %v1965, %v363
    %v2152 = vmul.f32 %v1960, %v37
    %v2153 = vmul.f32 %v1965, %v37
    %v2155 = vsel %vm49, %v2152, 0
    %2157 = vmatprep.subr.mxu0 0.0
    %2158 = vmatpush1.xpose.msra.mxu0 %v1976
    %2159 = vmatprep.subr.mxu0 0.0
    %2160 = vmatpush1.xpose.msra.mxu0 0.0
    %2161 = vmatprep.subr.mxu0 0.0
    %2162 = vmatpush1.xpose.msra.mxu0 0.0
    %2163 = vmatprep.subr.mxu0 0.0
    %2164 = vmatpush1.xpose.msra.mxu0 0.0
    %2165 = vmatprep.subr.mxu0 0.0
    %2166 = vmatpush1.xpose.msra.mxu0 0.0
    %2167 = vmatprep.subr.mxu0 0.0
    %2168 = vmatpush1.xpose.msra.mxu0 0.0
    %2169 = vmatprep.subr.mxu0 0.0
    %2170 = vmatpush1.xpose.msra.mxu0 0.0
    %2171 = vmatprep.subr.mxu0 0.0
    %2172 = vmatpush1.xpose.msra.mxu0 0.0
    %2173 = vmatprep.subr.mxu0 0.0
    %2174 = vmatpush1.xpose.msra.mxu0 0.0
    %2175 = vmatprep.subr.mxu0 0.0
    %2176 = vmatpush1.xpose.msra.mxu0 0.0
    %2177 = vmatprep.subr.mxu0 0.0
    %2178 = vmatpush1.xpose.msra.mxu0 0.0
    %2179 = vmatprep.subr.mxu0 0.0
    %2180 = vmatpush1.xpose.msra.mxu0 0.0
    %2181 = vmatprep.subr.mxu0 0.0
    %2182 = vmatpush1.xpose.msra.mxu0 0.0
    %2183 = vmatprep.subr.mxu0 0.0
    %2184 = vmatpush1.xpose.msra.mxu0 0.0
    %2185 = vmatprep.subr.mxu0 0.0
    %2186 = vmatpush1.xpose.msra.mxu0 0.0
    %2187 = vmatprep.subr.mxu0 0.0
    %2188 = vmatpush1.xpose.msra.mxu0 0.0
    %2189 = vmatprep.subr.mxu0 0.0
    %2190 = vmatpush1.xpose.msra.mxu0 0.0
    %2191 = vmatprep.subr.mxu0 0.0
    %2192 = vmatpush1.xpose.msra.mxu0 0.0
    %2193 = vmatprep.subr.mxu0 0.0
    %2194 = vmatpush1.xpose.msra.mxu0 0.0
    %2195 = vmatprep.subr.mxu0 0.0
    %2196 = vmatpush1.xpose.msra.mxu0 0.0
    %2197 = vmatprep.subr.mxu0 0.0
    %2198 = vmatpush1.xpose.msra.mxu0 0.0
    %2199 = vmatprep.subr.mxu0 0.0
    %2200 = vmatpush1.xpose.msra.mxu0 0.0
    %2201 = vmatprep.subr.mxu0 0.0
    %2202 = vmatpush1.xpose.msra.mxu0 0.0
    %2203 = vmatprep.subr.mxu0 0.0
    %2204 = vmatpush1.xpose.msra.mxu0 0.0
    %2205 = vmatprep.subr.mxu0 0.0
    %2206 = vmatpush1.xpose.msra.mxu0 0.0
    %2207 = vmatprep.subr.mxu0 0.0
    %2208 = vmatpush1.xpose.msra.mxu0 0.0
    %2209 = vmatprep.subr.mxu0 0.0
    %2210 = vmatpush1.xpose.msra.mxu0 0.0
    %2211 = vmatprep.subr.mxu0 0.0
    %2212 = vmatpush1.xpose.msra.mxu0 0.0
    %2213 = vmatprep.subr.mxu0 0.0
    %2214 = vmatpush1.xpose.msra.mxu0 0.0
    %2215 = vmatprep.subr.mxu0 0.0
    %2216 = vmatpush1.xpose.msra.mxu0 0.0
    %2217 = vmatprep.subr.mxu0 0.0
    %2218 = vmatpush1.xpose.msra.mxu0 0.0
    %2219 = vmatprep.subr.mxu0 0.0
    %2220 = vmatpush1.xpose.msra.mxu0 0.0
    %2221 = vmatprep.mubr.f32.mxu0 0.0
    %2222 = vmatmul.mubr.f32.gmra.mrb[0].mxu0 %v2155
    %v2223 = vpop.f32.mrb[0].mxu0
    %v2224 = vadd.f32 0.0, %v2223
    %v2225 = vpop.f32.mrb[0].mxu0
    %2226 = vdwg.mxu0
    %v2228 = vsel %vm49, %v2153, 0
    %2230 = vmatprep.subr.mxu0 0.0
    %2231 = vmatpush1.xpose.msra.mxu0 %v2054
    %2232 = vmatprep.subr.mxu0 0.0
    %2233 = vmatpush1.xpose.msra.mxu0 0.0
    %2234 = vmatprep.subr.mxu0 0.0
    %2235 = vmatpush1.xpose.msra.mxu0 0.0
    %2236 = vmatprep.subr.mxu0 0.0
    %2237 = vmatpush1.xpose.msra.mxu0 0.0
    %2238 = vmatprep.subr.mxu0 0.0
    %2239 = vmatpush1.xpose.msra.mxu0 0.0
    %2240 = vmatprep.subr.mxu0 0.0
    %2241 = vmatpush1.xpose.msra.mxu0 0.0
    %2242 = vmatprep.subr.mxu0 0.0
    %2243 = vmatpush1.xpose.msra.mxu0 0.0
    %2244 = vmatprep.subr.mxu0 0.0
    %2245 = vmatpush1.xpose.msra.mxu0 0.0
    %2246 = vmatprep.subr.mxu0 0.0
    %2247 = vmatpush1.xpose.msra.mxu0 0.0
    %2248 = vmatprep.subr.mxu0 0.0
    %2249 = vmatpush1.xpose.msra.mxu0 0.0
    %2250 = vmatprep.subr.mxu0 0.0
    %2251 = vmatpush1.xpose.msra.mxu0 0.0
    %2252 = vmatprep.subr.mxu0 0.0
    %2253 = vmatpush1.xpose.msra.mxu0 0.0
    %2254 = vmatprep.subr.mxu0 0.0
    %2255 = vmatpush1.xpose.msra.mxu0 0.0
    %2256 = vmatprep.subr.mxu0 0.0
    %2257 = vmatpush1.xpose.msra.mxu0 0.0
    %2258 = vmatprep.subr.mxu0 0.0
    %2259 = vmatpush1.xpose.msra.mxu0 0.0
    %2260 = vmatprep.subr.mxu0 0.0
    %2261 = vmatpush1.xpose.msra.mxu0 0.0
    %2262 = vmatprep.subr.mxu0 0.0
    %2263 = vmatpush1.xpose.msra.mxu0 0.0
    %2264 = vmatprep.subr.mxu0 0.0
    %2265 = vmatpush1.xpose.msra.mxu0 0.0
    %2266 = vmatprep.subr.mxu0 0.0
    %2267 = vmatpush1.xpose.msra.mxu0 0.0
    %2268 = vmatprep.subr.mxu0 0.0
    %2269 = vmatpush1.xpose.msra.mxu0 0.0
    %2270 = vmatprep.subr.mxu0 0.0
    %2271 = vmatpush1.xpose.msra.mxu0 0.0
    %2272 = vmatprep.subr.mxu0 0.0
    %2273 = vmatpush1.xpose.msra.mxu0 0.0
    %2274 = vmatprep.subr.mxu0 0.0
    %2275 = vmatpush1.xpose.msra.mxu0 0.0
    %2276 = vmatprep.subr.mxu0 0.0
    %2277 = vmatpush1.xpose.msra.mxu0 0.0
    %2278 = vmatprep.subr.mxu0 0.0
    %2279 = vmatpush1.xpose.msra.mxu0 0.0
    %2280 = vmatprep.subr.mxu0 0.0
    %2281 = vmatpush1.xpose.msra.mxu0 0.0
    %2282 = vmatprep.subr.mxu0 0.0
    %2283 = vmatpush1.xpose.msra.mxu0 0.0
    %2284 = vmatprep.subr.mxu0 0.0
    %2285 = vmatpush1.xpose.msra.mxu0 0.0
    %2286 = vmatprep.subr.mxu0 0.0
    %2287 = vmatpush1.xpose.msra.mxu0 0.0
    %2288 = vmatprep.subr.mxu0 0.0
    %2289 = vmatpush1.xpose.msra.mxu0 0.0
    %2290 = vmatprep.subr.mxu0 0.0
    %2291 = vmatpush1.xpose.msra.mxu0 0.0
    %2292 = vmatprep.subr.mxu0 0.0
    %2293 = vmatpush1.xpose.msra.mxu0 0.0
    %2294 = vmatprep.mubr.f32.mxu0 0.0
    %2295 = vmatmul.mubr.f32.gmra.mrb[0].mxu0 %v2228
    %v2296 = vpop.f32.mrb[0].mxu0
    %v2297 = vadd.f32 0.0, %v2296
    %v2298 = vpop.f32.mrb[0].mxu0
    %2299 = vdwg.mxu0
    %v2300 = vmul.f32 %v2224, 0.35355338
    %v2301 = vmul.f32 %v2297, 0.35355338
    %v2302 = vsel %vm338, %v2300, -inf
    %2303 = vmax.xlane.f32.xlu0 %v2302
    %v2304 = vpop.xlane.xlu0 %2303
    %v2305 = vsel %vm338, %v2301, -inf
    %2306 = vmax.xlane.f32.xlu0 %v2305
    %v2307 = vpop.xlane.xlu0 %2306
    %v2308 = vsub.f32 %v2300, %v2304
    %v2309 = vsub.f32 %v2301, %v2307
    %v2310 = vmul.f32 %v2308, 1.442695
    %v2311 = vpow.pop %v2310
    %v2312 = vmul.f32 %v2309, 1.442695
    %v2313 = vpow.pop %v2312
    %v2314 = vsel %vm338, %v2311, 0.0
    %2315 = vadd.xlane.f32.xlu0 %v2314
    %v2316 = vpop.xlane.xlu0 %2315
    %v2317 = vsel %vm338, %v2313, 0.0
    %2318 = vadd.xlane.f32.xlu0 %v2317
    %v2319 = vpop.xlane.xlu0 %2318
    %v2320 = vrcp.pop %v2316
    %v2321 = vrcp.pop %v2319
    %v2322 = vmul.f32 %v2311, %v2320
    %v2323 = vmul.f32 %v2313, %v2321
    %v2324 = vmul.f32 %v1960, %v541
    %v2325 = vmul.f32 %v1965, %v541
    %2327 = vrot.lane.b32.xlu0 %v2324, 64
    %v2328 = vpop.permute.xlu0 %2327
    %v2331 = vsel %vm338, %v2322, 0
    %2333 = vmatprep.subr.mxu0 0.0
    %2334 = vmatpush1.msra.mxu0 %v2328
    %2335 = vmatprep.subr.mxu0 0.0
    %2336 = vmatpush1.msra.mxu0 0.0
    %2337 = vmatprep.subr.mxu0 0.0
    %2338 = vmatpush1.msra.mxu0 0.0
    %2339 = vmatprep.subr.mxu0 0.0
    %2340 = vmatpush1.msra.mxu0 0.0
    %2341 = vmatprep.subr.mxu0 0.0
    %2342 = vmatpush1.msra.mxu0 0.0
    %2343 = vmatprep.subr.mxu0 0.0
    %2344 = vmatpush1.msra.mxu0 0.0
    %2345 = vmatprep.subr.mxu0 0.0
    %2346 = vmatpush1.msra.mxu0 0.0
    %2347 = vmatprep.subr.mxu0 0.0
    %2348 = vmatpush1.msra.mxu0 0.0
    %2349 = vmatprep.subr.mxu0 0.0
    %2350 = vmatpush1.msra.mxu0 0.0
    %2351 = vmatprep.subr.mxu0 0.0
    %2352 = vmatpush1.msra.mxu0 0.0
    %2353 = vmatprep.subr.mxu0 0.0
    %2354 = vmatpush1.msra.mxu0 0.0
    %2355 = vmatprep.subr.mxu0 0.0
    %2356 = vmatpush1.msra.mxu0 0.0
    %2357 = vmatprep.subr.mxu0 0.0
    %2358 = vmatpush1.msra.mxu0 0.0
    %2359 = vmatprep.subr.mxu0 0.0
    %2360 = vmatpush1.msra.mxu0 0.0
    %2361 = vmatprep.subr.mxu0 0.0
    %2362 = vmatpush1.msra.mxu0 0.0
    %2363 = vmatprep.subr.mxu0 0.0
    %2364 = vmatpush1.msra.mxu0 0.0
    %2365 = vmatprep.subr.mxu0 0.0
    %2366 = vmatpush1.msra.mxu0 0.0
    %2367 = vmatprep.subr.mxu0 0.0
    %2368 = vmatpush1.msra.mxu0 0.0
    %2369 = vmatprep.subr.mxu0 0.0
    %2370 = vmatpush1.msra.mxu0 0.0
    %2371 = vmatprep.subr.mxu0 0.0
    %2372 = vmatpush1.msra.mxu0 0.0
    %2373 = vmatprep.subr.mxu0 0.0
    %2374 = vmatpush1.msra.mxu0 0.0
    %2375 = vmatprep.subr.mxu0 0.0
    %2376 = vmatpush1.msra.mxu0 0.0
    %2377 = vmatprep.subr.mxu0 0.0
    %2378 = vmatpush1.msra.mxu0 0.0
    %2379 = vmatprep.subr.mxu0 0.0
    %2380 = vmatpush1.msra.mxu0 0.0
    %2381 = vmatprep.subr.mxu0 0.0
    %2382 = vmatpush1.msra.mxu0 0.0
    %2383 = vmatprep.subr.mxu0 0.0
    %2384 = vmatpush1.msra.mxu0 0.0
    %2385 = vmatprep.subr.mxu0 0.0
    %2386 = vmatpush1.msra.mxu0 0.0
    %2387 = vmatprep.subr.mxu0 0.0
    %2388 = vmatpush1.msra.mxu0 0.0
    %2389 = vmatprep.subr.mxu0 0.0
    %2390 = vmatpush1.msra.mxu0 0.0
    %2391 = vmatprep.subr.mxu0 0.0
    %2392 = vmatpush1.msra.mxu0 0.0
    %2393 = vmatprep.subr.mxu0 0.0
    %2394 = vmatpush1.msra.mxu0 0.0
    %2395 = vmatprep.subr.mxu0 0.0
    %2396 = vmatpush1.msra.mxu0 0.0
    %2397 = vmatprep.mubr.f32.mxu0 0.0
    %2398 = vmatmul.mubr.f32.gmra.mrb[0].mxu0 %v2331
    %v2399 = vpop.f32.mrb[0].mxu0
    %v2400 = vadd.f32 0.0, %v2399
    %v2401 = vpop.f32.mrb[0].mxu0
    %2402 = vdwg.mxu0
    %2404 = vrot.lane.b32.xlu0 %v2325, 64
    %v2405 = vpop.permute.xlu0 %2404
    %v2408 = vsel %vm338, %v2323, 0
    %2410 = vmatprep.subr.mxu0 0.0
    %2411 = vmatpush1.msra.mxu0 %v2405
    %2412 = vmatprep.subr.mxu0 0.0
    %2413 = vmatpush1.msra.mxu0 0.0
    %2414 = vmatprep.subr.mxu0 0.0
    %2415 = vmatpush1.msra.mxu0 0.0
    %2416 = vmatprep.subr.mxu0 0.0
    %2417 = vmatpush1.msra.mxu0 0.0
    %2418 = vmatprep.subr.mxu0 0.0
    %2419 = vmatpush1.msra.mxu0 0.0
    %2420 = vmatprep.subr.mxu0 0.0
    %2421 = vmatpush1.msra.mxu0 0.0
    %2422 = vmatprep.subr.mxu0 0.0
    %2423 = vmatpush1.msra.mxu0 0.0
    %2424 = vmatprep.subr.mxu0 0.0
    %2425 = vmatpush1.msra.mxu0 0.0
    %2426 = vmatprep.subr.mxu0 0.0
    %2427 = vmatpush1.msra.mxu0 0.0
    %2428 = vmatprep.subr.mxu0 0.0
    %2429 = vmatpush1.msra.mxu0 0.0
    %2430 = vmatprep.subr.mxu0 0.0
    %2431 = vmatpush1.msra.mxu0 0.0
    %2432 = vmatprep.subr.mxu0 0.0
    %2433 = vmatpush1.msra.mxu0 0.0
    %2434 = vmatprep.subr.mxu0 0.0
    %2435 = vmatpush1.msra.mxu0 0.0
    %2436 = vmatprep.subr.mxu0 0.0
    %2437 = vmatpush1.msra.mxu0 0.0
    %2438 = vmatprep.subr.mxu0 0.0
    %2439 = vmatpush1.msra.mxu0 0.0
    %2440 = vmatprep.subr.mxu0 0.0
    %2441 = vmatpush1.msra.mxu0 0.0
    %2442 = vmatprep.subr.mxu0 0.0
    %2443 = vmatpush1.msra.mxu0 0.0
    %2444 = vmatprep.subr.mxu0 0.0
    %2445 = vmatpush1.msra.mxu0 0.0
    %2446 = vmatprep.subr.mxu0 0.0
    %2447 = vmatpush1.msra.mxu0 0.0
    %2448 = vmatprep.subr.mxu0 0.0
    %2449 = vmatpush1.msra.mxu0 0.0
    %2450 = vmatprep.subr.mxu0 0.0
    %2451 = vmatpush1.msra.mxu0 0.0
    %2452 = vmatprep.subr.mxu0 0.0
    %2453 = vmatpush1.msra.mxu0 0.0
    %2454 = vmatprep.subr.mxu0 0.0
    %2455 = vmatpush1.msra.mxu0 0.0
    %2456 = vmatprep.subr.mxu0 0.0
    %2457 = vmatpush1.msra.mxu0 0.0
    %2458 = vmatprep.subr.mxu0 0.0
    %2459 = vmatpush1.msra.mxu0 0.0
    %2460 = vmatprep.subr.mxu0 0.0
    %2461 = vmatpush1.msra.mxu0 0.0
    %2462 = vmatprep.subr.mxu0 0.0
    %2463 = vmatpush1.msra.mxu0 0.0
    %2464 = vmatprep.subr.mxu0 0.0
    %2465 = vmatpush1.msra.mxu0 0.0
    %2466 = vmatprep.subr.mxu0 0.0
    %2467 = vmatpush1.msra.mxu0 0.0
    %2468 = vmatprep.subr.mxu0 0.0
    %2469 = vmatpush1.msra.mxu0 0.0
    %2470 = vmatprep.subr.mxu0 0.0
    %2471 = vmatpush1.msra.mxu0 0.0
    %2472 = vmatprep.subr.mxu0 0.0
    %2473 = vmatpush1.msra.mxu0 0.0
    %2474 = vmatprep.mubr.f32.mxu0 0.0
    %2475 = vmatmul.mubr.f32.gmra.mrb[0].mxu0 %v2408
    %v2476 = vpop.f32.mrb[0].mxu0
    %v2477 = vadd.f32 0.0, %v2476
    %v2478 = vpop.f32.mrb[0].mxu0
    %2479 = vdwg.mxu0
    %2481 = vrot.lane.b32.xlu0 %v2150, 64
    %v2482 = vpop.permute.xlu0 %2481
    %v2485 = vsel %vm338, %v2148, 0
    %2487 = vmatprep.subr.mxu0 0.0
    %2488 = vmatpush1.msra.mxu0 %v2482
    %2489 = vmatprep.subr.mxu0 0.0
    %2490 = vmatpush1.msra.mxu0 0.0
    %2491 = vmatprep.subr.mxu0 0.0
    %2492 = vmatpush1.msra.mxu0 0.0
    %2493 = vmatprep.subr.mxu0 0.0
    %2494 = vmatpush1.msra.mxu0 0.0
    %2495 = vmatprep.subr.mxu0 0.0
    %2496 = vmatpush1.msra.mxu0 0.0
    %2497 = vmatprep.subr.mxu0 0.0
    %2498 = vmatpush1.msra.mxu0 0.0
    %2499 = vmatprep.subr.mxu0 0.0
    %2500 = vmatpush1.msra.mxu0 0.0
    %2501 = vmatprep.subr.mxu0 0.0
    %2502 = vmatpush1.msra.mxu0 0.0
    %2503 = vmatprep.subr.mxu0 0.0
    %2504 = vmatpush1.msra.mxu0 0.0
    %2505 = vmatprep.subr.mxu0 0.0
    %2506 = vmatpush1.msra.mxu0 0.0
    %2507 = vmatprep.subr.mxu0 0.0
    %2508 = vmatpush1.msra.mxu0 0.0
    %2509 = vmatprep.subr.mxu0 0.0
    %2510 = vmatpush1.msra.mxu0 0.0
    %2511 = vmatprep.subr.mxu0 0.0
    %2512 = vmatpush1.msra.mxu0 0.0
    %2513 = vmatprep.subr.mxu0 0.0
    %2514 = vmatpush1.msra.mxu0 0.0
    %2515 = vmatprep.subr.mxu0 0.0
    %2516 = vmatpush1.msra.mxu0 0.0
    %2517 = vmatprep.subr.mxu0 0.0
    %2518 = vmatpush1.msra.mxu0 0.0
    %2519 = vmatprep.subr.mxu0 0.0
    %2520 = vmatpush1.msra.mxu0 0.0
    %2521 = vmatprep.subr.mxu0 0.0
    %2522 = vmatpush1.msra.mxu0 0.0
    %2523 = vmatprep.subr.mxu0 0.0
    %2524 = vmatpush1.msra.mxu0 0.0
    %2525 = vmatprep.subr.mxu0 0.0
    %2526 = vmatpush1.msra.mxu0 0.0
    %2527 = vmatprep.subr.mxu0 0.0
    %2528 = vmatpush1.msra.mxu0 0.0
    %2529 = vmatprep.subr.mxu0 0.0
    %2530 = vmatpush1.msra.mxu0 0.0
    %2531 = vmatprep.subr.mxu0 0.0
    %2532 = vmatpush1.msra.mxu0 0.0
    %2533 = vmatprep.subr.mxu0 0.0
    %2534 = vmatpush1.msra.mxu0 0.0
    %2535 = vmatprep.subr.mxu0 0.0
    %2536 = vmatpush1.msra.mxu0 0.0
    %2537 = vmatprep.subr.mxu0 0.0
    %2538 = vmatpush1.msra.mxu0 0.0
    %2539 = vmatprep.subr.mxu0 0.0
    %2540 = vmatpush1.msra.mxu0 0.0
    %2541 = vmatprep.subr.mxu0 0.0
    %2542 = vmatpush1.msra.mxu0 0.0
    %2543 = vmatprep.subr.mxu0 0.0
    %2544 = vmatpush1.msra.mxu0 0.0
    %2545 = vmatprep.subr.mxu0 0.0
    %2546 = vmatpush1.msra.mxu0 0.0
    %2547 = vmatprep.subr.mxu0 0.0
    %2548 = vmatpush1.msra.mxu0 0.0
    %2549 = vmatprep.subr.mxu0 0.0
    %2550 = vmatpush1.msra.mxu0 0.0
    %2551 = vmatprep.mubr.f32.mxu0 0.0
    %2552 = vmatmul.mubr.f32.gmra.mrb[0].mxu0 %v2485
    %v2553 = vpop.f32.mrb[0].mxu0
    %v2554 = vadd.f32 %v2400, %v2553
    %v2555 = vpop.f32.mrb[0].mxu0
    %2556 = vdwg.mxu0
    %2558 = vrot.lane.b32.xlu0 %v2151, 64
    %v2559 = vpop.permute.xlu0 %2558
    %v2562 = vsel %vm338, %v2149, 0
    %2564 = vmatprep.subr.mxu0 0.0
    %2565 = vmatpush1.msra.mxu0 %v2559
    %2566 = vmatprep.subr.mxu0 0.0
    %2567 = vmatpush1.msra.mxu0 0.0
    %2568 = vmatprep.subr.mxu0 0.0
    %2569 = vmatpush1.msra.mxu0 0.0
    %2570 = vmatprep.subr.mxu0 0.0
    %2571 = vmatpush1.msra.mxu0 0.0
    %2572 = vmatprep.subr.mxu0 0.0
    %2573 = vmatpush1.msra.mxu0 0.0
    %2574 = vmatprep.subr.mxu0 0.0
    %2575 = vmatpush1.msra.mxu0 0.0
    %2576 = vmatprep.subr.mxu0 0.0
    %2577 = vmatpush1.msra.mxu0 0.0
    %2578 = vmatprep.subr.mxu0 0.0
    %2579 = vmatpush1.msra.mxu0 0.0
    %2580 = vmatprep.subr.mxu0 0.0
    %2581 = vmatpush1.msra.mxu0 0.0
    %2582 = vmatprep.subr.mxu0 0.0
    %2583 = vmatpush1.msra.mxu0 0.0
    %2584 = vmatprep.subr.mxu0 0.0
    %2585 = vmatpush1.msra.mxu0 0.0
    %2586 = vmatprep.subr.mxu0 0.0
    %2587 = vmatpush1.msra.mxu0 0.0
    %2588 = vmatprep.subr.mxu0 0.0
    %2589 = vmatpush1.msra.mxu0 0.0
    %2590 = vmatprep.subr.mxu0 0.0
    %2591 = vmatpush1.msra.mxu0 0.0
    %2592 = vmatprep.subr.mxu0 0.0
    %2593 = vmatpush1.msra.mxu0 0.0
    %2594 = vmatprep.subr.mxu0 0.0
    %2595 = vmatpush1.msra.mxu0 0.0
    %2596 = vmatprep.subr.mxu0 0.0
    %2597 = vmatpush1.msra.mxu0 0.0
    %2598 = vmatprep.subr.mxu0 0.0
    %2599 = vmatpush1.msra.mxu0 0.0
    %2600 = vmatprep.subr.mxu0 0.0
    %2601 = vmatpush1.msra.mxu0 0.0
    %2602 = vmatprep.subr.mxu0 0.0
    %2603 = vmatpush1.msra.mxu0 0.0
    %2604 = vmatprep.subr.mxu0 0.0
    %2605 = vmatpush1.msra.mxu0 0.0
    %2606 = vmatprep.subr.mxu0 0.0
    %2607 = vmatpush1.msra.mxu0 0.0
    %2608 = vmatprep.subr.mxu0 0.0
    %2609 = vmatpush1.msra.mxu0 0.0
    %2610 = vmatprep.subr.mxu0 0.0
    %2611 = vmatpush1.msra.mxu0 0.0
    %2612 = vmatprep.subr.mxu0 0.0
    %2613 = vmatpush1.msra.mxu0 0.0
    %2614 = vmatprep.subr.mxu0 0.0
    %2615 = vmatpush1.msra.mxu0 0.0
    %2616 = vmatprep.subr.mxu0 0.0
    %2617 = vmatpush1.msra.mxu0 0.0
    %2618 = vmatprep.subr.mxu0 0.0
    %2619 = vmatpush1.msra.mxu0 0.0
    %2620 = vmatprep.subr.mxu0 0.0
    %2621 = vmatpush1.msra.mxu0 0.0
    %2622 = vmatprep.subr.mxu0 0.0
    %2623 = vmatpush1.msra.mxu0 0.0
    %2624 = vmatprep.subr.mxu0 0.0
    %2625 = vmatpush1.msra.mxu0 0.0
    %2626 = vmatprep.subr.mxu0 0.0
    %2627 = vmatpush1.msra.mxu0 0.0
    %2628 = vmatprep.mubr.f32.mxu0 0.0
    %2629 = vmatmul.mubr.f32.gmra.mrb[0].mxu0 %v2562
    %v2630 = vpop.f32.mrb[0].mxu0
    %v2631 = vadd.f32 %v2477, %v2630
    %v2632 = vpop.f32.mrb[0].mxu0
    %2633 = vdwg.mxu0
    %v2634 = vmul.f32 %v1960, %v42
    %v2635 = vmul.f32 %v1965, %v42
    %v2637 = vsel %vm49, %v2634, 0
    %2639 = vmatprep.subr.mxu0 0.0
    %2640 = vmatpush1.xpose.msra.mxu0 %v1976
    %2641 = vmatprep.subr.mxu0 0.0
    %2642 = vmatpush1.xpose.msra.mxu0 0.0
    %2643 = vmatprep.subr.mxu0 0.0
    %2644 = vmatpush1.xpose.msra.mxu0 0.0
    %2645 = vmatprep.subr.mxu0 0.0
    %2646 = vmatpush1.xpose.msra.mxu0 0.0
    %2647 = vmatprep.subr.mxu0 0.0
    %2648 = vmatpush1.xpose.msra.mxu0 0.0
    %2649 = vmatprep.subr.mxu0 0.0
    %2650 = vmatpush1.xpose.msra.mxu0 0.0
    %2651 = vmatprep.subr.mxu0 0.0
    %2652 = vmatpush1.xpose.msra.mxu0 0.0
    %2653 = vmatprep.subr.mxu0 0.0
    %2654 = vmatpush1.xpose.msra.mxu0 0.0
    %2655 = vmatprep.subr.mxu0 0.0
    %2656 = vmatpush1.xpose.msra.mxu0 0.0
    %2657 = vmatprep.subr.mxu0 0.0
    %2658 = vmatpush1.xpose.msra.mxu0 0.0
    %2659 = vmatprep.subr.mxu0 0.0
    %2660 = vmatpush1.xpose.msra.mxu0 0.0
    %2661 = vmatprep.subr.mxu0 0.0
    %2662 = vmatpush1.xpose.msra.mxu0 0.0
    %2663 = vmatprep.subr.mxu0 0.0
    %2664 = vmatpush1.xpose.msra.mxu0 0.0
    %2665 = vmatprep.subr.mxu0 0.0
    %2666 = vmatpush1.xpose.msra.mxu0 0.0
    %2667 = vmatprep.subr.mxu0 0.0
    %2668 = vmatpush1.xpose.msra.mxu0 0.0
    %2669 = vmatprep.subr.mxu0 0.0
    %2670 = vmatpush1.xpose.msra.mxu0 0.0
    %2671 = vmatprep.subr.mxu0 0.0
    %2672 = vmatpush1.xpose.msra.mxu0 0.0
    %2673 = vmatprep.subr.mxu0 0.0
    %2674 = vmatpush1.xpose.msra.mxu0 0.0
    %2675 = vmatprep.subr.mxu0 0.0
    %2676 = vmatpush1.xpose.msra.mxu0 0.0
    %2677 = vmatprep.subr.mxu0 0.0
    %2678 = vmatpush1.xpose.msra.mxu0 0.0
    %2679 = vmatprep.subr.mxu0 0.0
    %2680 = vmatpush1.xpose.msra.mxu0 0.0
    %2681 = vmatprep.subr.mxu0 0.0
    %2682 = vmatpush1.xpose.msra.mxu0 0.0
    %2683 = vmatprep.subr.mxu0 0.0
    %2684 = vmatpush1.xpose.msra.mxu0 0.0
    %2685 = vmatprep.subr.mxu0 0.0
    %2686 = vmatpush1.xpose.msra.mxu0 0.0
    %2687 = vmatprep.subr.mxu0 0.0
    %2688 = vmatpush1.xpose.msra.mxu0 0.0
    %2689 = vmatprep.subr.mxu0 0.0
    %2690 = vmatpush1.xpose.msra.mxu0 0.0
    %2691 = vmatprep.subr.mxu0 0.0
    %2692 = vmatpush1.xpose.msra.mxu0 0.0
    %2693 = vmatprep.subr.mxu0 0.0
    %2694 = vmatpush1.xpose.msra.mxu0 0.0
    %2695 = vmatprep.subr.mxu0 0.0
    %2696 = vmatpush1.xpose.msra.mxu0 0.0
    %2697 = vmatprep.subr.mxu0 0.0
    %2698 = vmatpush1.xpose.msra.mxu0 0.0
    %2699 = vmatprep.subr.mxu0 0.0
    %2700 = vmatpush1.xpose.msra.mxu0 0.0
    %2701 = vmatprep.subr.mxu0 0.0
    %2702 = vmatpush1.xpose.msra.mxu0 0.0
    %2703 = vmatprep.mubr.f32.mxu0 0.0
    %2704 = vmatmul.mubr.f32.gmra.mrb[0].mxu0 %v2637
    %v2705 = vpop.f32.mrb[0].mxu0
    %v2706 = vadd.f32 0.0, %v2705
    %v2707 = vpop.f32.mrb[0].mxu0
    %2708 = vdwg.mxu0
    %v2710 = vsel %vm49, %v2635, 0
    %2712 = vmatprep.subr.mxu0 0.0
    %2713 = vmatpush1.xpose.msra.mxu0 %v2054
    %2714 = vmatprep.subr.mxu0 0.0
    %2715 = vmatpush1.xpose.msra.mxu0 0.0
    %2716 = vmatprep.subr.mxu0 0.0
    %2717 = vmatpush1.xpose.msra.mxu0 0.0
    %2718 = vmatprep.subr.mxu0 0.0
    %2719 = vmatpush1.xpose.msra.mxu0 0.0
    %2720 = vmatprep.subr.mxu0 0.0
    %2721 = vmatpush1.xpose.msra.mxu0 0.0
    %2722 = vmatprep.subr.mxu0 0.0
    %2723 = vmatpush1.xpose.msra.mxu0 0.0
    %2724 = vmatprep.subr.mxu0 0.0
    %2725 = vmatpush1.xpose.msra.mxu0 0.0
    %2726 = vmatprep.subr.mxu0 0.0
    %2727 = vmatpush1.xpose.msra.mxu0 0.0
    %2728 = vmatprep.subr.mxu0 0.0
    %2729 = vmatpush1.xpose.msra.mxu0 0.0
    %2730 = vmatprep.subr.mxu0 0.0
    %2731 = vmatpush1.xpose.msra.mxu0 0.0
    %2732 = vmatprep.subr.mxu0 0.0
    %2733 = vmatpush1.xpose.msra.mxu0 0.0
    %2734 = vmatprep.subr.mxu0 0.0
    %2735 = vmatpush1.xpose.msra.mxu0 0.0
    %2736 = vmatprep.subr.mxu0 0.0
    %2737 = vmatpush1.xpose.msra.mxu0 0.0
    %2738 = vmatprep.subr.mxu0 0.0
    %2739 = vmatpush1.xpose.msra.mxu0 0.0
    %2740 = vmatprep.subr.mxu0 0.0
    %2741 = vmatpush1.xpose.msra.mxu0 0.0
    %2742 = vmatprep.subr.mxu0 0.0
    %2743 = vmatpush1.xpose.msra.mxu0 0.0
    %2744 = vmatprep.subr.mxu0 0.0
    %2745 = vmatpush1.xpose.msra.mxu0 0.0
    %2746 = vmatprep.subr.mxu0 0.0
    %2747 = vmatpush1.xpose.msra.mxu0 0.0
    %2748 = vmatprep.subr.mxu0 0.0
    %2749 = vmatpush1.xpose.msra.mxu0 0.0
    %2750 = vmatprep.subr.mxu0 0.0
    %2751 = vmatpush1.xpose.msra.mxu0 0.0
    %2752 = vmatprep.subr.mxu0 0.0
    %2753 = vmatpush1.xpose.msra.mxu0 0.0
    %2754 = vmatprep.subr.mxu0 0.0
    %2755 = vmatpush1.xpose.msra.mxu0 0.0
    %2756 = vmatprep.subr.mxu0 0.0
    %2757 = vmatpush1.xpose.msra.mxu0 0.0
    %2758 = vmatprep.subr.mxu0 0.0
    %2759 = vmatpush1.xpose.msra.mxu0 0.0
    %2760 = vmatprep.subr.mxu0 0.0
    %2761 = vmatpush1.xpose.msra.mxu0 0.0
    %2762 = vmatprep.subr.mxu0 0.0
    %2763 = vmatpush1.xpose.msra.mxu0 0.0
    %2764 = vmatprep.subr.mxu0 0.0
    %2765 = vmatpush1.xpose.msra.mxu0 0.0
    %2766 = vmatprep.subr.mxu0 0.0
    %2767 = vmatpush1.xpose.msra.mxu0 0.0
    %2768 = vmatprep.subr.mxu0 0.0
    %2769 = vmatpush1.xpose.msra.mxu0 0.0
    %2770 = vmatprep.subr.mxu0 0.0
    %2771 = vmatpush1.xpose.msra.mxu0 0.0
    %2772 = vmatprep.subr.mxu0 0.0
    %2773 = vmatpush1.xpose.msra.mxu0 0.0
    %2774 = vmatprep.subr.mxu0 0.0
    %2775 = vmatpush1.xpose.msra.mxu0 0.0
    %2776 = vmatprep.mubr.f32.mxu0 0.0
    %2777 = vmatmul.mubr.f32.gmra.mrb[0].mxu0 %v2710
    %v2778 = vpop.f32.mrb[0].mxu0
    %v2779 = vadd.f32 0.0, %v2778
    %v2780 = vpop.f32.mrb[0].mxu0
    %2781 = vdwg.mxu0
    %v2782 = vmul.f32 %v2706, 0.35355338
    %v2783 = vmul.f32 %v2779, 0.35355338
    %v2784 = vsel %vm338, %v2782, -inf
    %2785 = vmax.xlane.f32.xlu0 %v2784
    %v2786 = vpop.xlane.xlu0 %2785
    %v2787 = vsel %vm338, %v2783, -inf
    %2788 = vmax.xlane.f32.xlu0 %v2787
    %v2789 = vpop.xlane.xlu0 %2788
    %v2790 = vsub.f32 %v2782, %v2786
    %v2791 = vsub.f32 %v2783, %v2789
    %v2792 = vmul.f32 %v2790, 1.442695
    %v2793 = vpow.pop %v2792
    %v2794 = vmul.f32 %v2791, 1.442695
    %v2795 = vpow.pop %v2794
    %v2796 = vsel %vm338, %v2793, 0.0
    %2797 = vadd.xlane.f32.xlu0 %v2796
    %v2798 = vpop.xlane.xlu0 %2797
    %v2799 = vsel %vm338, %v2795, 0.0
    %2800 = vadd.xlane.f32.xlu0 %v2799
    %v2801 = vpop.xlane.xlu0 %2800
    %v2802 = vrcp.pop %v2798
    %v2803 = vrcp.pop %v2801
    %v2804 = vmul.f32 %v2793, %v2802
    %v2805 = vmul.f32 %v2795, %v2803
    %v2806 = vmul.f32 %v1960, %v1027
    %v2807 = vmul.f32 %v1965, %v1027
    %2809 = vrot.lane.b32.xlu0 %v2806, 64
    %v2810 = vpop.permute.xlu0 %2809
    %v2813 = vsel %vm338, %v2804, 0
    %2815 = vmatprep.subr.mxu0 0.0
    %2816 = vmatpush1.msra.mxu0 %v2810
    %2817 = vmatprep.subr.mxu0 0.0
    %2818 = vmatpush1.msra.mxu0 0.0
    %2819 = vmatprep.subr.mxu0 0.0
    %2820 = vmatpush1.msra.mxu0 0.0
    %2821 = vmatprep.subr.mxu0 0.0
    %2822 = vmatpush1.msra.mxu0 0.0
    %2823 = vmatprep.subr.mxu0 0.0
    %2824 = vmatpush1.msra.mxu0 0.0
    %2825 = vmatprep.subr.mxu0 0.0
    %2826 = vmatpush1.msra.mxu0 0.0
    %2827 = vmatprep.subr.mxu0 0.0
    %2828 = vmatpush1.msra.mxu0 0.0
    %2829 = vmatprep.subr.mxu0 0.0
    %2830 = vmatpush1.msra.mxu0 0.0
    %2831 = vmatprep.subr.mxu0 0.0
    %2832 = vmatpush1.msra.mxu0 0.0
    %2833 = vmatprep.subr.mxu0 0.0
    %2834 = vmatpush1.msra.mxu0 0.0
    %2835 = vmatprep.subr.mxu0 0.0
    %2836 = vmatpush1.msra.mxu0 0.0
    %2837 = vmatprep.subr.mxu0 0.0
    %2838 = vmatpush1.msra.mxu0 0.0
    %2839 = vmatprep.subr.mxu0 0.0
    %2840 = vmatpush1.msra.mxu0 0.0
    %2841 = vmatprep.subr.mxu0 0.0
    %2842 = vmatpush1.msra.mxu0 0.0
    %2843 = vmatprep.subr.mxu0 0.0
    %2844 = vmatpush1.msra.mxu0 0.0
    %2845 = vmatprep.subr.mxu0 0.0
    %2846 = vmatpush1.msra.mxu0 0.0
    %2847 = vmatprep.subr.mxu0 0.0
    %2848 = vmatpush1.msra.mxu0 0.0
    %2849 = vmatprep.subr.mxu0 0.0
    %2850 = vmatpush1.msra.mxu0 0.0
    %2851 = vmatprep.subr.mxu0 0.0
    %2852 = vmatpush1.msra.mxu0 0.0
    %2853 = vmatprep.subr.mxu0 0.0
    %2854 = vmatpush1.msra.mxu0 0.0
    %2855 = vmatprep.subr.mxu0 0.0
    %2856 = vmatpush1.msra.mxu0 0.0
    %2857 = vmatprep.subr.mxu0 0.0
    %2858 = vmatpush1.msra.mxu0 0.0
    %2859 = vmatprep.subr.mxu0 0.0
    %2860 = vmatpush1.msra.mxu0 0.0
    %2861 = vmatprep.subr.mxu0 0.0
    %2862 = vmatpush1.msra.mxu0 0.0
    %2863 = vmatprep.subr.mxu0 0.0
    %2864 = vmatpush1.msra.mxu0 0.0
    %2865 = vmatprep.subr.mxu0 0.0
    %2866 = vmatpush1.msra.mxu0 0.0
    %2867 = vmatprep.subr.mxu0 0.0
    %2868 = vmatpush1.msra.mxu0 0.0
    %2869 = vmatprep.subr.mxu0 0.0
    %2870 = vmatpush1.msra.mxu0 0.0
    %2871 = vmatprep.subr.mxu0 0.0
    %2872 = vmatpush1.msra.mxu0 0.0
    %2873 = vmatprep.subr.mxu0 0.0
    %2874 = vmatpush1.msra.mxu0 0.0
    %2875 = vmatprep.subr.mxu0 0.0
    %2876 = vmatpush1.msra.mxu0 0.0
    %2877 = vmatprep.subr.mxu0 0.0
    %2878 = vmatpush1.msra.mxu0 0.0
    %2879 = vmatprep.mubr.f32.mxu0 0.0
    %2880 = vmatmul.mubr.f32.gmra.mrb[0].mxu0 %v2813
    %v2881 = vpop.f32.mrb[0].mxu0
    %v2882 = vadd.f32 0.0, %v2881
    %v2883 = vpop.f32.mrb[0].mxu0
    %2884 = vdwg.mxu0
    %2886 = vrot.lane.b32.xlu0 %v2807, 64
    %v2887 = vpop.permute.xlu0 %2886
    %v2890 = vsel %vm338, %v2805, 0
    %2892 = vmatprep.subr.mxu0 0.0
    %2893 = vmatpush1.msra.mxu0 %v2887
    %2894 = vmatprep.subr.mxu0 0.0
    %2895 = vmatpush1.msra.mxu0 0.0
    %2896 = vmatprep.subr.mxu0 0.0
    %2897 = vmatpush1.msra.mxu0 0.0
    %2898 = vmatprep.subr.mxu0 0.0
    %2899 = vmatpush1.msra.mxu0 0.0
    %2900 = vmatprep.subr.mxu0 0.0
    %2901 = vmatpush1.msra.mxu0 0.0
    %2902 = vmatprep.subr.mxu0 0.0
    %2903 = vmatpush1.msra.mxu0 0.0
    %2904 = vmatprep.subr.mxu0 0.0
    %2905 = vmatpush1.msra.mxu0 0.0
    %2906 = vmatprep.subr.mxu0 0.0
    %2907 = vmatpush1.msra.mxu0 0.0
    %2908 = vmatprep.subr.mxu0 0.0
    %2909 = vmatpush1.msra.mxu0 0.0
    %2910 = vmatprep.subr.mxu0 0.0
    %2911 = vmatpush1.msra.mxu0 0.0
    %2912 = vmatprep.subr.mxu0 0.0
    %2913 = vmatpush1.msra.mxu0 0.0
    %2914 = vmatprep.subr.mxu0 0.0
    %2915 = vmatpush1.msra.mxu0 0.0
    %2916 = vmatprep.subr.mxu0 0.0
    %2917 = vmatpush1.msra.mxu0 0.0
    %2918 = vmatprep.subr.mxu0 0.0
    %2919 = vmatpush1.msra.mxu0 0.0
    %2920 = vmatprep.subr.mxu0 0.0
    %2921 = vmatpush1.msra.mxu0 0.0
    %2922 = vmatprep.subr.mxu0 0.0
    %2923 = vmatpush1.msra.mxu0 0.0
    %2924 = vmatprep.subr.mxu0 0.0
    %2925 = vmatpush1.msra.mxu0 0.0
    %2926 = vmatprep.subr.mxu0 0.0
    %2927 = vmatpush1.msra.mxu0 0.0
    %2928 = vmatprep.subr.mxu0 0.0
    %2929 = vmatpush1.msra.mxu0 0.0
    %2930 = vmatprep.subr.mxu0 0.0
    %2931 = vmatpush1.msra.mxu0 0.0
    %2932 = vmatprep.subr.mxu0 0.0
    %2933 = vmatpush1.msra.mxu0 0.0
    %2934 = vmatprep.subr.mxu0 0.0
    %2935 = vmatpush1.msra.mxu0 0.0
    %2936 = vmatprep.subr.mxu0 0.0
    %2937 = vmatpush1.msra.mxu0 0.0
    %2938 = vmatprep.subr.mxu0 0.0
    %2939 = vmatpush1.msra.mxu0 0.0
    %2940 = vmatprep.subr.mxu0 0.0
    %2941 = vmatpush1.msra.mxu0 0.0
    %2942 = vmatprep.subr.mxu0 0.0
    %2943 = vmatpush1.msra.mxu0 0.0
    %2944 = vmatprep.subr.mxu0 0.0
    %2945 = vmatpush1.msra.mxu0 0.0
    %2946 = vmatprep.subr.mxu0 0.0
    %2947 = vmatpush1.msra.mxu0 0.0
    %2948 = vmatprep.subr.mxu0 0.0
    %2949 = vmatpush1.msra.mxu0 0.0
    %2950 = vmatprep.subr.mxu0 0.0
    %2951 = vmatpush1.msra.mxu0 0.0
    %2952 = vmatprep.subr.mxu0 0.0
    %2953 = vmatpush1.msra.mxu0 0.0
    %2954 = vmatprep.subr.mxu0 0.0
    %2955 = vmatpush1.msra.mxu0 0.0
    %2956 = vmatprep.mubr.f32.mxu0 0.0
    %2957 = vmatmul.mubr.f32.gmra.mrb[0].mxu0 %v2890
    %v2958 = vpop.f32.mrb[0].mxu0
    %v2959 = vadd.f32 0.0, %v2958
    %v2960 = vpop.f32.mrb[0].mxu0
    %2961 = vdwg.mxu0
    %v2962 = vadd.f32 %v2554, %v2882
    %v2963 = vadd.f32 %v2631, %v2959
    %v2964 = vmul.f32 %v1960, %v47
    %v2965 = vmul.f32 %v1965, %v47
    %v2967 = vsel %vm49, %v2964, 0
    %2969 = vmatprep.subr.mxu0 0.0
    %2970 = vmatpush1.xpose.msra.mxu0 %v1976
    %2971 = vmatprep.subr.mxu0 0.0
    %2972 = vmatpush1.xpose.msra.mxu0 0.0
    %2973 = vmatprep.subr.mxu0 0.0
    %2974 = vmatpush1.xpose.msra.mxu0 0.0
    %2975 = vmatprep.subr.mxu0 0.0
    %2976 = vmatpush1.xpose.msra.mxu0 0.0
    %2977 = vmatprep.subr.mxu0 0.0
    %2978 = vmatpush1.xpose.msra.mxu0 0.0
    %2979 = vmatprep.subr.mxu0 0.0
    %2980 = vmatpush1.xpose.msra.mxu0 0.0
    %2981 = vmatprep.subr.mxu0 0.0
    %2982 = vmatpush1.xpose.msra.mxu0 0.0
    %2983 = vmatprep.subr.mxu0 0.0
    %2984 = vmatpush1.xpose.msra.mxu0 0.0
    %2985 = vmatprep.subr.mxu0 0.0
    %2986 = vmatpush1.xpose.msra.mxu0 0.0
    %2987 = vmatprep.subr.mxu0 0.0
    %2988 = vmatpush1.xpose.msra.mxu0 0.0
    %2989 = vmatprep.subr.mxu0 0.0
    %2990 = vmatpush1.xpose.msra.mxu0 0.0
    %2991 = vmatprep.subr.mxu0 0.0
    %2992 = vmatpush1.xpose.msra.mxu0 0.0
    %2993 = vmatprep.subr.mxu0 0.0
    %2994 = vmatpush1.xpose.msra.mxu0 0.0
    %2995 = vmatprep.subr.mxu0 0.0
    %2996 = vmatpush1.xpose.msra.mxu0 0.0
    %2997 = vmatprep.subr.mxu0 0.0
    %2998 = vmatpush1.xpose.msra.mxu0 0.0
    %2999 = vmatprep.subr.mxu0 0.0
    %3000 = vmatpush1.xpose.msra.mxu0 0.0
    %3001 = vmatprep.subr.mxu0 0.0
    %3002 = vmatpush1.xpose.msra.mxu0 0.0
    %3003 = vmatprep.subr.mxu0 0.0
    %3004 = vmatpush1.xpose.msra.mxu0 0.0
    %3005 = vmatprep.subr.mxu0 0.0
    %3006 = vmatpush1.xpose.msra.mxu0 0.0
    %3007 = vmatprep.subr.mxu0 0.0
    %3008 = vmatpush1.xpose.msra.mxu0 0.0
    %3009 = vmatprep.subr.mxu0 0.0
    %3010 = vmatpush1.xpose.msra.mxu0 0.0
    %3011 = vmatprep.subr.mxu0 0.0
    %3012 = vmatpush1.xpose.msra.mxu0 0.0
    %3013 = vmatprep.subr.mxu0 0.0
    %3014 = vmatpush1.xpose.msra.mxu0 0.0
    %3015 = vmatprep.subr.mxu0 0.0
    %3016 = vmatpush1.xpose.msra.mxu0 0.0
    %3017 = vmatprep.subr.mxu0 0.0
    %3018 = vmatpush1.xpose.msra.mxu0 0.0
    %3019 = vmatprep.subr.mxu0 0.0
    %3020 = vmatpush1.xpose.msra.mxu0 0.0
    %3021 = vmatprep.subr.mxu0 0.0
    %3022 = vmatpush1.xpose.msra.mxu0 0.0
    %3023 = vmatprep.subr.mxu0 0.0
    %3024 = vmatpush1.xpose.msra.mxu0 0.0
    %3025 = vmatprep.subr.mxu0 0.0
    %3026 = vmatpush1.xpose.msra.mxu0 0.0
    %3027 = vmatprep.subr.mxu0 0.0
    %3028 = vmatpush1.xpose.msra.mxu0 0.0
    %3029 = vmatprep.subr.mxu0 0.0
    %3030 = vmatpush1.xpose.msra.mxu0 0.0
    %3031 = vmatprep.subr.mxu0 0.0
    %3032 = vmatpush1.xpose.msra.mxu0 0.0
    %3033 = vmatprep.mubr.f32.mxu0 0.0
    %3034 = vmatmul.mubr.f32.gmra.mrb[0].mxu0 %v2967
    %v3035 = vpop.f32.mrb[0].mxu0
    %v3036 = vadd.f32 0.0, %v3035
    %v3037 = vpop.f32.mrb[0].mxu0
    %3038 = vdwg.mxu0
    %v3040 = vsel %vm49, %v2965, 0
    %3042 = vmatprep.subr.mxu0 0.0
    %3043 = vmatpush1.xpose.msra.mxu0 %v2054
    %3044 = vmatprep.subr.mxu0 0.0
    %3045 = vmatpush1.xpose.msra.mxu0 0.0
    %3046 = vmatprep.subr.mxu0 0.0
    %3047 = vmatpush1.xpose.msra.mxu0 0.0
    %3048 = vmatprep.subr.mxu0 0.0
    %3049 = vmatpush1.xpose.msra.mxu0 0.0
    %3050 = vmatprep.subr.mxu0 0.0
    %3051 = vmatpush1.xpose.msra.mxu0 0.0
    %3052 = vmatprep.subr.mxu0 0.0
    %3053 = vmatpush1.xpose.msra.mxu0 0.0
    %3054 = vmatprep.subr.mxu0 0.0
    %3055 = vmatpush1.xpose.msra.mxu0 0.0
    %3056 = vmatprep.subr.mxu0 0.0
    %3057 = vmatpush1.xpose.msra.mxu0 0.0
    %3058 = vmatprep.subr.mxu0 0.0
    %3059 = vmatpush1.xpose.msra.mxu0 0.0
    %3060 = vmatprep.subr.mxu0 0.0
    %3061 = vmatpush1.xpose.msra.mxu0 0.0
    %3062 = vmatprep.subr.mxu0 0.0
    %3063 = vmatpush1.xpose.msra.mxu0 0.0
    %3064 = vmatprep.subr.mxu0 0.0
    %3065 = vmatpush1.xpose.msra.mxu0 0.0
    %3066 = vmatprep.subr.mxu0 0.0
    %3067 = vmatpush1.xpose.msra.mxu0 0.0
    %3068 = vmatprep.subr.mxu0 0.0
    %3069 = vmatpush1.xpose.msra.mxu0 0.0
    %3070 = vmatprep.subr.mxu0 0.0
    %3071 = vmatpush1.xpose.msra.mxu0 0.0
    %3072 = vmatprep.subr.mxu0 0.0
    %3073 = vmatpush1.xpose.msra.mxu0 0.0
    %3074 = vmatprep.subr.mxu0 0.0
    %3075 = vmatpush1.xpose.msra.mxu0 0.0
    %3076 = vmatprep.subr.mxu0 0.0
    %3077 = vmatpush1.xpose.msra.mxu0 0.0
    %3078 = vmatprep.subr.mxu0 0.0
    %3079 = vmatpush1.xpose.msra.mxu0 0.0
    %3080 = vmatprep.subr.mxu0 0.0
    %3081 = vmatpush1.xpose.msra.mxu0 0.0
    %3082 = vmatprep.subr.mxu0 0.0
    %3083 = vmatpush1.xpose.msra.mxu0 0.0
    %3084 = vmatprep.subr.mxu0 0.0
    %3085 = vmatpush1.xpose.msra.mxu0 0.0
    %3086 = vmatprep.subr.mxu0 0.0
    %3087 = vmatpush1.xpose.msra.mxu0 0.0
    %3088 = vmatprep.subr.mxu0 0.0
    %3089 = vmatpush1.xpose.msra.mxu0 0.0
    %3090 = vmatprep.subr.mxu0 0.0
    %3091 = vmatpush1.xpose.msra.mxu0 0.0
    %3092 = vmatprep.subr.mxu0 0.0
    %3093 = vmatpush1.xpose.msra.mxu0 0.0
    %3094 = vmatprep.subr.mxu0 0.0
    %3095 = vmatpush1.xpose.msra.mxu0 0.0
    %3096 = vmatprep.subr.mxu0 0.0
    %3097 = vmatpush1.xpose.msra.mxu0 0.0
    %3098 = vmatprep.subr.mxu0 0.0
    %3099 = vmatpush1.xpose.msra.mxu0 0.0
    %3100 = vmatprep.subr.mxu0 0.0
    %3101 = vmatpush1.xpose.msra.mxu0 0.0
    %3102 = vmatprep.subr.mxu0 0.0
    %3103 = vmatpush1.xpose.msra.mxu0 0.0
    %3104 = vmatprep.subr.mxu0 0.0
    %3105 = vmatpush1.xpose.msra.mxu0 0.0
    %3106 = vmatprep.mubr.f32.mxu0 0.0
    %3107 = vmatmul.mubr.f32.gmra.mrb[0].mxu0 %v3040
    %v3108 = vpop.f32.mrb[0].mxu0
    %v3109 = vadd.f32 0.0, %v3108
    %v3110 = vpop.f32.mrb[0].mxu0
    %3111 = vdwg.mxu0
    %v3112 = vmul.f32 %v3036, 0.35355338
    %v3113 = vmul.f32 %v3109, 0.35355338
    %v3114 = vsel %vm338, %v3112, -inf
    %3115 = vmax.xlane.f32.xlu0 %v3114
    %v3116 = vpop.xlane.xlu0 %3115
    %v3117 = vsel %vm338, %v3113, -inf
    %3118 = vmax.xlane.f32.xlu0 %v3117
    %v3119 = vpop.xlane.xlu0 %3118
    %v3120 = vsub.f32 %v3112, %v3116
    %v3121 = vsub.f32 %v3113, %v3119
    %v3122 = vmul.f32 %v3120, 1.442695
    %v3123 = vpow.pop %v3122
    %v3124 = vmul.f32 %v3121, 1.442695
    %v3125 = vpow.pop %v3124
    %v3126 = vsel %vm338, %v3123, 0.0
    %3127 = vadd.xlane.f32.xlu0 %v3126
    %v3128 = vpop.xlane.xlu0 %3127
    %v3129 = vsel %vm338, %v3125, 0.0
    %3130 = vadd.xlane.f32.xlu0 %v3129
    %v3131 = vpop.xlane.xlu0 %3130
    %v3132 = vrcp.pop %v3128
    %v3133 = vrcp.pop %v3131
    %v3134 = vmul.f32 %v3123, %v3132
    %v3135 = vmul.f32 %v3125, %v3133
    %v3136 = vmul.f32 %v1960, %v1361
    %v3137 = vmul.f32 %v1965, %v1361
    %3139 = vrot.lane.b32.xlu0 %v3136, 64
    %v3140 = vpop.permute.xlu0 %3139
    %v3143 = vsel %vm338, %v3134, 0
    %3145 = vmatprep.subr.mxu0 0.0
    %3146 = vmatpush1.msra.mxu0 %v3140
    %3147 = vmatprep.subr.mxu0 0.0
    %3148 = vmatpush1.msra.mxu0 0.0
    %3149 = vmatprep.subr.mxu0 0.0
    %3150 = vmatpush1.msra.mxu0 0.0
    %3151 = vmatprep.subr.mxu0 0.0
    %3152 = vmatpush1.msra.mxu0 0.0
    %3153 = vmatprep.subr.mxu0 0.0
    %3154 = vmatpush1.msra.mxu0 0.0
    %3155 = vmatprep.subr.mxu0 0.0
    %3156 = vmatpush1.msra.mxu0 0.0
    %3157 = vmatprep.subr.mxu0 0.0
    %3158 = vmatpush1.msra.mxu0 0.0
    %3159 = vmatprep.subr.mxu0 0.0
    %3160 = vmatpush1.msra.mxu0 0.0
    %3161 = vmatprep.subr.mxu0 0.0
    %3162 = vmatpush1.msra.mxu0 0.0
    %3163 = vmatprep.subr.mxu0 0.0
    %3164 = vmatpush1.msra.mxu0 0.0
    %3165 = vmatprep.subr.mxu0 0.0
    %3166 = vmatpush1.msra.mxu0 0.0
    %3167 = vmatprep.subr.mxu0 0.0
    %3168 = vmatpush1.msra.mxu0 0.0
    %3169 = vmatprep.subr.mxu0 0.0
    %3170 = vmatpush1.msra.mxu0 0.0
    %3171 = vmatprep.subr.mxu0 0.0
    %3172 = vmatpush1.msra.mxu0 0.0
    %3173 = vmatprep.subr.mxu0 0.0
    %3174 = vmatpush1.msra.mxu0 0.0
    %3175 = vmatprep.subr.mxu0 0.0
    %3176 = vmatpush1.msra.mxu0 0.0
    %3177 = vmatprep.subr.mxu0 0.0
    %3178 = vmatpush1.msra.mxu0 0.0
    %3179 = vmatprep.subr.mxu0 0.0
    %3180 = vmatpush1.msra.mxu0 0.0
    %3181 = vmatprep.subr.mxu0 0.0
    %3182 = vmatpush1.msra.mxu0 0.0
    %3183 = vmatprep.subr.mxu0 0.0
    %3184 = vmatpush1.msra.mxu0 0.0
    %3185 = vmatprep.subr.mxu0 0.0
    %3186 = vmatpush1.msra.mxu0 0.0
    %3187 = vmatprep.subr.mxu0 0.0
    %3188 = vmatpush1.msra.mxu0 0.0
    %3189 = vmatprep.subr.mxu0 0.0
    %3190 = vmatpush1.msra.mxu0 0.0
    %3191 = vmatprep.subr.mxu0 0.0
    %3192 = vmatpush1.msra.mxu0 0.0
    %3193 = vmatprep.subr.mxu0 0.0
    %3194 = vmatpush1.msra.mxu0 0.0
    %3195 = vmatprep.subr.mxu0 0.0
    %3196 = vmatpush1.msra.mxu0 0.0
    %3197 = vmatprep.subr.mxu0 0.0
    %3198 = vmatpush1.msra.mxu0 0.0
    %3199 = vmatprep.subr.mxu0 0.0
    %3200 = vmatpush1.msra.mxu0 0.0
    %3201 = vmatprep.subr.mxu0 0.0
    %3202 = vmatpush1.msra.mxu0 0.0
    %3203 = vmatprep.subr.mxu0 0.0
    %3204 = vmatpush1.msra.mxu0 0.0
    %3205 = vmatprep.subr.mxu0 0.0
    %3206 = vmatpush1.msra.mxu0 0.0
    %3207 = vmatprep.subr.mxu0 0.0
    %3208 = vmatpush1.msra.mxu0 0.0
    %3209 = vmatprep.mubr.f32.mxu0 0.0
    %3210 = vmatmul.mubr.f32.gmra.mrb[0].mxu0 %v3143
    %v3211 = vpop.f32.mrb[0].mxu0
    %v3212 = vadd.f32 0.0, %v3211
    %v3213 = vpop.f32.mrb[0].mxu0
    %3214 = vdwg.mxu0
    %3216 = vrot.lane.b32.xlu0 %v3137, 64
    %v3217 = vpop.permute.xlu0 %3216
    %v3220 = vsel %vm338, %v3135, 0
    %3222 = vmatprep.subr.mxu0 0.0
    %3223 = vmatpush1.msra.mxu0 %v3217
    %3224 = vmatprep.subr.mxu0 0.0
    %3225 = vmatpush1.msra.mxu0 0.0
    %3226 = vmatprep.subr.mxu0 0.0
    %3227 = vmatpush1.msra.mxu0 0.0
    %3228 = vmatprep.subr.mxu0 0.0
    %3229 = vmatpush1.msra.mxu0 0.0
    %3230 = vmatprep.subr.mxu0 0.0
    %3231 = vmatpush1.msra.mxu0 0.0
    %3232 = vmatprep.subr.mxu0 0.0
    %3233 = vmatpush1.msra.mxu0 0.0
    %3234 = vmatprep.subr.mxu0 0.0
    %3235 = vmatpush1.msra.mxu0 0.0
    %3236 = vmatprep.subr.mxu0 0.0
    %3237 = vmatpush1.msra.mxu0 0.0
    %3238 = vmatprep.subr.mxu0 0.0
    %3239 = vmatpush1.msra.mxu0 0.0
    %3240 = vmatprep.subr.mxu0 0.0
    %3241 = vmatpush1.msra.mxu0 0.0
    %3242 = vmatprep.subr.mxu0 0.0
    %3243 = vmatpush1.msra.mxu0 0.0
    %3244 = vmatprep.subr.mxu0 0.0
    %3245 = vmatpush1.msra.mxu0 0.0
    %3246 = vmatprep.subr.mxu0 0.0
    %3247 = vmatpush1.msra.mxu0 0.0
    %3248 = vmatprep.subr.mxu0 0.0
    %3249 = vmatpush1.msra.mxu0 0.0
    %3250 = vmatprep.subr.mxu0 0.0
    %3251 = vmatpush1.msra.mxu0 0.0
    %3252 = vmatprep.subr.mxu0 0.0
    %3253 = vmatpush1.msra.mxu0 0.0
    %3254 = vmatprep.subr.mxu0 0.0
    %3255 = vmatpush1.msra.mxu0 0.0
    %3256 = vmatprep.subr.mxu0 0.0
    %3257 = vmatpush1.msra.mxu0 0.0
    %3258 = vmatprep.subr.mxu0 0.0
    %3259 = vmatpush1.msra.mxu0 0.0
    %3260 = vmatprep.subr.mxu0 0.0
    %3261 = vmatpush1.msra.mxu0 0.0
    %3262 = vmatprep.subr.mxu0 0.0
    %3263 = vmatpush1.msra.mxu0 0.0
    %3264 = vmatprep.subr.mxu0 0.0
    %3265 = vmatpush1.msra.mxu0 0.0
    %3266 = vmatprep.subr.mxu0 0.0
    %3267 = vmatpush1.msra.mxu0 0.0
    %3268 = vmatprep.subr.mxu0 0.0
    %3269 = vmatpush1.msra.mxu0 0.0
    %3270 = vmatprep.subr.mxu0 0.0
    %3271 = vmatpush1.msra.mxu0 0.0
    %3272 = vmatprep.subr.mxu0 0.0
    %3273 = vmatpush1.msra.mxu0 0.0
    %3274 = vmatprep.subr.mxu0 0.0
    %3275 = vmatpush1.msra.mxu0 0.0
    %3276 = vmatprep.subr.mxu0 0.0
    %3277 = vmatpush1.msra.mxu0 0.0
    %3278 = vmatprep.subr.mxu0 0.0
    %3279 = vmatpush1.msra.mxu0 0.0
    %3280 = vmatprep.subr.mxu0 0.0
    %3281 = vmatpush1.msra.mxu0 0.0
    %3282 = vmatprep.subr.mxu0 0.0
    %3283 = vmatpush1.msra.mxu0 0.0
    %3284 = vmatprep.subr.mxu0 0.0
    %3285 = vmatpush1.msra.mxu0 0.0
    %3286 = vmatprep.mubr.f32.mxu0 0.0
    %3287 = vmatmul.mubr.f32.gmra.mrb[0].mxu0 %v3220
    %v3288 = vpop.f32.mrb[0].mxu0
    %v3289 = vadd.f32 0.0, %v3288
    %v3290 = vpop.f32.mrb[0].mxu0
    %3291 = vdwg.mxu0
    %v3292 = vadd.f32 %v2962, %v3212
    %v3293 = vadd.f32 %v2963, %v3289
    %s3294 = scalar_lea.vmem %s2, 32
    %v3295 = vld [vmem:[%s3294] sm:$0xff]
    %v3296 = vld [vmem:[%s3294 + $0x8] sm:$0xff]
    %v3297 = vld [vmem:[%s3294 + $0x10] sm:$0xff]
    %v3298 = vld [vmem:[%s3294 + $0x18] sm:$0xff]
    %v3299 = vlaneseq
    %v3300 = vshrl.u32 %v3299, 7
    %v3301 = vsub.s32 3, %v3300
    %v3302 = vrot.slane %v1839, %v3301
    %v3304 = vsel %vm49, %v3292, 0
    %v3307 = vsel %vm49, %v3293, 0
    %3309 = vmatprep.subr.mxu0 0.0
    %3310 = vmatpush1.msra.mxu0 %v3295
    %3311 = vmatprep.subr.mxu0 0.0
    %3312 = vmatpush1.msra.mxu0 %v3296
    %3313 = vmatprep.subr.mxu0 0.0
    %3314 = vmatpush1.msra.mxu0 %v3297
    %3315 = vmatprep.subr.mxu0 0.0
    %3316 = vmatpush1.msra.mxu0 %v3298
    %3317 = vmatprep.subr.mxu0 0.0
    %3318 = vmatpush1.msra.mxu0 0.0
    %3319 = vmatprep.subr.mxu0 0.0
    %3320 = vmatpush1.msra.mxu0 0.0
    %3321 = vmatprep.subr.mxu0 0.0
    %3322 = vmatpush1.msra.mxu0 0.0
    %3323 = vmatprep.subr.mxu0 0.0
    %3324 = vmatpush1.msra.mxu0 0.0
    %3325 = vmatprep.subr.mxu0 0.0
    %3326 = vmatpush1.msra.mxu0 0.0
    %3327 = vmatprep.subr.mxu0 0.0
    %3328 = vmatpush1.msra.mxu0 0.0
    %3329 = vmatprep.subr.mxu0 0.0
    %3330 = vmatpush1.msra.mxu0 0.0
    %3331 = vmatprep.subr.mxu0 0.0
    %3332 = vmatpush1.msra.mxu0 0.0
    %3333 = vmatprep.subr.mxu0 0.0
    %3334 = vmatpush1.msra.mxu0 0.0
    %3335 = vmatprep.subr.mxu0 0.0
    %3336 = vmatpush1.msra.mxu0 0.0
    %3337 = vmatprep.subr.mxu0 0.0
    %3338 = vmatpush1.msra.mxu0 0.0
    %3339 = vmatprep.subr.mxu0 0.0
    %3340 = vmatpush1.msra.mxu0 0.0
    %3341 = vmatprep.subr.mxu0 0.0
    %3342 = vmatpush1.msra.mxu0 0.0
    %3343 = vmatprep.subr.mxu0 0.0
    %3344 = vmatpush1.msra.mxu0 0.0
    %3345 = vmatprep.subr.mxu0 0.0
    %3346 = vmatpush1.msra.mxu0 0.0
    %3347 = vmatprep.subr.mxu0 0.0
    %3348 = vmatpush1.msra.mxu0 0.0
    %3349 = vmatprep.subr.mxu0 0.0
    %3350 = vmatpush1.msra.mxu0 0.0
    %3351 = vmatprep.subr.mxu0 0.0
    %3352 = vmatpush1.msra.mxu0 0.0
    %3353 = vmatprep.subr.mxu0 0.0
    %3354 = vmatpush1.msra.mxu0 0.0
    %3355 = vmatprep.subr.mxu0 0.0
    %3356 = vmatpush1.msra.mxu0 0.0
    %3357 = vmatprep.subr.mxu0 0.0
    %3358 = vmatpush1.msra.mxu0 0.0
    %3359 = vmatprep.subr.mxu0 0.0
    %3360 = vmatpush1.msra.mxu0 0.0
    %3361 = vmatprep.subr.mxu0 0.0
    %3362 = vmatpush1.msra.mxu0 0.0
    %3363 = vmatprep.subr.mxu0 0.0
    %3364 = vmatpush1.msra.mxu0 0.0
    %3365 = vmatprep.subr.mxu0 0.0
    %3366 = vmatpush1.msra.mxu0 0.0
    %3367 = vmatprep.subr.mxu0 0.0
    %3368 = vmatpush1.msra.mxu0 0.0
    %3369 = vmatprep.subr.mxu0 0.0
    %3370 = vmatpush1.msra.mxu0 0.0
    %3371 = vmatprep.subr.mxu0 0.0
    %3372 = vmatpush1.msra.mxu0 0.0
    %3373 = vmatprep.mubr.f32.mxu0 0.0
    %3374 = vmatmul.mubr.f32.gmra.mrb[0].mxu0 %v3304
    %v3375 = vpop.f32.mrb[0].mxu0
    %v3376 = vadd.f32 %v3302, %v3375
    %v3377 = vpop.f32.mrb[0].mxu0
    %3378 = vmatprep.mubr.f32.mxu0 0.0
    %3379 = vmatmul.mubr.f32.gmra.mrb[0].mxu0 %v3307
    %v3380 = vpop.f32.mrb[0].mxu0
    %v3381 = vadd.f32 %v3302, %v3380
    %v3382 = vpop.f32.mrb[0].mxu0
    %3383 = vdwg.mxu0
    %v3384 = vadd.f32 %v1836, %v3376
    %v3385 = vadd.f32 %v1837, %v3381
    %v3386 = vsel %vm49, %v3384, 0.0
    %3387 = vadd.xlane.f32.xlu0 %v3386
    %v3388 = vpop.xlane.xlu0 %3387
    %v3389 = vsel %vm49, %v3385, 0.0
    %3390 = vadd.xlane.f32.xlu0 %v3389
    %v3391 = vpop.xlane.xlu0 %3390
    %v3392 = vmul.f32 %v3388, %v56
    %v3393 = vmul.f32 %v3391, %v56
    %v3394 = vsub.f32 %v3384, %v3392
    %v3395 = vsub.f32 %v3385, %v3393
    %v3396 = vmul.f32 %v3394, %v3394
    %v3397 = vmul.f32 %v3395, %v3395
    %v3398 = vsel %vm49, %v3396, 0.0
    %3399 = vadd.xlane.f32.xlu0 %v3398
    %v3400 = vpop.xlane.xlu0 %3399
    %v3401 = vsel %vm49, %v3397, 0.0
    %3402 = vadd.xlane.f32.xlu0 %v3401
    %v3403 = vpop.xlane.xlu0 %3402
    %v3404 = vmul.f32 %v3400, %v56
    %v3405 = vmul.f32 %v3403, %v56
    %v3406 = vadd.f32 %v3404, 1e-05
    %v3407 = vadd.f32 %v3405, 1e-05
    %v3408 = vrsqrt.pop %v3406
    %v3409 = vrsqrt.pop %v3407
    %v3410 = vmul.f32 %v3394, %v3408
    %v3411 = vmul.f32 %v3395, %v3409
    %v3412 = vlaneseq
    %v3413 = vshrl.u32 %v3412, 7
    %v3414 = vsub.s32 4, %v3413
    %v3415 = vrot.slane %v1839, %v3414
    %v3416 = vmul.f32 %v3410, %v3415
    %v3417 = vmul.f32 %v3411, %v3415
    %v3418 = vlaneseq
    %v3419 = vshrl.u32 %v3418, 7
    %v3420 = vsub.s32 5, %v3419
    %v3421 = vrot.slane %v1839, %v3420
    %v3422 = vadd.f32 %v3416, %v3421
    %v3423 = vadd.f32 %v3417, %v3421
    %s3424 = scalar_lea.vmem %s3, 32
    %v3425 = vld [vmem:[%s3424] sm:$0xff]
    %v3426 = vld [vmem:[%s3424 + $0x8] sm:$0xff]
    %v3427 = vld [vmem:[%s3424 + $0x10] sm:$0xff]
    %v3428 = vld [vmem:[%s3424 + $0x18] sm:$0xff]
    %v3429 = vlaneseq
    %v3430 = vshrl.u32 %v3429, 7
    %v3431 = vsub.s32 6, %v3430
    %v3432 = vrot.slane %v1839, %v3431
    %v3434 = vsel %vm49, %v3422, 0
    %v3437 = vsel %vm49, %v3423, 0
    %3439 = vmatprep.subr.mxu0 0.0
    %3440 = vmatpush1.msra.mxu0 %v3425
    %3441 = vmatprep.subr.mxu0 0.0
    %3442 = vmatpush1.msra.mxu0 %v3426
    %3443 = vmatprep.subr.mxu0 0.0
    %3444 = vmatpush1.msra.mxu0 %v3427
    %3445 = vmatprep.subr.mxu0 0.0
    %3446 = vmatpush1.msra.mxu0 %v3428
    %3447 = vmatprep.subr.mxu0 0.0
    %3448 = vmatpush1.msra.mxu0 0.0
    %3449 = vmatprep.subr.mxu0 0.0
    %3450 = vmatpush1.msra.mxu0 0.0
    %3451 = vmatprep.subr.mxu0 0.0
    %3452 = vmatpush1.msra.mxu0 0.0
    %3453 = vmatprep.subr.mxu0 0.0
    %3454 = vmatpush1.msra.mxu0 0.0
    %3455 = vmatprep.subr.mxu0 0.0
    %3456 = vmatpush1.msra.mxu0 0.0
    %3457 = vmatprep.subr.mxu0 0.0
    %3458 = vmatpush1.msra.mxu0 0.0
    %3459 = vmatprep.subr.mxu0 0.0
    %3460 = vmatpush1.msra.mxu0 0.0
    %3461 = vmatprep.subr.mxu0 0.0
    %3462 = vmatpush1.msra.mxu0 0.0
    %3463 = vmatprep.subr.mxu0 0.0
    %3464 = vmatpush1.msra.mxu0 0.0
    %3465 = vmatprep.subr.mxu0 0.0
    %3466 = vmatpush1.msra.mxu0 0.0
    %3467 = vmatprep.subr.mxu0 0.0
    %3468 = vmatpush1.msra.mxu0 0.0
    %3469 = vmatprep.subr.mxu0 0.0
    %3470 = vmatpush1.msra.mxu0 0.0
    %3471 = vmatprep.subr.mxu0 0.0
    %3472 = vmatpush1.msra.mxu0 0.0
    %3473 = vmatprep.subr.mxu0 0.0
    %3474 = vmatpush1.msra.mxu0 0.0
    %3475 = vmatprep.subr.mxu0 0.0
    %3476 = vmatpush1.msra.mxu0 0.0
    %3477 = vmatprep.subr.mxu0 0.0
    %3478 = vmatpush1.msra.mxu0 0.0
    %3479 = vmatprep.subr.mxu0 0.0
    %3480 = vmatpush1.msra.mxu0 0.0
    %3481 = vmatprep.subr.mxu0 0.0
    %3482 = vmatpush1.msra.mxu0 0.0
    %3483 = vmatprep.subr.mxu0 0.0
    %3484 = vmatpush1.msra.mxu0 0.0
    %3485 = vmatprep.subr.mxu0 0.0
    %3486 = vmatpush1.msra.mxu0 0.0
    %3487 = vmatprep.subr.mxu0 0.0
    %3488 = vmatpush1.msra.mxu0 0.0
    %3489 = vmatprep.subr.mxu0 0.0
    %3490 = vmatpush1.msra.mxu0 0.0
    %3491 = vmatprep.subr.mxu0 0.0
    %3492 = vmatpush1.msra.mxu0 0.0
    %3493 = vmatprep.subr.mxu0 0.0
    %3494 = vmatpush1.msra.mxu0 0.0
    %3495 = vmatprep.subr.mxu0 0.0
    %3496 = vmatpush1.msra.mxu0 0.0
    %3497 = vmatprep.subr.mxu0 0.0
    %3498 = vmatpush1.msra.mxu0 0.0
    %3499 = vmatprep.subr.mxu0 0.0
    %3500 = vmatpush1.msra.mxu0 0.0
    %3501 = vmatprep.subr.mxu0 0.0
    %3502 = vmatpush1.msra.mxu0 0.0
    %3503 = vmatprep.mubr.f32.mxu0 0.0
    %3504 = vmatmul.mubr.f32.gmra.mrb[0].mxu0 %v3434
    %v3505 = vpop.f32.mrb[0].mxu0
    %v3506 = vadd.f32 %v3432, %v3505
    %v3507 = vpop.f32.mrb[0].mxu0
    %3508 = vmatprep.mubr.f32.mxu0 0.0
    %3509 = vmatmul.mubr.f32.gmra.mrb[0].mxu0 %v3437
    %v3510 = vpop.f32.mrb[0].mxu0
    %v3511 = vadd.f32 %v3432, %v3510
    %v3512 = vpop.f32.mrb[0].mxu0
    %3513 = vdwg.mxu0
    %v3514 = vmax.f32 %v3506, 0.0
    %v3515 = vmax.f32 %v3511, 0.0
    %s3516 = scalar_lea.vmem %s4, 128
    %v3517 = vld [vmem:[%s3516] sm:$0xff]
    %v3518 = vld [vmem:[%s3516 + $0x8] sm:$0xff]
    %v3519 = vld [vmem:[%s3516 + $0x10] sm:$0xff]
    %v3520 = vld [vmem:[%s3516 + $0x18] sm:$0xff]
    %v3521 = vld [vmem:[%s3516 + $0x20] sm:$0xff]
    %v3522 = vld [vmem:[%s3516 + $0x28] sm:$0xff]
    %v3523 = vld [vmem:[%s3516 + $0x30] sm:$0xff]
    %v3524 = vld [vmem:[%s3516 + $0x38] sm:$0xff]
    %v3525 = vld [vmem:[%s3516 + $0x40] sm:$0xff]
    %v3526 = vld [vmem:[%s3516 + $0x48] sm:$0xff]
    %v3527 = vld [vmem:[%s3516 + $0x50] sm:$0xff]
    %v3528 = vld [vmem:[%s3516 + $0x58] sm:$0xff]
    %v3529 = vld [vmem:[%s3516 + $0x60] sm:$0xff]
    %v3530 = vld [vmem:[%s3516 + $0x68] sm:$0xff]
    %v3531 = vld [vmem:[%s3516 + $0x70] sm:$0xff]
    %v3532 = vld [vmem:[%s3516 + $0x78] sm:$0xff]
    %v3533 = vlaneseq
    %v3534 = vshrl.u32 %v3533, 7
    %v3535 = vsub.s32 7, %v3534
    %v3536 = vrot.slane %v1839, %v3535
    %3537 = vmatprep.subr.mxu0 0.0
    %3538 = vmatpush1.msra.mxu0 %v3517
    %3539 = vmatprep.subr.mxu0 0.0
    %3540 = vmatpush1.msra.mxu0 %v3518
    %3541 = vmatprep.subr.mxu0 0.0
    %3542 = vmatpush1.msra.mxu0 %v3519
    %3543 = vmatprep.subr.mxu0 0.0
    %3544 = vmatpush1.msra.mxu0 %v3520
    %3545 = vmatprep.subr.mxu0 0.0
    %3546 = vmatpush1.msra.mxu0 %v3521
    %3547 = vmatprep.subr.mxu0 0.0
    %3548 = vmatpush1.msra.mxu0 %v3522
    %3549 = vmatprep.subr.mxu0 0.0
    %3550 = vmatpush1.msra.mxu0 %v3523
    %3551 = vmatprep.subr.mxu0 0.0
    %3552 = vmatpush1.msra.mxu0 %v3524
    %3553 = vmatprep.subr.mxu0 0.0
    %3554 = vmatpush1.msra.mxu0 %v3525
    %3555 = vmatprep.subr.mxu0 0.0
    %3556 = vmatpush1.msra.mxu0 %v3526
    %3557 = vmatprep.subr.mxu0 0.0
    %3558 = vmatpush1.msra.mxu0 %v3527
    %3559 = vmatprep.subr.mxu0 0.0
    %3560 = vmatpush1.msra.mxu0 %v3528
    %3561 = vmatprep.subr.mxu0 0.0
    %3562 = vmatpush1.msra.mxu0 %v3529
    %3563 = vmatprep.subr.mxu0 0.0
    %3564 = vmatpush1.msra.mxu0 %v3530
    %3565 = vmatprep.subr.mxu0 0.0
    %3566 = vmatpush1.msra.mxu0 %v3531
    %3567 = vmatprep.subr.mxu0 0.0
    %3568 = vmatpush1.msra.mxu0 %v3532
    %3569 = vmatprep.subr.mxu0 0.0
    %3570 = vmatpush1.msra.mxu0 0.0
    %3571 = vmatprep.subr.mxu0 0.0
    %3572 = vmatpush1.msra.mxu0 0.0
    %3573 = vmatprep.subr.mxu0 0.0
    %3574 = vmatpush1.msra.mxu0 0.0
    %3575 = vmatprep.subr.mxu0 0.0
    %3576 = vmatpush1.msra.mxu0 0.0
    %3577 = vmatprep.subr.mxu0 0.0
    %3578 = vmatpush1.msra.mxu0 0.0
    %3579 = vmatprep.subr.mxu0 0.0
    %3580 = vmatpush1.msra.mxu0 0.0
    %3581 = vmatprep.subr.mxu0 0.0
    %3582 = vmatpush1.msra.mxu0 0.0
    %3583 = vmatprep.subr.mxu0 0.0
    %3584 = vmatpush1.msra.mxu0 0.0
    %3585 = vmatprep.subr.mxu0 0.0
    %3586 = vmatpush1.msra.mxu0 0.0
    %3587 = vmatprep.subr.mxu0 0.0
    %3588 = vmatpush1.msra.mxu0 0.0
    %3589 = vmatprep.subr.mxu0 0.0
    %3590 = vmatpush1.msra.mxu0 0.0
    %3591 = vmatprep.subr.mxu0 0.0
    %3592 = vmatpush1.msra.mxu0 0.0
    %3593 = vmatprep.subr.mxu0 0.0
    %3594 = vmatpush1.msra.mxu0 0.0
    %3595 = vmatprep.subr.mxu0 0.0
    %3596 = vmatpush1.msra.mxu0 0.0
    %3597 = vmatprep.subr.mxu0 0.0
    %3598 = vmatpush1.msra.mxu0 0.0
    %3599 = vmatprep.subr.mxu0 0.0
    %3600 = vmatpush1.msra.mxu0 0.0
    %3601 = vmatprep.mubr.f32.mxu0 0.0
    %3602 = vmatmul.mubr.f32.gmra.mrb[0].mxu0 %v3514
    %v3603 = vpop.f32.mrb[0].mxu0
    %v3604 = vadd.f32 %v3536, %v3603
    %v3605 = vpop.f32.mrb[0].mxu0
    %3606 = vmatprep.mubr.f32.mxu0 0.0
    %3607 = vmatmul.mubr.f32.gmra.mrb[0].mxu0 %v3515
    %v3608 = vpop.f32.mrb[0].mxu0
    %v3609 = vadd.f32 %v3536, %v3608
    %v3610 = vpop.f32.mrb[0].mxu0
    %3611 = vdwg.mxu0
    %v3612 = vadd.f32 %v3384, %v3604
    %v3613 = vadd.f32 %v3385, %v3609
    %s3614 = scalar_lea.vmem %s5, 16
    %v3615 = vld [vmem:[%s3614] sm:$0xff]
    %v3616 = vsel %vm49, %v3612, 0.0
    %3617 = vadd.xlane.f32.xlu0 %v3616
    %v3618 = vpop.xlane.xlu0 %3617
    %v3619 = vsel %vm49, %v3613, 0.0
    %3620 = vadd.xlane.f32.xlu0 %v3619
    %v3621 = vpop.xlane.xlu0 %3620
    %v3622 = vmul.f32 %v3618, %v56
    %v3623 = vmul.f32 %v3621, %v56
    %v3624 = vsub.f32 %v3612, %v3622
    %v3625 = vsub.f32 %v3613, %v3623
    %v3626 = vmul.f32 %v3624, %v3624
    %v3627 = vmul.f32 %v3625, %v3625
    %v3628 = vsel %vm49, %v3626, 0.0
    %3629 = vadd.xlane.f32.xlu0 %v3628
    %v3630 = vpop.xlane.xlu0 %3629
    %v3631 = vsel %vm49, %v3627, 0.0
    %3632 = vadd.xlane.f32.xlu0 %v3631
    %v3633 = vpop.xlane.xlu0 %3632
    %v3634 = vmul.f32 %v3630, %v56
    %v3635 = vmul.f32 %v3633, %v56
    %v3636 = vadd.f32 %v3634, 1e-05
    %v3637 = vadd.f32 %v3635, 1e-05
    %v3638 = vrsqrt.pop %v3636
    %v3639 = vrsqrt.pop %v3637
    %v3640 = vmul.f32 %v3624, %v3638
    %v3641 = vmul.f32 %v3625, %v3639
    %v3642 = vlaneseq
    %v3643 = vshrl.u32 %v3642, 7
    %v3644 = vsub.s32 0, %v3643
    %v3645 = vrot.slane %v3615, %v3644
    %v3646 = vmul.f32 %v3640, %v3645
    %v3647 = vmul.f32 %v3641, %v3645
    %v3648 = vlaneseq
    %v3649 = vshrl.u32 %v3648, 7
    %v3650 = vsub.s32 1, %v3649
    %v3651 = vrot.slane %v3615, %v3650
    %v3652 = vadd.f32 %v3646, %v3651
    %v3653 = vadd.f32 %v3647, %v3651
    %3654 = vst.msk [vmem:[#allocation2] sm:$0xff] %vm49, %v3652
    %3655 = vst.msk [vmem:[#allocation2 + $0x8] sm:$0xff] %vm49, %v3653
    // Predicated region
    $region26: #{tpu_custom_call.1} parent=1 // pred_check
      _
    $region27: #{tpu_custom_call.1} parent=1 // pred_check_branch
      %3657 = sbr.rel (0) target = $region29
    $region28: #{tpu_custom_call.1} parent=1 // pred_region
      %s3659 = ssub.s32 256, 256
      %3660 = vsyncadd [#allocation3], %s3659
      %s3661 = sshll.u32 [#allocation2], 4
      %s3662 = int_to_ptr.vmem [resolvable:$true] %s3661
      %3667 = dma.vmem_to_hbm [thread:$0]  %s3662, 256, %s6, [#allocation3], 128, 128, 8
    $region29: #{tpu_custom_call.1} parent=1 // pred_fallthru
      _
    // Predicated region
    $region30: #{tpu_custom_call.1} parent=1 // pred_check
      _
    $region31: #{tpu_custom_call.1} parent=1 // pred_check_branch
      %3669 = sbr.rel (0) target = $region33
    $region32: #{tpu_custom_call.1} parent=1 // pred_region
      %3670 = dma.done [#allocation3], 256
    $region33: #{tpu_custom_call.1} parent=1 // pred_fallthru
      _
    %3671 = vsyncpa [#allocation3], 1

</llo_original>
